<compile_context>
chip_gen: v5e
topology: v5e:2x2
jax: 0.10.0
libtpu: 0.0.40
codegen_flags: <defaults>
</compile_context>

<pallas_src>
import jax
import jax.numpy as jnp
import numpy as np
from jax import lax
from jax.experimental import pallas as pl
from jax.experimental.pallas import tpu as pltpu


# ----------------------------------------------------------------------------
# Pallas kernel: full GRU recurrence (all T steps, all layers) in one call.
#   gi0_ref : [T, B, 3H]  layer-0 input projection (+ folded r/z biases, + b_in)
#   h0_ref  : [L, B, H]   initial hidden state
#   w_ref   : [R, 4H]     packed weight slab (see pack_gru_weights)
#   dec_ref : [T, B, H]   top-layer hidden states (output)
# ----------------------------------------------------------------------------
def gru_kernel(gi0_ref, h0_ref, w_ref, dec_ref):
    T = gi0_ref.shape[0]
    L, B, H = h0_ref.shape
    H2, H3 = 2 * H, 3 * H
    bias_rows = ((L + 7) // 8) * 8          # 8-row aligned bias section
    f32 = jnp.float32

    # ---- hoisted loop-invariant weight loads & bias broadcasts --------------
    # (never re-emitted inside the unrolled recurrence)
    whh0 = w_ref[bias_rows:bias_rows + H, :]                 # [H, 4H], cols 3H:4H zero
    brow0 = w_ref[0:1, :]                                    # [1, 4H]
    bhn0 = jnp.broadcast_to(brow0[:, H3:], (B, H))           # layer-0 b_hn

    upper = []
    for l in range(1, L):
        browl = w_ref[l:l + 1, :]                            # [b_r, b_z, b_in, b_hn]
        b_rz = jnp.broadcast_to(browl[:, :H2], (B, H2))
        b_in = jnp.broadcast_to(browl[:, H2:H3], (B, H))
        b_hn = jnp.broadcast_to(browl[:, H3:], (B, H))
        r0 = bias_rows + H + (l - 1) * H2
        W = w_ref[r0:r0 + H2, :]                             # [2H, 4H] fused weights
        upper.append((W, b_rz, b_in, b_hn))

    def sig(x):
        # sigmoid via a single EUP tanh (avoids exp + divide on the serial path)
        return 0.5 * jnp.tanh(0.5 * x) + 0.5

    def cell0(gi, hp):
        # layer 0: input projection precomputed -> only the hidden matmul here
        g = jnp.dot(hp, whh0, preferred_element_type=f32)    # [B, 4H]
        rz = sig(gi[:, :H2] + g[:, :H2])
        r, z = rz[:, :H], rz[:, H:]
        n = jnp.tanh(gi[:, H2:] + r * (g[:, H2:H3] + bhn0))
        return (1.0 - z) * n + z * hp

    def cell_up(l, xin, hp):
        # layers >= 1: one fused [B,2H] x [2H,4H] matmul (128-lane result)
        W, b_rz, b_in, b_hn = upper[l - 1]
        xi = jnp.concatenate([xin, hp], axis=-1)             # [B, 2H]
        g = jnp.dot(xi, W, preferred_element_type=f32)       # [B, 4H]
        rz = sig(g[:, :H2] + b_rz)
        r, z = rz[:, :H], rz[:, H:]
        n = jnp.tanh(g[:, H2:H3] + b_in + r * (g[:, H3:] + b_hn))
        return (1.0 - z) * n + z * hp

    # ---- wavefront over (time, layer): layer l processes step t = v - l -----
    # Fully static unroll: all time/layer indices are Python ints, so every
    # gi0/dec access is a static slice and the two layer chains interleave.
    h = [h0_ref[l] for l in range(L)]      # current hidden per layer
    xo = [None] * L                        # latest output of each layer
    for v in range(T + L - 1):
        h_new, xo_new = list(h), list(xo)
        for l in range(L):
            t = v - l
            if 0 <= t < T:
                if l == 0:
                    hn = cell0(gi0_ref[t], h[0])
                else:
                    hn = cell_up(l, xo[l - 1], h[l])
                h_new[l] = hn
                xo_new[l] = hn
                if l == L - 1:
                    dec_ref[t] = hn
        h, xo = h_new, xo_new


def run_gru_kernel(gi0, h0, slab):
    # Single invocation, no grid: everything (< 100 KB) is VMEM-resident.
    # TODO(synk): for production batches (many turbines), add a leading batch
    # grid axis with core-parallel semantics to use v7x's second TensorCore.
    T, B, _ = gi0.shape
    L, _, H = h0.shape
    vmem = pl.BlockSpec(memory_space=pltpu.MemorySpace.VMEM)
    return pl.pallas_call(
        gru_kernel,
        out_shape=jax.ShapeDtypeStruct((T, B, H), jnp.float32),
        in_specs=[vmem, vmem, vmem],
        out_specs=vmem,
    )(gi0, h0, slab)


# ----------------------------------------------------------------------------
# Weight packing.
#   wih0 : [3, D_in, H]    layer-0 W_ih (gate order r, z, n), pre-transposed
#   wihu : [L-1, 3, H, H]  W_ih for layers 1..L-1
#   whh  : [L, 3, H, H]    W_hh
#   bih, bhh : [L, 3, 1, H]
# Returns (wih0_cat [D_in,3H], bgi0 [1,3H], slab [bias_rows + H + (L-1)*2H, 4H])
# ----------------------------------------------------------------------------
def pack_gru_weights(wih0, wihu, whh, bih, bhh):
    L, _, H, _ = whh.shape
    d_in = wih0.shape[1]
    H3, H4 = 3 * H, 4 * H
    bias_rows = ((L + 7) // 8) * 8
    zH = jnp.zeros((H, H), jnp.float32)

    # layer-0 input projection (hoisted to the wrapper)
    wih0_cat = jnp.transpose(wih0, (1, 0, 2)).reshape(d_in, H3)       # [D_in, 3H]
    bgi0 = jnp.concatenate(
        [bih[0, 0] + bhh[0, 0], bih[0, 1] + bhh[0, 1], bih[0, 2]], axis=-1)  # [1, 3H]

    rows = []
    # bias section (8-row aligned): row 0 = layer-0 (only b_hn needed),
    # rows 1..L-1 = [b_r, b_z, b_in, b_hn] per upper layer.
    rows.append(jnp.concatenate([jnp.zeros((1, H3), jnp.float32), bhh[0, 2]], axis=-1))
    for l in range(1, L):
        rows.append(jnp.concatenate(
            [bih[l, 0] + bhh[l, 0], bih[l, 1] + bhh[l, 1], bih[l, 2], bhh[l, 2]], axis=-1))
    if bias_rows > L:
        rows.append(jnp.zeros((bias_rows - L, H4), jnp.float32))

    # layer-0 hidden weights padded to 4H columns: [W_hr | W_hz | W_hn | 0]
    rows.append(jnp.concatenate([whh[0, 0], whh[0, 1], whh[0, 2], zH], axis=-1))

    # fused upper-layer weights: rows 0:H act on x_prev, rows H:2H on h_prev
    #   [W_ir | W_iz | W_in | 0 ]
    #   [W_hr | W_hz |  0   | W_hn]
    for l in range(1, L):
        top = jnp.concatenate([wihu[l - 1, 0], wihu[l - 1, 1], wihu[l - 1, 2], zH], axis=-1)
        bot = jnp.concatenate([whh[l, 0], whh[l, 1], zH, whh[l, 2]], axis=-1)
        rows.append(jnp.concatenate([top, bot], axis=0))

    slab = jnp.concatenate(rows, axis=0)                              # [R, 4H]
    return wih0_cat, bgi0, slab


# ----------------------------------------------------------------------------
# Pure-JAX reference for the recurrence (lax.scan) — used to verify.
# ----------------------------------------------------------------------------
def run_gru_reference(x_enc_tbd, h0_lbh, wih0, wihu, whh, bih, bhh):
    L = h0_lbh.shape[0]

    def step(h, x):
        inp = x
        new_h = []
        for layer in range(L):
            w_i = wih0 if layer == 0 else wihu[layer - 1]
            hp = h[layer]
            gi_r = inp @ w_i[0] + bih[layer, 0]
            gi_z = inp @ w_i[1] + bih[layer, 1]
            gi_n = inp @ w_i[2] + bih[layer, 2]
            gh_r = hp @ whh[layer, 0] + bhh[layer, 0]
            gh_z = hp @ whh[layer, 1] + bhh[layer, 1]
            gh_n = hp @ whh[layer, 2] + bhh[layer, 2]
            r = jax.nn.sigmoid(gi_r + gh_r)
            z = jax.nn.sigmoid(gi_z + gh_z)
            n = jnp.tanh(gi_n + r * gh_n)
            hn = (1.0 - z) * n + z * hp
            new_h.append(hn)
            inp = hn
        return jnp.stack(new_h), inp

    _, dec = lax.scan(step, h0_lbh, x_enc_tbd)                        # [T, B, H]
    return dec


# ----------------------------------------------------------------------------
# Parameters (deterministic synthetic init — shapes follow the nn.Module).
# ----------------------------------------------------------------------------
def init_params(key, settings, hyperparams):
    hidC = 3
    num_emb = hyperparams['num_sz']
    time_emb = hyperparams['time_sz']
    id_emb = hyperparams['id_sz']
    H = hyperparams['hl']
    L = settings['lstm_layer']
    out_dim = settings['out_var']
    d_in = num_emb + time_emb
    ks = jax.random.split(key, 12)
    s = 0.1
    p = dict(
        w_num=jax.random.normal(ks[0], (num_emb, hidC)) * s,           # Linear(hidC -> num_emb)
        b_num=jax.random.normal(ks[1], (num_emb,)) * s,
        h0_table=jax.random.normal(ks[2], (144, H * L)) * s,           # Embedding(144, H*L)
        time_table=jax.random.normal(ks[3], (144, time_emb)) * s,      # Embedding(144, time_emb)
        id_table=jax.random.normal(ks[4], (134, id_emb)) * s,          # Embedding(134, id_emb)
        wih0=jax.random.normal(ks[5], (3, d_in, H)) * s,               # GRU layer-0 W_ih (r,z,n)
        wihu=jax.random.normal(ks[6], (L - 1, 3, H, H)) * s,           # GRU W_ih layers 1..L-1
        whh=jax.random.normal(ks[7], (L, 3, H, H)) * s,                # GRU W_hh
        bih=jax.random.normal(ks[8], (L, 3, 1, H)) * s,                # GRU b_ih
        bhh=jax.random.normal(ks[9], (L, 3, 1, H)) * s,                # GRU b_hh
        w_proj=jax.random.normal(ks[10], (out_dim, H + id_emb)) * s,   # Linear(H+id_emb -> out_dim)
        b_proj=jax.random.normal(ks[11], (out_dim,)) * s,
    )
    return {k: v.astype(jnp.float32) for k, v in p.items()}


# ----------------------------------------------------------------------------
# Full forward pass (glue in plain JAX, hot path in the Pallas kernel).
# ----------------------------------------------------------------------------
def forward(params, numerical_features, categorical_features, settings,
            hyperparams, output_len, use_kernel=True):
    input_len = settings['input_len']
    L = settings['lstm_layer']
    out_dim = settings['out_var']
    H = hyperparams['hl']
    num_emb = hyperparams['num_sz']
    B = numerical_features.shape[0]
    T = input_len + output_len

    # numeric embedding (Linear over last axis)
    x_enc = jnp.einsum('bic,ec->bie', numerical_features, params['w_num']) + params['b_num']

    # initial hidden state from the first time-of-day index
    h0_time = categorical_features[:, 0, 0]
    h0_emb = jnp.take(params['h0_table'], h0_time, axis=0)             # [B, H*L]
    h0 = jnp.transpose(h0_emb.reshape(B, L, H), (1, 0, 2))             # [L, B, H]

    # roll the time index forward over the prediction horizon, mod 144
    x_time = categorical_features[:, :, 0]
    x_time_list = [x_time]
    for _ in range(output_len // input_len + 1):
        x_time_list.append(x_time_list[-1] + input_len)
    x_time = jnp.concatenate(x_time_list, axis=1)[:, :T] % 144         # [B, T]
    x_time_emb = jnp.take(params['time_table'], x_time, axis=0)        # [B, T, time_emb]

    # turbine-id embedding (constant over time)
    tid = categorical_features[:, 0, 2]
    tid_emb = jnp.take(params['id_table'], tid, axis=0)                # [B, id_emb]

    # pad numeric embedding with zeros for the decoding horizon, append time emb
    zeros = jnp.zeros((B, output_len, num_emb), jnp.float32)
    x_full = jnp.concatenate([x_enc, zeros], axis=1)                   # [B, T, num_emb]
    x_full = jnp.concatenate([x_full, x_time_emb], axis=2)             # [B, T, D_in]
    x_full = jnp.transpose(x_full, (1, 0, 2))                          # [T, B, D_in]

    # split projection: proj([h, tid]) = h @ Wp_h.T + tid @ Wp_id.T + b
    wp = params['w_proj']                                              # [out_dim, H+id_emb]
    wp_h = jnp.transpose(wp[:, :H])                                    # [H, out_dim]
    wp_id = wp[:, H:]                                                  # [out_dim, id_emb]
    tid_bias = tid_emb @ jnp.transpose(wp_id) + params['b_proj']       # [B, out_dim]

    # dropout: p = settings['dropout'] == 0.0 (identity)
    # TODO(synk): stochastic dropout (p>0) not implemented in the kernel.
    if use_kernel:
        wih0_cat, bgi0, slab = pack_gru_weights(
            params['wih0'], params['wihu'], params['whh'], params['bih'], params['bhh'])
        # layer-0 input projection hoisted out of the recurrence (one batched matmul)
        gi0 = jnp.einsum('tbd,dg->tbg', x_full, wih0_cat) + bgi0       # [T, B, 3H]
        dec = run_gru_kernel(gi0, h0, slab)                            # [T, B, H]
    else:
        dec = run_gru_reference(x_full, h0, params['wih0'], params['wihu'],
                                params['whh'], params['bih'], params['bhh'])

    out = jnp.einsum('tbh,ho->tbo', dec, wp_h) + tid_bias[None]        # [T, B, out_dim]
    sample = jnp.transpose(out, (1, 0, 2))                             # [B, T, out_dim]
    sample = sample[:, -output_len:, -out_dim:]
    return sample[..., 0] if out_dim == 1 else sample                  # squeeze(2)


if __name__ == "__main__":
    settings = dict(input_len=8, lstm_layer=2, out_var=1, dropout=0.0)
    hyperparams = dict(num_sz=16, time_sz=16, id_sz=8, hl=32)
    output_len = 16
    B = 8   # multiple of 8 sublanes (extra batch rows are essentially free)

    key = jax.random.PRNGKey(0)
    kp, kn, kt, ki = jax.random.split(key, 4)
    params = init_params(kp, settings, hyperparams)

    numerical = jax.random.normal(kn, (B, settings['input_len'], 3), jnp.float32)
    cat_time = jax.random.randint(kt, (B, settings['input_len'], 1), 0, 144)
    cat_pad = jnp.zeros((B, settings['input_len'], 1), jnp.int32)
    cat_id = jax.random.randint(ki, (B, settings['input_len'], 1), 0, 134)
    categorical = jnp.concatenate([cat_time, cat_pad, cat_id], axis=2).astype(jnp.int32)

    out = forward(params, numerical, categorical, settings, hyperparams,
                  output_len, use_kernel=True)
    out = jax.block_until_ready(out)
    assert out.shape == (B, output_len)

    ref = forward(params, numerical, categorical, settings, hyperparams,
                  output_len, use_kernel=False)
    # kernel uses tanh-based sigmoid (one EUP op); allow tiny numeric drift
    np.testing.assert_allclose(np.asarray(out), np.asarray(ref), rtol=1e-4, atol=2e-5)

    print("KERNEL_OK")
</pallas_src>

<mosaic_0001>
module attributes {stable_mosaic.version = 11 : i64} {
  func.func @gru_kernel(%arg0: memref<24x8x96xf32, #tpu.memory_space<vmem>>, %arg1: memref<2x8x32xf32, #tpu.memory_space<vmem>>, %arg2: memref<104x128xf32, #tpu.memory_space<vmem>>, %arg3: memref<24x8x32xf32, #tpu.memory_space<vmem>>) attributes {dimension_semantics = [], scalar_prefetch = 0 : i64, scratch_operands = 0 : i64, tpu.core_type = #tpu.core_type<tc>} {
    %c8 = arith.constant 8 : index
    %c0 = arith.constant 0 : index
    %0 = vector.load %arg2[%c8, %c0] : memref<104x128xf32, #tpu.memory_space<vmem>>, vector<32x128xf32>
    %c0_0 = arith.constant 0 : index
    %c0_1 = arith.constant 0 : index
    %1 = vector.load %arg2[%c0_0, %c0_1] : memref<104x128xf32, #tpu.memory_space<vmem>>, vector<1x128xf32>
    %2 = vector.extract_strided_slice %1 {offsets = [0, 96], sizes = [1, 32], strides = [1, 1]} : vector<1x128xf32> to vector<1x32xf32>
    %3 = vector.shape_cast %2 : vector<1x32xf32> to vector<1x32xf32>
    %4 = vector.broadcast %3 : vector<1x32xf32> to vector<8x32xf32>
    %c1 = arith.constant 1 : index
    %c0_2 = arith.constant 0 : index
    %5 = vector.load %arg2[%c1, %c0_2] : memref<104x128xf32, #tpu.memory_space<vmem>>, vector<1x128xf32>
    %6 = vector.extract_strided_slice %5 {offsets = [0, 0], sizes = [1, 64], strides = [1, 1]} : vector<1x128xf32> to vector<1x64xf32>
    %7 = vector.shape_cast %6 : vector<1x64xf32> to vector<1x64xf32>
    %8 = vector.broadcast %7 : vector<1x64xf32> to vector<8x64xf32>
    %9 = vector.extract_strided_slice %5 {offsets = [0, 64], sizes = [1, 32], strides = [1, 1]} : vector<1x128xf32> to vector<1x32xf32>
    %10 = vector.shape_cast %9 : vector<1x32xf32> to vector<1x32xf32>
    %11 = vector.broadcast %10 : vector<1x32xf32> to vector<8x32xf32>
    %12 = vector.extract_strided_slice %5 {offsets = [0, 96], sizes = [1, 32], strides = [1, 1]} : vector<1x128xf32> to vector<1x32xf32>
    %13 = vector.shape_cast %12 : vector<1x32xf32> to vector<1x32xf32>
    %14 = vector.broadcast %13 : vector<1x32xf32> to vector<8x32xf32>
    %c40 = arith.constant 40 : index
    %c0_3 = arith.constant 0 : index
    %15 = vector.load %arg2[%c40, %c0_3] : memref<104x128xf32, #tpu.memory_space<vmem>>, vector<64x128xf32>
    %c0_4 = arith.constant 0 : index
    %c0_5 = arith.constant 0 : index
    %c0_6 = arith.constant 0 : index
    %16 = vector.load %arg1[%c0_4, %c0_5, %c0_6] : memref<2x8x32xf32, #tpu.memory_space<vmem>>, vector<1x8x32xf32>
    %17 = vector.shape_cast %16 : vector<1x8x32xf32> to vector<8x32xf32>
    %c1_7 = arith.constant 1 : index
    %c0_8 = arith.constant 0 : index
    %c0_9 = arith.constant 0 : index
    %18 = vector.load %arg1[%c1_7, %c0_8, %c0_9] : memref<2x8x32xf32, #tpu.memory_space<vmem>>, vector<1x8x32xf32>
    %19 = vector.shape_cast %18 : vector<1x8x32xf32> to vector<8x32xf32>
    %c0_10 = arith.constant 0 : index
    %c0_11 = arith.constant 0 : index
    %c0_12 = arith.constant 0 : index
    %20 = vector.load %arg0[%c0_10, %c0_11, %c0_12] : memref<24x8x96xf32, #tpu.memory_space<vmem>>, vector<1x8x96xf32>
    %21 = vector.shape_cast %20 : vector<1x8x96xf32> to vector<8x96xf32>
    %cst = arith.constant dense<0.000000e+00> : vector<8x128xf32>
    %22 = tpu.matmul %17, %0, %cst {dimension_numbers = #tpu.dot_dimension_numbers<[1], [0], [0], [1], [0, 0, 1, 1], [], []>} : vector<8x32xf32>, vector<32x128xf32>, vector<8x128xf32> -> vector<8x128xf32>
    %23 = vector.extract_strided_slice %21 {offsets = [0, 0], sizes = [8, 64], strides = [1, 1]} : vector<8x96xf32> to vector<8x64xf32>
    %24 = vector.extract_strided_slice %22 {offsets = [0, 0], sizes = [8, 64], strides = [1, 1]} : vector<8x128xf32> to vector<8x64xf32>
    %25 = arith.addf %23, %24 : vector<8x64xf32>
    %cst_13 = arith.constant 5.000000e-01 : f32
    %26 = vector.broadcast %cst_13 : f32 to vector<8x64xf32>
    %27 = arith.mulf %26, %25 : vector<8x64xf32>
    %28 = math.tanh %27 : vector<8x64xf32>
    %cst_14 = arith.constant 5.000000e-01 : f32
    %29 = vector.broadcast %cst_14 : f32 to vector<8x64xf32>
    %30 = arith.mulf %29, %28 : vector<8x64xf32>
    %cst_15 = arith.constant 5.000000e-01 : f32
    %31 = vector.broadcast %cst_15 : f32 to vector<8x64xf32>
    %32 = arith.addf %30, %31 : vector<8x64xf32>
    %33 = vector.extract_strided_slice %32 {offsets = [0, 0], sizes = [8, 32], strides = [1, 1]} : vector<8x64xf32> to vector<8x32xf32>
    %34 = vector.extract_strided_slice %32 {offsets = [0, 32], sizes = [8, 32], strides = [1, 1]} : vector<8x64xf32> to vector<8x32xf32>
    %35 = vector.extract_strided_slice %21 {offsets = [0, 64], sizes = [8, 32], strides = [1, 1]} : vector<8x96xf32> to vector<8x32xf32>
    %36 = vector.extract_strided_slice %22 {offsets = [0, 64], sizes = [8, 32], strides = [1, 1]} : vector<8x128xf32> to vector<8x32xf32>
    %37 = arith.addf %36, %4 : vector<8x32xf32>
    %38 = arith.mulf %33, %37 : vector<8x32xf32>
    %39 = arith.addf %35, %38 : vector<8x32xf32>
    %40 = math.tanh %39 : vector<8x32xf32>
    %cst_16 = arith.constant 1.000000e+00 : f32
    %41 = vector.broadcast %cst_16 : f32 to vector<8x32xf32>
    %42 = arith.subf %41, %34 : vector<8x32xf32>
    %43 = arith.mulf %42, %40 : vector<8x32xf32>
    %44 = arith.mulf %34, %17 : vector<8x32xf32>
    %45 = arith.addf %43, %44 : vector<8x32xf32>
    %c1_17 = arith.constant 1 : index
    %c0_18 = arith.constant 0 : index
    %c0_19 = arith.constant 0 : index
    %46 = vector.load %arg0[%c1_17, %c0_18, %c0_19] : memref<24x8x96xf32, #tpu.memory_space<vmem>>, vector<1x8x96xf32>
    %47 = vector.shape_cast %46 : vector<1x8x96xf32> to vector<8x96xf32>
    %cst_20 = arith.constant dense<0.000000e+00> : vector<8x128xf32>
    %48 = tpu.matmul %45, %0, %cst_20 {dimension_numbers = #tpu.dot_dimension_numbers<[1], [0], [0], [1], [0, 0, 1, 1], [], []>} : vector<8x32xf32>, vector<32x128xf32>, vector<8x128xf32> -> vector<8x128xf32>
    %49 = vector.extract_strided_slice %47 {offsets = [0, 0], sizes = [8, 64], strides = [1, 1]} : vector<8x96xf32> to vector<8x64xf32>
    %50 = vector.extract_strided_slice %48 {offsets = [0, 0], sizes = [8, 64], strides = [1, 1]} : vector<8x128xf32> to vector<8x64xf32>
    %51 = arith.addf %49, %50 : vector<8x64xf32>
    %cst_21 = arith.constant 5.000000e-01 : f32
    %52 = vector.broadcast %cst_21 : f32 to vector<8x64xf32>
    %53 = arith.mulf %52, %51 : vector<8x64xf32>
    %54 = math.tanh %53 : vector<8x64xf32>
    %cst_22 = arith.constant 5.000000e-01 : f32
    %55 = vector.broadcast %cst_22 : f32 to vector<8x64xf32>
    %56 = arith.mulf %55, %54 : vector<8x64xf32>
    %cst_23 = arith.constant 5.000000e-01 : f32
    %57 = vector.broadcast %cst_23 : f32 to vector<8x64xf32>
    %58 = arith.addf %56, %57 : vector<8x64xf32>
    %59 = vector.extract_strided_slice %58 {offsets = [0, 0], sizes = [8, 32], strides = [1, 1]} : vector<8x64xf32> to vector<8x32xf32>
    %60 = vector.extract_strided_slice %58 {offsets = [0, 32], sizes = [8, 32], strides = [1, 1]} : vector<8x64xf32> to vector<8x32xf32>
    %61 = vector.extract_strided_slice %47 {offsets = [0, 64], sizes = [8, 32], strides = [1, 1]} : vector<8x96xf32> to vector<8x32xf32>
    %62 = vector.extract_strided_slice %48 {offsets = [0, 64], sizes = [8, 32], strides = [1, 1]} : vector<8x128xf32> to vector<8x32xf32>
    %63 = arith.addf %62, %4 : vector<8x32xf32>
    %64 = arith.mulf %59, %63 : vector<8x32xf32>
    %65 = arith.addf %61, %64 : vector<8x32xf32>
    %66 = math.tanh %65 : vector<8x32xf32>
    %cst_24 = arith.constant 1.000000e+00 : f32
    %67 = vector.broadcast %cst_24 : f32 to vector<8x32xf32>
    %68 = arith.subf %67, %60 : vector<8x32xf32>
    %69 = arith.mulf %68, %66 : vector<8x32xf32>
    %70 = arith.mulf %60, %45 : vector<8x32xf32>
    %71 = arith.addf %69, %70 : vector<8x32xf32>
    %72 = tpu.concatenate %45, %19 in 1 : vector<8x32xf32>, vector<8x32xf32> -> vector<8x64xf32>
    %cst_25 = arith.constant dense<0.000000e+00> : vector<8x128xf32>
    %73 = tpu.matmul %72, %15, %cst_25 {dimension_numbers = #tpu.dot_dimension_numbers<[1], [0], [0], [1], [0, 0, 1, 1], [], []>} : vector<8x64xf32>, vector<64x128xf32>, vector<8x128xf32> -> vector<8x128xf32>
    %74 = vector.extract_strided_slice %73 {offsets = [0, 0], sizes = [8, 64], strides = [1, 1]} : vector<8x128xf32> to vector<8x64xf32>
    %75 = arith.addf %74, %8 : vector<8x64xf32>
    %cst_26 = arith.constant 5.000000e-01 : f32
    %76 = vector.broadcast %cst_26 : f32 to vector<8x64xf32>
    %77 = arith.mulf %76, %75 : vector<8x64xf32>
    %78 = math.tanh %77 : vector<8x64xf32>
    %cst_27 = arith.constant 5.000000e-01 : f32
    %79 = vector.broadcast %cst_27 : f32 to vector<8x64xf32>
    %80 = arith.mulf %79, %78 : vector<8x64xf32>
    %cst_28 = arith.constant 5.000000e-01 : f32
    %81 = vector.broadcast %cst_28 : f32 to vector<8x64xf32>
    %82 = arith.addf %80, %81 : vector<8x64xf32>
    %83 = vector.extract_strided_slice %82 {offsets = [0, 0], sizes = [8, 32], strides = [1, 1]} : vector<8x64xf32> to vector<8x32xf32>
    %84 = vector.extract_strided_slice %82 {offsets = [0, 32], sizes = [8, 32], strides = [1, 1]} : vector<8x64xf32> to vector<8x32xf32>
    %85 = vector.extract_strided_slice %73 {offsets = [0, 64], sizes = [8, 32], strides = [1, 1]} : vector<8x128xf32> to vector<8x32xf32>
    %86 = arith.addf %85, %11 : vector<8x32xf32>
    %87 = vector.extract_strided_slice %73 {offsets = [0, 96], sizes = [8, 32], strides = [1, 1]} : vector<8x128xf32> to vector<8x32xf32>
    %88 = arith.addf %87, %14 : vector<8x32xf32>
    %89 = arith.mulf %83, %88 : vector<8x32xf32>
    %90 = arith.addf %86, %89 : vector<8x32xf32>
    %91 = math.tanh %90 : vector<8x32xf32>
    %cst_29 = arith.constant 1.000000e+00 : f32
    %92 = vector.broadcast %cst_29 : f32 to vector<8x32xf32>
    %93 = arith.subf %92, %84 : vector<8x32xf32>
    %94 = arith.mulf %93, %91 : vector<8x32xf32>
    %95 = arith.mulf %84, %19 : vector<8x32xf32>
    %96 = arith.addf %94, %95 : vector<8x32xf32>
    %c0_30 = arith.constant 0 : index
    %c0_31 = arith.constant 0 : index
    %c0_32 = arith.constant 0 : index
    %97 = vector.load %arg3[%c0_30, %c0_31, %c0_32] : memref<24x8x32xf32, #tpu.memory_space<vmem>>, vector<1x8x32xf32>
    %98 = vector.shape_cast %97 : vector<1x8x32xf32> to vector<8x32xf32>
    %99 = vector.shape_cast %96 : vector<8x32xf32> to vector<1x8x32xf32>
    tpu.vector_store %arg3[%c0_30, %c0_31, %c0_32], %99 {strides = array<i32>} : memref<24x8x32xf32, #tpu.memory_space<vmem>>, vector<1x8x32xf32>,
    %c2 = arith.constant 2 : index
    %c0_33 = arith.constant 0 : index
    %c0_34 = arith.constant 0 : index
    %100 = vector.load %arg0[%c2, %c0_33, %c0_34] : memref<24x8x96xf32, #tpu.memory_space<vmem>>, vector<1x8x96xf32>
    %101 = vector.shape_cast %100 : vector<1x8x96xf32> to vector<8x96xf32>
    %cst_35 = arith.constant dense<0.000000e+00> : vector<8x128xf32>
    %102 = tpu.matmul %71, %0, %cst_35 {dimension_numbers = #tpu.dot_dimension_numbers<[1], [0], [0], [1], [0, 0, 1, 1], [], []>} : vector<8x32xf32>, vector<32x128xf32>, vector<8x128xf32> -> vector<8x128xf32>
    %103 = vector.extract_strided_slice %101 {offsets = [0, 0], sizes = [8, 64], strides = [1, 1]} : vector<8x96xf32> to vector<8x64xf32>
    %104 = vector.extract_strided_slice %102 {offsets = [0, 0], sizes = [8, 64], strides = [1, 1]} : vector<8x128xf32> to vector<8x64xf32>
    %105 = arith.addf %103, %104 : vector<8x64xf32>
    %cst_36 = arith.constant 5.000000e-01 : f32
    %106 = vector.broadcast %cst_36 : f32 to vector<8x64xf32>
    %107 = arith.mulf %106, %105 : vector<8x64xf32>
    %108 = math.tanh %107 : vector<8x64xf32>
    %cst_37 = arith.constant 5.000000e-01 : f32
    %109 = vector.broadcast %cst_37 : f32 to vector<8x64xf32>
    %110 = arith.mulf %109, %108 : vector<8x64xf32>
    %cst_38 = arith.constant 5.000000e-01 : f32
    %111 = vector.broadcast %cst_38 : f32 to vector<8x64xf32>
    %112 = arith.addf %110, %111 : vector<8x64xf32>
    %113 = vector.extract_strided_slice %112 {offsets = [0, 0], sizes = [8, 32], strides = [1, 1]} : vector<8x64xf32> to vector<8x32xf32>
    %114 = vector.extract_strided_slice %112 {offsets = [0, 32], sizes = [8, 32], strides = [1, 1]} : vector<8x64xf32> to vector<8x32xf32>
    %115 = vector.extract_strided_slice %101 {offsets = [0, 64], sizes = [8, 32], strides = [1, 1]} : vector<8x96xf32> to vector<8x32xf32>
    %116 = vector.extract_strided_slice %102 {offsets = [0, 64], sizes = [8, 32], strides = [1, 1]} : vector<8x128xf32> to vector<8x32xf32>
    %117 = arith.addf %116, %4 : vector<8x32xf32>
    %118 = arith.mulf %113, %117 : vector<8x32xf32>
    %119 = arith.addf %115, %118 : vector<8x32xf32>
    %120 = math.tanh %119 : vector<8x32xf32>
    %cst_39 = arith.constant 1.000000e+00 : f32
    %121 = vector.broadcast %cst_39 : f32 to vector<8x32xf32>
    %122 = arith.subf %121, %114 : vector<8x32xf32>
    %123 = arith.mulf %122, %120 : vector<8x32xf32>
    %124 = arith.mulf %114, %71 : vector<8x32xf32>
    %125 = arith.addf %123, %124 : vector<8x32xf32>
    %126 = tpu.concatenate %71, %96 in 1 : vector<8x32xf32>, vector<8x32xf32> -> vector<8x64xf32>
    %cst_40 = arith.constant dense<0.000000e+00> : vector<8x128xf32>
    %127 = tpu.matmul %126, %15, %cst_40 {dimension_numbers = #tpu.dot_dimension_numbers<[1], [0], [0], [1], [0, 0, 1, 1], [], []>} : vector<8x64xf32>, vector<64x128xf32>, vector<8x128xf32> -> vector<8x128xf32>
    %128 = vector.extract_strided_slice %127 {offsets = [0, 0], sizes = [8, 64], strides = [1, 1]} : vector<8x128xf32> to vector<8x64xf32>
    %129 = arith.addf %128, %8 : vector<8x64xf32>
    %cst_41 = arith.constant 5.000000e-01 : f32
    %130 = vector.broadcast %cst_41 : f32 to vector<8x64xf32>
    %131 = arith.mulf %130, %129 : vector<8x64xf32>
    %132 = math.tanh %131 : vector<8x64xf32>
    %cst_42 = arith.constant 5.000000e-01 : f32
    %133 = vector.broadcast %cst_42 : f32 to vector<8x64xf32>
    %134 = arith.mulf %133, %132 : vector<8x64xf32>
    %cst_43 = arith.constant 5.000000e-01 : f32
    %135 = vector.broadcast %cst_43 : f32 to vector<8x64xf32>
    %136 = arith.addf %134, %135 : vector<8x64xf32>
    %137 = vector.extract_strided_slice %136 {offsets = [0, 0], sizes = [8, 32], strides = [1, 1]} : vector<8x64xf32> to vector<8x32xf32>
    %138 = vector.extract_strided_slice %136 {offsets = [0, 32], sizes = [8, 32], strides = [1, 1]} : vector<8x64xf32> to vector<8x32xf32>
    %139 = vector.extract_strided_slice %127 {offsets = [0, 64], sizes = [8, 32], strides = [1, 1]} : vector<8x128xf32> to vector<8x32xf32>
    %140 = arith.addf %139, %11 : vector<8x32xf32>
    %141 = vector.extract_strided_slice %127 {offsets = [0, 96], sizes = [8, 32], strides = [1, 1]} : vector<8x128xf32> to vector<8x32xf32>
    %142 = arith.addf %141, %14 : vector<8x32xf32>
    %143 = arith.mulf %137, %142 : vector<8x32xf32>
    %144 = arith.addf %140, %143 : vector<8x32xf32>
    %145 = math.tanh %144 : vector<8x32xf32>
    %cst_44 = arith.constant 1.000000e+00 : f32
    %146 = vector.broadcast %cst_44 : f32 to vector<8x32xf32>
    %147 = arith.subf %146, %138 : vector<8x32xf32>
    %148 = arith.mulf %147, %145 : vector<8x32xf32>
    %149 = arith.mulf %138, %96 : vector<8x32xf32>
    %150 = arith.addf %148, %149 : vector<8x32xf32>
    %c1_45 = arith.constant 1 : index
    %c0_46 = arith.constant 0 : index
    %c0_47 = arith.constant 0 : index
    %151 = vector.load %arg3[%c1_45, %c0_46, %c0_47] : memref<24x8x32xf32, #tpu.memory_space<vmem>>, vector<1x8x32xf32>
    %152 = vector.shape_cast %151 : vector<1x8x32xf32> to vector<8x32xf32>
    %153 = vector.shape_cast %150 : vector<8x32xf32> to vector<1x8x32xf32>
    tpu.vector_store %arg3[%c1_45, %c0_46, %c0_47], %153 {strides = array<i32>} : memref<24x8x32xf32, #tpu.memory_space<vmem>>, vector<1x8x32xf32>,
    %c3 = arith.constant 3 : index
    %c0_48 = arith.constant 0 : index
    %c0_49 = arith.constant 0 : index
    %154 = vector.load %arg0[%c3, %c0_48, %c0_49] : memref<24x8x96xf32, #tpu.memory_space<vmem>>, vector<1x8x96xf32>
    %155 = vector.shape_cast %154 : vector<1x8x96xf32> to vector<8x96xf32>
    %cst_50 = arith.constant dense<0.000000e+00> : vector<8x128xf32>
    %156 = tpu.matmul %125, %0, %cst_50 {dimension_numbers = #tpu.dot_dimension_numbers<[1], [0], [0], [1], [0, 0, 1, 1], [], []>} : vector<8x32xf32>, vector<32x128xf32>, vector<8x128xf32> -> vector<8x128xf32>
    %157 = vector.extract_strided_slice %155 {offsets = [0, 0], sizes = [8, 64], strides = [1, 1]} : vector<8x96xf32> to vector<8x64xf32>
    %158 = vector.extract_strided_slice %156 {offsets = [0, 0], sizes = [8, 64], strides = [1, 1]} : vector<8x128xf32> to vector<8x64xf32>
    %159 = arith.addf %157, %158 : vector<8x64xf32>
    %cst_51 = arith.constant 5.000000e-01 : f32
    %160 = vector.broadcast %cst_51 : f32 to vector<8x64xf32>
    %161 = arith.mulf %160, %159 : vector<8x64xf32>
    %162 = math.tanh %161 : vector<8x64xf32>
    %cst_52 = arith.constant 5.000000e-01 : f32
    %163 = vector.broadcast %cst_52 : f32 to vector<8x64xf32>
    %164 = arith.mulf %163, %162 : vector<8x64xf32>
    %cst_53 = arith.constant 5.000000e-01 : f32
    %165 = vector.broadcast %cst_53 : f32 to vector<8x64xf32>
    %166 = arith.addf %164, %165 : vector<8x64xf32>
    %167 = vector.extract_strided_slice %166 {offsets = [0, 0], sizes = [8, 32], strides = [1, 1]} : vector<8x64xf32> to vector<8x32xf32>
    %168 = vector.extract_strided_slice %166 {offsets = [0, 32], sizes = [8, 32], strides = [1, 1]} : vector<8x64xf32> to vector<8x32xf32>
    %169 = vector.extract_strided_slice %155 {offsets = [0, 64], sizes = [8, 32], strides = [1, 1]} : vector<8x96xf32> to vector<8x32xf32>
    %170 = vector.extract_strided_slice %156 {offsets = [0, 64], sizes = [8, 32], strides = [1, 1]} : vector<8x128xf32> to vector<8x32xf32>
    %171 = arith.addf %170, %4 : vector<8x32xf32>
    %172 = arith.mulf %167, %171 : vector<8x32xf32>
    %173 = arith.addf %169, %172 : vector<8x32xf32>
    %174 = math.tanh %173 : vector<8x32xf32>
    %cst_54 = arith.constant 1.000000e+00 : f32
    %175 = vector.broadcast %cst_54 : f32 to vector<8x32xf32>
    %176 = arith.subf %175, %168 : vector<8x32xf32>
    %177 = arith.mulf %176, %174 : vector<8x32xf32>
    %178 = arith.mulf %168, %125 : vector<8x32xf32>
    %179 = arith.addf %177, %178 : vector<8x32xf32>
    %180 = tpu.concatenate %125, %150 in 1 : vector<8x32xf32>, vector<8x32xf32> -> vector<8x64xf32>
    %cst_55 = arith.constant dense<0.000000e+00> : vector<8x128xf32>
    %181 = tpu.matmul %180, %15, %cst_55 {dimension_numbers = #tpu.dot_dimension_numbers<[1], [0], [0], [1], [0, 0, 1, 1], [], []>} : vector<8x64xf32>, vector<64x128xf32>, vector<8x128xf32> -> vector<8x128xf32>
    %182 = vector.extract_strided_slice %181 {offsets = [0, 0], sizes = [8, 64], strides = [1, 1]} : vector<8x128xf32> to vector<8x64xf32>
    %183 = arith.addf %182, %8 : vector<8x64xf32>
    %cst_56 = arith.constant 5.000000e-01 : f32
    %184 = vector.broadcast %cst_56 : f32 to vector<8x64xf32>
    %185 = arith.mulf %184, %183 : vector<8x64xf32>
    %186 = math.tanh %185 : vector<8x64xf32>
    %cst_57 = arith.constant 5.000000e-01 : f32
    %187 = vector.broadcast %cst_57 : f32 to vector<8x64xf32>
    %188 = arith.mulf %187, %186 : vector<8x64xf32>
    %cst_58 = arith.constant 5.000000e-01 : f32
    %189 = vector.broadcast %cst_58 : f32 to vector<8x64xf32>
    %190 = arith.addf %188, %189 : vector<8x64xf32>
    %191 = vector.extract_strided_slice %190 {offsets = [0, 0], sizes = [8, 32], strides = [1, 1]} : vector<8x64xf32> to vector<8x32xf32>
    %192 = vector.extract_strided_slice %190 {offsets = [0, 32], sizes = [8, 32], strides = [1, 1]} : vector<8x64xf32> to vector<8x32xf32>
    %193 = vector.extract_strided_slice %181 {offsets = [0, 64], sizes = [8, 32], strides = [1, 1]} : vector<8x128xf32> to vector<8x32xf32>
    %194 = arith.addf %193, %11 : vector<8x32xf32>
    %195 = vector.extract_strided_slice %181 {offsets = [0, 96], sizes = [8, 32], strides = [1, 1]} : vector<8x128xf32> to vector<8x32xf32>
    %196 = arith.addf %195, %14 : vector<8x32xf32>
    %197 = arith.mulf %191, %196 : vector<8x32xf32>
    %198 = arith.addf %194, %197 : vector<8x32xf32>
    %199 = math.tanh %198 : vector<8x32xf32>
    %cst_59 = arith.constant 1.000000e+00 : f32
    %200 = vector.broadcast %cst_59 : f32 to vector<8x32xf32>
    %201 = arith.subf %200, %192 : vector<8x32xf32>
    %202 = arith.mulf %201, %199 : vector<8x32xf32>
    %203 = arith.mulf %192, %150 : vector<8x32xf32>
    %204 = arith.addf %202, %203 : vector<8x32xf32>
    %c2_60 = arith.constant 2 : index
    %c0_61 = arith.constant 0 : index
    %c0_62 = arith.constant 0 : index
    %205 = vector.load %arg3[%c2_60, %c0_61, %c0_62] : memref<24x8x32xf32, #tpu.memory_space<vmem>>, vector<1x8x32xf32>
    %206 = vector.shape_cast %205 : vector<1x8x32xf32> to vector<8x32xf32>
    %207 = vector.shape_cast %204 : vector<8x32xf32> to vector<1x8x32xf32>
    tpu.vector_store %arg3[%c2_60, %c0_61, %c0_62], %207 {strides = array<i32>} : memref<24x8x32xf32, #tpu.memory_space<vmem>>, vector<1x8x32xf32>,
    %c4 = arith.constant 4 : index
    %c0_63 = arith.constant 0 : index
    %c0_64 = arith.constant 0 : index
    %208 = vector.load %arg0[%c4, %c0_63, %c0_64] : memref<24x8x96xf32, #tpu.memory_space<vmem>>, vector<1x8x96xf32>
    %209 = vector.shape_cast %208 : vector<1x8x96xf32> to vector<8x96xf32>
    %cst_65 = arith.constant dense<0.000000e+00> : vector<8x128xf32>
    %210 = tpu.matmul %179, %0, %cst_65 {dimension_numbers = #tpu.dot_dimension_numbers<[1], [0], [0], [1], [0, 0, 1, 1], [], []>} : vector<8x32xf32>, vector<32x128xf32>, vector<8x128xf32> -> vector<8x128xf32>
    %211 = vector.extract_strided_slice %209 {offsets = [0, 0], sizes = [8, 64], strides = [1, 1]} : vector<8x96xf32> to vector<8x64xf32>
    %212 = vector.extract_strided_slice %210 {offsets = [0, 0], sizes = [8, 64], strides = [1, 1]} : vector<8x128xf32> to vector<8x64xf32>
    %213 = arith.addf %211, %212 : vector<8x64xf32>
    %cst_66 = arith.constant 5.000000e-01 : f32
    %214 = vector.broadcast %cst_66 : f32 to vector<8x64xf32>
    %215 = arith.mulf %214, %213 : vector<8x64xf32>
    %216 = math.tanh %215 : vector<8x64xf32>
    %cst_67 = arith.constant 5.000000e-01 : f32
    %217 = vector.broadcast %cst_67 : f32 to vector<8x64xf32>
    %218 = arith.mulf %217, %216 : vector<8x64xf32>
    %cst_68 = arith.constant 5.000000e-01 : f32
    %219 = vector.broadcast %cst_68 : f32 to vector<8x64xf32>
    %220 = arith.addf %218, %219 : vector<8x64xf32>
    %221 = vector.extract_strided_slice %220 {offsets = [0, 0], sizes = [8, 32], strides = [1, 1]} : vector<8x64xf32> to vector<8x32xf32>
    %222 = vector.extract_strided_slice %220 {offsets = [0, 32], sizes = [8, 32], strides = [1, 1]} : vector<8x64xf32> to vector<8x32xf32>
    %223 = vector.extract_strided_slice %209 {offsets = [0, 64], sizes = [8, 32], strides = [1, 1]} : vector<8x96xf32> to vector<8x32xf32>
    %224 = vector.extract_strided_slice %210 {offsets = [0, 64], sizes = [8, 32], strides = [1, 1]} : vector<8x128xf32> to vector<8x32xf32>
    %225 = arith.addf %224, %4 : vector<8x32xf32>
    %226 = arith.mulf %221, %225 : vector<8x32xf32>
    %227 = arith.addf %223, %226 : vector<8x32xf32>
    %228 = math.tanh %227 : vector<8x32xf32>
    %cst_69 = arith.constant 1.000000e+00 : f32
    %229 = vector.broadcast %cst_69 : f32 to vector<8x32xf32>
    %230 = arith.subf %229, %222 : vector<8x32xf32>
    %231 = arith.mulf %230, %228 : vector<8x32xf32>
    %232 = arith.mulf %222, %179 : vector<8x32xf32>
    %233 = arith.addf %231, %232 : vector<8x32xf32>
    %234 = tpu.concatenate %179, %204 in 1 : vector<8x32xf32>, vector<8x32xf32> -> vector<8x64xf32>
    %cst_70 = arith.constant dense<0.000000e+00> : vector<8x128xf32>
    %235 = tpu.matmul %234, %15, %cst_70 {dimension_numbers = #tpu.dot_dimension_numbers<[1], [0], [0], [1], [0, 0, 1, 1], [], []>} : vector<8x64xf32>, vector<64x128xf32>, vector<8x128xf32> -> vector<8x128xf32>
    %236 = vector.extract_strided_slice %235 {offsets = [0, 0], sizes = [8, 64], strides = [1, 1]} : vector<8x128xf32> to vector<8x64xf32>
    %237 = arith.addf %236, %8 : vector<8x64xf32>
    %cst_71 = arith.constant 5.000000e-01 : f32
    %238 = vector.broadcast %cst_71 : f32 to vector<8x64xf32>
    %239 = arith.mulf %238, %237 : vector<8x64xf32>
    %240 = math.tanh %239 : vector<8x64xf32>
    %cst_72 = arith.constant 5.000000e-01 : f32
    %241 = vector.broadcast %cst_72 : f32 to vector<8x64xf32>
    %242 = arith.mulf %241, %240 : vector<8x64xf32>
    %cst_73 = arith.constant 5.000000e-01 : f32
    %243 = vector.broadcast %cst_73 : f32 to vector<8x64xf32>
    %244 = arith.addf %242, %243 : vector<8x64xf32>
    %245 = vector.extract_strided_slice %244 {offsets = [0, 0], sizes = [8, 32], strides = [1, 1]} : vector<8x64xf32> to vector<8x32xf32>
    %246 = vector.extract_strided_slice %244 {offsets = [0, 32], sizes = [8, 32], strides = [1, 1]} : vector<8x64xf32> to vector<8x32xf32>
    %247 = vector.extract_strided_slice %235 {offsets = [0, 64], sizes = [8, 32], strides = [1, 1]} : vector<8x128xf32> to vector<8x32xf32>
    %248 = arith.addf %247, %11 : vector<8x32xf32>
    %249 = vector.extract_strided_slice %235 {offsets = [0, 96], sizes = [8, 32], strides = [1, 1]} : vector<8x128xf32> to vector<8x32xf32>
    %250 = arith.addf %249, %14 : vector<8x32xf32>
    %251 = arith.mulf %245, %250 : vector<8x32xf32>
    %252 = arith.addf %248, %251 : vector<8x32xf32>
    %253 = math.tanh %252 : vector<8x32xf32>
    %cst_74 = arith.constant 1.000000e+00 : f32
    %254 = vector.broadcast %cst_74 : f32 to vector<8x32xf32>
    %255 = arith.subf %254, %246 : vector<8x32xf32>
    %256 = arith.mulf %255, %253 : vector<8x32xf32>
    %257 = arith.mulf %246, %204 : vector<8x32xf32>
    %258 = arith.addf %256, %257 : vector<8x32xf32>
    %c3_75 = arith.constant 3 : index
    %c0_76 = arith.constant 0 : index
    %c0_77 = arith.constant 0 : index
    %259 = vector.load %arg3[%c3_75, %c0_76, %c0_77] : memref<24x8x32xf32, #tpu.memory_space<vmem>>, vector<1x8x32xf32>
    %260 = vector.shape_cast %259 : vector<1x8x32xf32> to vector<8x32xf32>
    %261 = vector.shape_cast %258 : vector<8x32xf32> to vector<1x8x32xf32>
    tpu.vector_store %arg3[%c3_75, %c0_76, %c0_77], %261 {strides = array<i32>} : memref<24x8x32xf32, #tpu.memory_space<vmem>>, vector<1x8x32xf32>,
    %c5 = arith.constant 5 : index
    %c0_78 = arith.constant 0 : index
    %c0_79 = arith.constant 0 : index
    %262 = vector.load %arg0[%c5, %c0_78, %c0_79] : memref<24x8x96xf32, #tpu.memory_space<vmem>>, vector<1x8x96xf32>
    %263 = vector.shape_cast %262 : vector<1x8x96xf32> to vector<8x96xf32>
    %cst_80 = arith.constant dense<0.000000e+00> : vector<8x128xf32>
    %264 = tpu.matmul %233, %0, %cst_80 {dimension_numbers = #tpu.dot_dimension_numbers<[1], [0], [0], [1], [0, 0, 1, 1], [], []>} : vector<8x32xf32>, vector<32x128xf32>, vector<8x128xf32> -> vector<8x128xf32>
    %265 = vector.extract_strided_slice %263 {offsets = [0, 0], sizes = [8, 64], strides = [1, 1]} : vector<8x96xf32> to vector<8x64xf32>
    %266 = vector.extract_strided_slice %264 {offsets = [0, 0], sizes = [8, 64], strides = [1, 1]} : vector<8x128xf32> to vector<8x64xf32>
    %267 = arith.addf %265, %266 : vector<8x64xf32>
    %cst_81 = arith.constant 5.000000e-01 : f32
    %268 = vector.broadcast %cst_81 : f32 to vector<8x64xf32>
    %269 = arith.mulf %268, %267 : vector<8x64xf32>
    %270 = math.tanh %269 : vector<8x64xf32>
    %cst_82 = arith.constant 5.000000e-01 : f32
    %271 = vector.broadcast %cst_82 : f32 to vector<8x64xf32>
    %272 = arith.mulf %271, %270 : vector<8x64xf32>
    %cst_83 = arith.constant 5.000000e-01 : f32
    %273 = vector.broadcast %cst_83 : f32 to vector<8x64xf32>
    %274 = arith.addf %272, %273 : vector<8x64xf32>
    %275 = vector.extract_strided_slice %274 {offsets = [0, 0], sizes = [8, 32], strides = [1, 1]} : vector<8x64xf32> to vector<8x32xf32>
    %276 = vector.extract_strided_slice %274 {offsets = [0, 32], sizes = [8, 32], strides = [1, 1]} : vector<8x64xf32> to vector<8x32xf32>
    %277 = vector.extract_strided_slice %263 {offsets = [0, 64], sizes = [8, 32], strides = [1, 1]} : vector<8x96xf32> to vector<8x32xf32>
    %278 = vector.extract_strided_slice %264 {offsets = [0, 64], sizes = [8, 32], strides = [1, 1]} : vector<8x128xf32> to vector<8x32xf32>
    %279 = arith.addf %278, %4 : vector<8x32xf32>
    %280 = arith.mulf %275, %279 : vector<8x32xf32>
    %281 = arith.addf %277, %280 : vector<8x32xf32>
    %282 = math.tanh %281 : vector<8x32xf32>
    %cst_84 = arith.constant 1.000000e+00 : f32
    %283 = vector.broadcast %cst_84 : f32 to vector<8x32xf32>
    %284 = arith.subf %283, %276 : vector<8x32xf32>
    %285 = arith.mulf %284, %282 : vector<8x32xf32>
    %286 = arith.mulf %276, %233 : vector<8x32xf32>
    %287 = arith.addf %285, %286 : vector<8x32xf32>
    %288 = tpu.concatenate %233, %258 in 1 : vector<8x32xf32>, vector<8x32xf32> -> vector<8x64xf32>
    %cst_85 = arith.constant dense<0.000000e+00> : vector<8x128xf32>
    %289 = tpu.matmul %288, %15, %cst_85 {dimension_numbers = #tpu.dot_dimension_numbers<[1], [0], [0], [1], [0, 0, 1, 1], [], []>} : vector<8x64xf32>, vector<64x128xf32>, vector<8x128xf32> -> vector<8x128xf32>
    %290 = vector.extract_strided_slice %289 {offsets = [0, 0], sizes = [8, 64], strides = [1, 1]} : vector<8x128xf32> to vector<8x64xf32>
    %291 = arith.addf %290, %8 : vector<8x64xf32>
    %cst_86 = arith.constant 5.000000e-01 : f32
    %292 = vector.broadcast %cst_86 : f32 to vector<8x64xf32>
    %293 = arith.mulf %292, %291 : vector<8x64xf32>
    %294 = math.tanh %293 : vector<8x64xf32>
    %cst_87 = arith.constant 5.000000e-01 : f32
    %295 = vector.broadcast %cst_87 : f32 to vector<8x64xf32>
    %296 = arith.mulf %295, %294 : vector<8x64xf32>
    %cst_88 = arith.constant 5.000000e-01 : f32
    %297 = vector.broadcast %cst_88 : f32 to vector<8x64xf32>
    %298 = arith.addf %296, %297 : vector<8x64xf32>
    %299 = vector.extract_strided_slice %298 {offsets = [0, 0], sizes = [8, 32], strides = [1, 1]} : vector<8x64xf32> to vector<8x32xf32>
    %300 = vector.extract_strided_slice %298 {offsets = [0, 32], sizes = [8, 32], strides = [1, 1]} : vector<8x64xf32> to vector<8x32xf32>
    %301 = vector.extract_strided_slice %289 {offsets = [0, 64], sizes = [8, 32], strides = [1, 1]} : vector<8x128xf32> to vector<8x32xf32>
    %302 = arith.addf %301, %11 : vector<8x32xf32>
    %303 = vector.extract_strided_slice %289 {offsets = [0, 96], sizes = [8, 32], strides = [1, 1]} : vector<8x128xf32> to vector<8x32xf32>
    %304 = arith.addf %303, %14 : vector<8x32xf32>
    %305 = arith.mulf %299, %304 : vector<8x32xf32>
    %306 = arith.addf %302, %305 : vector<8x32xf32>
    %307 = math.tanh %306 : vector<8x32xf32>
    %cst_89 = arith.constant 1.000000e+00 : f32
    %308 = vector.broadcast %cst_89 : f32 to vector<8x32xf32>
    %309 = arith.subf %308, %300 : vector<8x32xf32>
    %310 = arith.mulf %309, %307 : vector<8x32xf32>
    %311 = arith.mulf %300, %258 : vector<8x32xf32>
    %312 = arith.addf %310, %311 : vector<8x32xf32>
    %c4_90 = arith.constant 4 : index
    %c0_91 = arith.constant 0 : index
    %c0_92 = arith.constant 0 : index
    %313 = vector.load %arg3[%c4_90, %c0_91, %c0_92] : memref<24x8x32xf32, #tpu.memory_space<vmem>>, vector<1x8x32xf32>
    %314 = vector.shape_cast %313 : vector<1x8x32xf32> to vector<8x32xf32>
    %315 = vector.shape_cast %312 : vector<8x32xf32> to vector<1x8x32xf32>
    tpu.vector_store %arg3[%c4_90, %c0_91, %c0_92], %315 {strides = array<i32>} : memref<24x8x32xf32, #tpu.memory_space<vmem>>, vector<1x8x32xf32>,
    %c6 = arith.constant 6 : index
    %c0_93 = arith.constant 0 : index
    %c0_94 = arith.constant 0 : index
    %316 = vector.load %arg0[%c6, %c0_93, %c0_94] : memref<24x8x96xf32, #tpu.memory_space<vmem>>, vector<1x8x96xf32>
    %317 = vector.shape_cast %316 : vector<1x8x96xf32> to vector<8x96xf32>
    %cst_95 = arith.constant dense<0.000000e+00> : vector<8x128xf32>
    %318 = tpu.matmul %287, %0, %cst_95 {dimension_numbers = #tpu.dot_dimension_numbers<[1], [0], [0], [1], [0, 0, 1, 1], [], []>} : vector<8x32xf32>, vector<32x128xf32>, vector<8x128xf32> -> vector<8x128xf32>
    %319 = vector.extract_strided_slice %317 {offsets = [0, 0], sizes = [8, 64], strides = [1, 1]} : vector<8x96xf32> to vector<8x64xf32>
    %320 = vector.extract_strided_slice %318 {offsets = [0, 0], sizes = [8, 64], strides = [1, 1]} : vector<8x128xf32> to vector<8x64xf32>
    %321 = arith.addf %319, %320 : vector<8x64xf32>
    %cst_96 = arith.constant 5.000000e-01 : f32
    %322 = vector.broadcast %cst_96 : f32 to vector<8x64xf32>
    %323 = arith.mulf %322, %321 : vector<8x64xf32>
    %324 = math.tanh %323 : vector<8x64xf32>
    %cst_97 = arith.constant 5.000000e-01 : f32
    %325 = vector.broadcast %cst_97 : f32 to vector<8x64xf32>
    %326 = arith.mulf %325, %324 : vector<8x64xf32>
    %cst_98 = arith.constant 5.000000e-01 : f32
    %327 = vector.broadcast %cst_98 : f32 to vector<8x64xf32>
    %328 = arith.addf %326, %327 : vector<8x64xf32>
    %329 = vector.extract_strided_slice %328 {offsets = [0, 0], sizes = [8, 32], strides = [1, 1]} : vector<8x64xf32> to vector<8x32xf32>
    %330 = vector.extract_strided_slice %328 {offsets = [0, 32], sizes = [8, 32], strides = [1, 1]} : vector<8x64xf32> to vector<8x32xf32>
    %331 = vector.extract_strided_slice %317 {offsets = [0, 64], sizes = [8, 32], strides = [1, 1]} : vector<8x96xf32> to vector<8x32xf32>
    %332 = vector.extract_strided_slice %318 {offsets = [0, 64], sizes = [8, 32], strides = [1, 1]} : vector<8x128xf32> to vector<8x32xf32>
    %333 = arith.addf %332, %4 : vector<8x32xf32>
    %334 = arith.mulf %329, %333 : vector<8x32xf32>
    %335 = arith.addf %331, %334 : vector<8x32xf32>
    %336 = math.tanh %335 : vector<8x32xf32>
    %cst_99 = arith.constant 1.000000e+00 : f32
    %337 = vector.broadcast %cst_99 : f32 to vector<8x32xf32>
    %338 = arith.subf %337, %330 : vector<8x32xf32>
    %339 = arith.mulf %338, %336 : vector<8x32xf32>
    %340 = arith.mulf %330, %287 : vector<8x32xf32>
    %341 = arith.addf %339, %340 : vector<8x32xf32>
    %342 = tpu.concatenate %287, %312 in 1 : vector<8x32xf32>, vector<8x32xf32> -> vector<8x64xf32>
    %cst_100 = arith.constant dense<0.000000e+00> : vector<8x128xf32>
    %343 = tpu.matmul %342, %15, %cst_100 {dimension_numbers = #tpu.dot_dimension_numbers<[1], [0], [0], [1], [0, 0, 1, 1], [], []>} : vector<8x64xf32>, vector<64x128xf32>, vector<8x128xf32> -> vector<8x128xf32>
    %344 = vector.extract_strided_slice %343 {offsets = [0, 0], sizes = [8, 64], strides = [1, 1]} : vector<8x128xf32> to vector<8x64xf32>
    %345 = arith.addf %344, %8 : vector<8x64xf32>
    %cst_101 = arith.constant 5.000000e-01 : f32
    %346 = vector.broadcast %cst_101 : f32 to vector<8x64xf32>
    %347 = arith.mulf %346, %345 : vector<8x64xf32>
    %348 = math.tanh %347 : vector<8x64xf32>
    %cst_102 = arith.constant 5.000000e-01 : f32
    %349 = vector.broadcast %cst_102 : f32 to vector<8x64xf32>
    %350 = arith.mulf %349, %348 : vector<8x64xf32>
    %cst_103 = arith.constant 5.000000e-01 : f32
    %351 = vector.broadcast %cst_103 : f32 to vector<8x64xf32>
    %352 = arith.addf %350, %351 : vector<8x64xf32>
    %353 = vector.extract_strided_slice %352 {offsets = [0, 0], sizes = [8, 32], strides = [1, 1]} : vector<8x64xf32> to vector<8x32xf32>
    %354 = vector.extract_strided_slice %352 {offsets = [0, 32], sizes = [8, 32], strides = [1, 1]} : vector<8x64xf32> to vector<8x32xf32>
    %355 = vector.extract_strided_slice %343 {offsets = [0, 64], sizes = [8, 32], strides = [1, 1]} : vector<8x128xf32> to vector<8x32xf32>
    %356 = arith.addf %355, %11 : vector<8x32xf32>
    %357 = vector.extract_strided_slice %343 {offsets = [0, 96], sizes = [8, 32], strides = [1, 1]} : vector<8x128xf32> to vector<8x32xf32>
    %358 = arith.addf %357, %14 : vector<8x32xf32>
    %359 = arith.mulf %353, %358 : vector<8x32xf32>
    %360 = arith.addf %356, %359 : vector<8x32xf32>
    %361 = math.tanh %360 : vector<8x32xf32>
    %cst_104 = arith.constant 1.000000e+00 : f32
    %362 = vector.broadcast %cst_104 : f32 to vector<8x32xf32>
    %363 = arith.subf %362, %354 : vector<8x32xf32>
    %364 = arith.mulf %363, %361 : vector<8x32xf32>
    %365 = arith.mulf %354, %312 : vector<8x32xf32>
    %366 = arith.addf %364, %365 : vector<8x32xf32>
    %c5_105 = arith.constant 5 : index
    %c0_106 = arith.constant 0 : index
    %c0_107 = arith.constant 0 : index
    %367 = vector.load %arg3[%c5_105, %c0_106, %c0_107] : memref<24x8x32xf32, #tpu.memory_space<vmem>>, vector<1x8x32xf32>
    %368 = vector.shape_cast %367 : vector<1x8x32xf32> to vector<8x32xf32>
    %369 = vector.shape_cast %366 : vector<8x32xf32> to vector<1x8x32xf32>
    tpu.vector_store %arg3[%c5_105, %c0_106, %c0_107], %369 {strides = array<i32>} : memref<24x8x32xf32, #tpu.memory_space<vmem>>, vector<1x8x32xf32>,
    %c7 = arith.constant 7 : index
    %c0_108 = arith.constant 0 : index
    %c0_109 = arith.constant 0 : index
    %370 = vector.load %arg0[%c7, %c0_108, %c0_109] : memref<24x8x96xf32, #tpu.memory_space<vmem>>, vector<1x8x96xf32>
    %371 = vector.shape_cast %370 : vector<1x8x96xf32> to vector<8x96xf32>
    %cst_110 = arith.constant dense<0.000000e+00> : vector<8x128xf32>
    %372 = tpu.matmul %341, %0, %cst_110 {dimension_numbers = #tpu.dot_dimension_numbers<[1], [0], [0], [1], [0, 0, 1, 1], [], []>} : vector<8x32xf32>, vector<32x128xf32>, vector<8x128xf32> -> vector<8x128xf32>
    %373 = vector.extract_strided_slice %371 {offsets = [0, 0], sizes = [8, 64], strides = [1, 1]} : vector<8x96xf32> to vector<8x64xf32>
    %374 = vector.extract_strided_slice %372 {offsets = [0, 0], sizes = [8, 64], strides = [1, 1]} : vector<8x128xf32> to vector<8x64xf32>
    %375 = arith.addf %373, %374 : vector<8x64xf32>
    %cst_111 = arith.constant 5.000000e-01 : f32
    %376 = vector.broadcast %cst_111 : f32 to vector<8x64xf32>
    %377 = arith.mulf %376, %375 : vector<8x64xf32>
    %378 = math.tanh %377 : vector<8x64xf32>
    %cst_112 = arith.constant 5.000000e-01 : f32
    %379 = vector.broadcast %cst_112 : f32 to vector<8x64xf32>
    %380 = arith.mulf %379, %378 : vector<8x64xf32>
    %cst_113 = arith.constant 5.000000e-01 : f32
    %381 = vector.broadcast %cst_113 : f32 to vector<8x64xf32>
    %382 = arith.addf %380, %381 : vector<8x64xf32>
    %383 = vector.extract_strided_slice %382 {offsets = [0, 0], sizes = [8, 32], strides = [1, 1]} : vector<8x64xf32> to vector<8x32xf32>
    %384 = vector.extract_strided_slice %382 {offsets = [0, 32], sizes = [8, 32], strides = [1, 1]} : vector<8x64xf32> to vector<8x32xf32>
    %385 = vector.extract_strided_slice %371 {offsets = [0, 64], sizes = [8, 32], strides = [1, 1]} : vector<8x96xf32> to vector<8x32xf32>
    %386 = vector.extract_strided_slice %372 {offsets = [0, 64], sizes = [8, 32], strides = [1, 1]} : vector<8x128xf32> to vector<8x32xf32>
    %387 = arith.addf %386, %4 : vector<8x32xf32>
    %388 = arith.mulf %383, %387 : vector<8x32xf32>
    %389 = arith.addf %385, %388 : vector<8x32xf32>
    %390 = math.tanh %389 : vector<8x32xf32>
    %cst_114 = arith.constant 1.000000e+00 : f32
    %391 = vector.broadcast %cst_114 : f32 to vector<8x32xf32>
    %392 = arith.subf %391, %384 : vector<8x32xf32>
    %393 = arith.mulf %392, %390 : vector<8x32xf32>
    %394 = arith.mulf %384, %341 : vector<8x32xf32>
    %395 = arith.addf %393, %394 : vector<8x32xf32>
    %396 = tpu.concatenate %341, %366 in 1 : vector<8x32xf32>, vector<8x32xf32> -> vector<8x64xf32>
    %cst_115 = arith.constant dense<0.000000e+00> : vector<8x128xf32>
    %397 = tpu.matmul %396, %15, %cst_115 {dimension_numbers = #tpu.dot_dimension_numbers<[1], [0], [0], [1], [0, 0, 1, 1], [], []>} : vector<8x64xf32>, vector<64x128xf32>, vector<8x128xf32> -> vector<8x128xf32>
    %398 = vector.extract_strided_slice %397 {offsets = [0, 0], sizes = [8, 64], strides = [1, 1]} : vector<8x128xf32> to vector<8x64xf32>
    %399 = arith.addf %398, %8 : vector<8x64xf32>
    %cst_116 = arith.constant 5.000000e-01 : f32
    %400 = vector.broadcast %cst_116 : f32 to vector<8x64xf32>
    %401 = arith.mulf %400, %399 : vector<8x64xf32>
    %402 = math.tanh %401 : vector<8x64xf32>
    %cst_117 = arith.constant 5.000000e-01 : f32
    %403 = vector.broadcast %cst_117 : f32 to vector<8x64xf32>
    %404 = arith.mulf %403, %402 : vector<8x64xf32>
    %cst_118 = arith.constant 5.000000e-01 : f32
    %405 = vector.broadcast %cst_118 : f32 to vector<8x64xf32>
    %406 = arith.addf %404, %405 : vector<8x64xf32>
    %407 = vector.extract_strided_slice %406 {offsets = [0, 0], sizes = [8, 32], strides = [1, 1]} : vector<8x64xf32> to vector<8x32xf32>
    %408 = vector.extract_strided_slice %406 {offsets = [0, 32], sizes = [8, 32], strides = [1, 1]} : vector<8x64xf32> to vector<8x32xf32>
    %409 = vector.extract_strided_slice %397 {offsets = [0, 64], sizes = [8, 32], strides = [1, 1]} : vector<8x128xf32> to vector<8x32xf32>
    %410 = arith.addf %409, %11 : vector<8x32xf32>
    %411 = vector.extract_strided_slice %397 {offsets = [0, 96], sizes = [8, 32], strides = [1, 1]} : vector<8x128xf32> to vector<8x32xf32>
    %412 = arith.addf %411, %14 : vector<8x32xf32>
    %413 = arith.mulf %407, %412 : vector<8x32xf32>
    %414 = arith.addf %410, %413 : vector<8x32xf32>
    %415 = math.tanh %414 : vector<8x32xf32>
    %cst_119 = arith.constant 1.000000e+00 : f32
    %416 = vector.broadcast %cst_119 : f32 to vector<8x32xf32>
    %417 = arith.subf %416, %408 : vector<8x32xf32>
    %418 = arith.mulf %417, %415 : vector<8x32xf32>
    %419 = arith.mulf %408, %366 : vector<8x32xf32>
    %420 = arith.addf %418, %419 : vector<8x32xf32>
    %c6_120 = arith.constant 6 : index
    %c0_121 = arith.constant 0 : index
    %c0_122 = arith.constant 0 : index
    %421 = vector.load %arg3[%c6_120, %c0_121, %c0_122] : memref<24x8x32xf32, #tpu.memory_space<vmem>>, vector<1x8x32xf32>
    %422 = vector.shape_cast %421 : vector<1x8x32xf32> to vector<8x32xf32>
    %423 = vector.shape_cast %420 : vector<8x32xf32> to vector<1x8x32xf32>
    tpu.vector_store %arg3[%c6_120, %c0_121, %c0_122], %423 {strides = array<i32>} : memref<24x8x32xf32, #tpu.memory_space<vmem>>, vector<1x8x32xf32>,
    %c8_123 = arith.constant 8 : index
    %c0_124 = arith.constant 0 : index
    %c0_125 = arith.constant 0 : index
    %424 = vector.load %arg0[%c8_123, %c0_124, %c0_125] : memref<24x8x96xf32, #tpu.memory_space<vmem>>, vector<1x8x96xf32>
    %425 = vector.shape_cast %424 : vector<1x8x96xf32> to vector<8x96xf32>
    %cst_126 = arith.constant dense<0.000000e+00> : vector<8x128xf32>
    %426 = tpu.matmul %395, %0, %cst_126 {dimension_numbers = #tpu.dot_dimension_numbers<[1], [0], [0], [1], [0, 0, 1, 1], [], []>} : vector<8x32xf32>, vector<32x128xf32>, vector<8x128xf32> -> vector<8x128xf32>
    %427 = vector.extract_strided_slice %425 {offsets = [0, 0], sizes = [8, 64], strides = [1, 1]} : vector<8x96xf32> to vector<8x64xf32>
    %428 = vector.extract_strided_slice %426 {offsets = [0, 0], sizes = [8, 64], strides = [1, 1]} : vector<8x128xf32> to vector<8x64xf32>
    %429 = arith.addf %427, %428 : vector<8x64xf32>
    %cst_127 = arith.constant 5.000000e-01 : f32
    %430 = vector.broadcast %cst_127 : f32 to vector<8x64xf32>
    %431 = arith.mulf %430, %429 : vector<8x64xf32>
    %432 = math.tanh %431 : vector<8x64xf32>
    %cst_128 = arith.constant 5.000000e-01 : f32
    %433 = vector.broadcast %cst_128 : f32 to vector<8x64xf32>
    %434 = arith.mulf %433, %432 : vector<8x64xf32>
    %cst_129 = arith.constant 5.000000e-01 : f32
    %435 = vector.broadcast %cst_129 : f32 to vector<8x64xf32>
    %436 = arith.addf %434, %435 : vector<8x64xf32>
    %437 = vector.extract_strided_slice %436 {offsets = [0, 0], sizes = [8, 32], strides = [1, 1]} : vector<8x64xf32> to vector<8x32xf32>
    %438 = vector.extract_strided_slice %436 {offsets = [0, 32], sizes = [8, 32], strides = [1, 1]} : vector<8x64xf32> to vector<8x32xf32>
    %439 = vector.extract_strided_slice %425 {offsets = [0, 64], sizes = [8, 32], strides = [1, 1]} : vector<8x96xf32> to vector<8x32xf32>
    %440 = vector.extract_strided_slice %426 {offsets = [0, 64], sizes = [8, 32], strides = [1, 1]} : vector<8x128xf32> to vector<8x32xf32>
    %441 = arith.addf %440, %4 : vector<8x32xf32>
    %442 = arith.mulf %437, %441 : vector<8x32xf32>
    %443 = arith.addf %439, %442 : vector<8x32xf32>
    %444 = math.tanh %443 : vector<8x32xf32>
    %cst_130 = arith.constant 1.000000e+00 : f32
    %445 = vector.broadcast %cst_130 : f32 to vector<8x32xf32>
    %446 = arith.subf %445, %438 : vector<8x32xf32>
    %447 = arith.mulf %446, %444 : vector<8x32xf32>
    %448 = arith.mulf %438, %395 : vector<8x32xf32>
    %449 = arith.addf %447, %448 : vector<8x32xf32>
    %450 = tpu.concatenate %395, %420 in 1 : vector<8x32xf32>, vector<8x32xf32> -> vector<8x64xf32>
    %cst_131 = arith.constant dense<0.000000e+00> : vector<8x128xf32>
    %451 = tpu.matmul %450, %15, %cst_131 {dimension_numbers = #tpu.dot_dimension_numbers<[1], [0], [0], [1], [0, 0, 1, 1], [], []>} : vector<8x64xf32>, vector<64x128xf32>, vector<8x128xf32> -> vector<8x128xf32>
    %452 = vector.extract_strided_slice %451 {offsets = [0, 0], sizes = [8, 64], strides = [1, 1]} : vector<8x128xf32> to vector<8x64xf32>
    %453 = arith.addf %452, %8 : vector<8x64xf32>
    %cst_132 = arith.constant 5.000000e-01 : f32
    %454 = vector.broadcast %cst_132 : f32 to vector<8x64xf32>
    %455 = arith.mulf %454, %453 : vector<8x64xf32>
    %456 = math.tanh %455 : vector<8x64xf32>
    %cst_133 = arith.constant 5.000000e-01 : f32
    %457 = vector.broadcast %cst_133 : f32 to vector<8x64xf32>
    %458 = arith.mulf %457, %456 : vector<8x64xf32>
    %cst_134 = arith.constant 5.000000e-01 : f32
    %459 = vector.broadcast %cst_134 : f32 to vector<8x64xf32>
    %460 = arith.addf %458, %459 : vector<8x64xf32>
    %461 = vector.extract_strided_slice %460 {offsets = [0, 0], sizes = [8, 32], strides = [1, 1]} : vector<8x64xf32> to vector<8x32xf32>
    %462 = vector.extract_strided_slice %460 {offsets = [0, 32], sizes = [8, 32], strides = [1, 1]} : vector<8x64xf32> to vector<8x32xf32>
    %463 = vector.extract_strided_slice %451 {offsets = [0, 64], sizes = [8, 32], strides = [1, 1]} : vector<8x128xf32> to vector<8x32xf32>
    %464 = arith.addf %463, %11 : vector<8x32xf32>
    %465 = vector.extract_strided_slice %451 {offsets = [0, 96], sizes = [8, 32], strides = [1, 1]} : vector<8x128xf32> to vector<8x32xf32>
    %466 = arith.addf %465, %14 : vector<8x32xf32>
    %467 = arith.mulf %461, %466 : vector<8x32xf32>
    %468 = arith.addf %464, %467 : vector<8x32xf32>
    %469 = math.tanh %468 : vector<8x32xf32>
    %cst_135 = arith.constant 1.000000e+00 : f32
    %470 = vector.broadcast %cst_135 : f32 to vector<8x32xf32>
    %471 = arith.subf %470, %462 : vector<8x32xf32>
    %472 = arith.mulf %471, %469 : vector<8x32xf32>
    %473 = arith.mulf %462, %420 : vector<8x32xf32>
    %474 = arith.addf %472, %473 : vector<8x32xf32>
    %c7_136 = arith.constant 7 : index
    %c0_137 = arith.constant 0 : index
    %c0_138 = arith.constant 0 : index
    %475 = vector.load %arg3[%c7_136, %c0_137, %c0_138] : memref<24x8x32xf32, #tpu.memory_space<vmem>>, vector<1x8x32xf32>
    %476 = vector.shape_cast %475 : vector<1x8x32xf32> to vector<8x32xf32>
    %477 = vector.shape_cast %474 : vector<8x32xf32> to vector<1x8x32xf32>
    tpu.vector_store %arg3[%c7_136, %c0_137, %c0_138], %477 {strides = array<i32>} : memref<24x8x32xf32, #tpu.memory_space<vmem>>, vector<1x8x32xf32>,
    %c9 = arith.constant 9 : index
    %c0_139 = arith.constant 0 : index
    %c0_140 = arith.constant 0 : index
    %478 = vector.load %arg0[%c9, %c0_139, %c0_140] : memref<24x8x96xf32, #tpu.memory_space<vmem>>, vector<1x8x96xf32>
    %479 = vector.shape_cast %478 : vector<1x8x96xf32> to vector<8x96xf32>
    %cst_141 = arith.constant dense<0.000000e+00> : vector<8x128xf32>
    %480 = tpu.matmul %449, %0, %cst_141 {dimension_numbers = #tpu.dot_dimension_numbers<[1], [0], [0], [1], [0, 0, 1, 1], [], []>} : vector<8x32xf32>, vector<32x128xf32>, vector<8x128xf32> -> vector<8x128xf32>
    %481 = vector.extract_strided_slice %479 {offsets = [0, 0], sizes = [8, 64], strides = [1, 1]} : vector<8x96xf32> to vector<8x64xf32>
    %482 = vector.extract_strided_slice %480 {offsets = [0, 0], sizes = [8, 64], strides = [1, 1]} : vector<8x128xf32> to vector<8x64xf32>
    %483 = arith.addf %481, %482 : vector<8x64xf32>
    %cst_142 = arith.constant 5.000000e-01 : f32
    %484 = vector.broadcast %cst_142 : f32 to vector<8x64xf32>
    %485 = arith.mulf %484, %483 : vector<8x64xf32>
    %486 = math.tanh %485 : vector<8x64xf32>
    %cst_143 = arith.constant 5.000000e-01 : f32
    %487 = vector.broadcast %cst_143 : f32 to vector<8x64xf32>
    %488 = arith.mulf %487, %486 : vector<8x64xf32>
    %cst_144 = arith.constant 5.000000e-01 : f32
    %489 = vector.broadcast %cst_144 : f32 to vector<8x64xf32>
    %490 = arith.addf %488, %489 : vector<8x64xf32>
    %491 = vector.extract_strided_slice %490 {offsets = [0, 0], sizes = [8, 32], strides = [1, 1]} : vector<8x64xf32> to vector<8x32xf32>
    %492 = vector.extract_strided_slice %490 {offsets = [0, 32], sizes = [8, 32], strides = [1, 1]} : vector<8x64xf32> to vector<8x32xf32>
    %493 = vector.extract_strided_slice %479 {offsets = [0, 64], sizes = [8, 32], strides = [1, 1]} : vector<8x96xf32> to vector<8x32xf32>
    %494 = vector.extract_strided_slice %480 {offsets = [0, 64], sizes = [8, 32], strides = [1, 1]} : vector<8x128xf32> to vector<8x32xf32>
    %495 = arith.addf %494, %4 : vector<8x32xf32>
    %496 = arith.mulf %491, %495 : vector<8x32xf32>
    %497 = arith.addf %493, %496 : vector<8x32xf32>
    %498 = math.tanh %497 : vector<8x32xf32>
    %cst_145 = arith.constant 1.000000e+00 : f32
    %499 = vector.broadcast %cst_145 : f32 to vector<8x32xf32>
    %500 = arith.subf %499, %492 : vector<8x32xf32>
    %501 = arith.mulf %500, %498 : vector<8x32xf32>
    %502 = arith.mulf %492, %449 : vector<8x32xf32>
    %503 = arith.addf %501, %502 : vector<8x32xf32>
    %504 = tpu.concatenate %449, %474 in 1 : vector<8x32xf32>, vector<8x32xf32> -> vector<8x64xf32>
    %cst_146 = arith.constant dense<0.000000e+00> : vector<8x128xf32>
    %505 = tpu.matmul %504, %15, %cst_146 {dimension_numbers = #tpu.dot_dimension_numbers<[1], [0], [0], [1], [0, 0, 1, 1], [], []>} : vector<8x64xf32>, vector<64x128xf32>, vector<8x128xf32> -> vector<8x128xf32>
    %506 = vector.extract_strided_slice %505 {offsets = [0, 0], sizes = [8, 64], strides = [1, 1]} : vector<8x128xf32> to vector<8x64xf32>
    %507 = arith.addf %506, %8 : vector<8x64xf32>
    %cst_147 = arith.constant 5.000000e-01 : f32
    %508 = vector.broadcast %cst_147 : f32 to vector<8x64xf32>
    %509 = arith.mulf %508, %507 : vector<8x64xf32>
    %510 = math.tanh %509 : vector<8x64xf32>
    %cst_148 = arith.constant 5.000000e-01 : f32
    %511 = vector.broadcast %cst_148 : f32 to vector<8x64xf32>
    %512 = arith.mulf %511, %510 : vector<8x64xf32>
    %cst_149 = arith.constant 5.000000e-01 : f32
    %513 = vector.broadcast %cst_149 : f32 to vector<8x64xf32>
    %514 = arith.addf %512, %513 : vector<8x64xf32>
    %515 = vector.extract_strided_slice %514 {offsets = [0, 0], sizes = [8, 32], strides = [1, 1]} : vector<8x64xf32> to vector<8x32xf32>
    %516 = vector.extract_strided_slice %514 {offsets = [0, 32], sizes = [8, 32], strides = [1, 1]} : vector<8x64xf32> to vector<8x32xf32>
    %517 = vector.extract_strided_slice %505 {offsets = [0, 64], sizes = [8, 32], strides = [1, 1]} : vector<8x128xf32> to vector<8x32xf32>
    %518 = arith.addf %517, %11 : vector<8x32xf32>
    %519 = vector.extract_strided_slice %505 {offsets = [0, 96], sizes = [8, 32], strides = [1, 1]} : vector<8x128xf32> to vector<8x32xf32>
    %520 = arith.addf %519, %14 : vector<8x32xf32>
    %521 = arith.mulf %515, %520 : vector<8x32xf32>
    %522 = arith.addf %518, %521 : vector<8x32xf32>
    %523 = math.tanh %522 : vector<8x32xf32>
    %cst_150 = arith.constant 1.000000e+00 : f32
    %524 = vector.broadcast %cst_150 : f32 to vector<8x32xf32>
    %525 = arith.subf %524, %516 : vector<8x32xf32>
    %526 = arith.mulf %525, %523 : vector<8x32xf32>
    %527 = arith.mulf %516, %474 : vector<8x32xf32>
    %528 = arith.addf %526, %527 : vector<8x32xf32>
    %c8_151 = arith.constant 8 : index
    %c0_152 = arith.constant 0 : index
    %c0_153 = arith.constant 0 : index
    %529 = vector.load %arg3[%c8_151, %c0_152, %c0_153] : memref<24x8x32xf32, #tpu.memory_space<vmem>>, vector<1x8x32xf32>
    %530 = vector.shape_cast %529 : vector<1x8x32xf32> to vector<8x32xf32>
    %531 = vector.shape_cast %528 : vector<8x32xf32> to vector<1x8x32xf32>
    tpu.vector_store %arg3[%c8_151, %c0_152, %c0_153], %531 {strides = array<i32>} : memref<24x8x32xf32, #tpu.memory_space<vmem>>, vector<1x8x32xf32>,
    %c10 = arith.constant 10 : index
    %c0_154 = arith.constant 0 : index
    %c0_155 = arith.constant 0 : index
    %532 = vector.load %arg0[%c10, %c0_154, %c0_155] : memref<24x8x96xf32, #tpu.memory_space<vmem>>, vector<1x8x96xf32>
    %533 = vector.shape_cast %532 : vector<1x8x96xf32> to vector<8x96xf32>
    %cst_156 = arith.constant dense<0.000000e+00> : vector<8x128xf32>
    %534 = tpu.matmul %503, %0, %cst_156 {dimension_numbers = #tpu.dot_dimension_numbers<[1], [0], [0], [1], [0, 0, 1, 1], [], []>} : vector<8x32xf32>, vector<32x128xf32>, vector<8x128xf32> -> vector<8x128xf32>
    %535 = vector.extract_strided_slice %533 {offsets = [0, 0], sizes = [8, 64], strides = [1, 1]} : vector<8x96xf32> to vector<8x64xf32>
    %536 = vector.extract_strided_slice %534 {offsets = [0, 0], sizes = [8, 64], strides = [1, 1]} : vector<8x128xf32> to vector<8x64xf32>
    %537 = arith.addf %535, %536 : vector<8x64xf32>
    %cst_157 = arith.constant 5.000000e-01 : f32
    %538 = vector.broadcast %cst_157 : f32 to vector<8x64xf32>
    %539 = arith.mulf %538, %537 : vector<8x64xf32>
    %540 = math.tanh %539 : vector<8x64xf32>
    %cst_158 = arith.constant 5.000000e-01 : f32
    %541 = vector.broadcast %cst_158 : f32 to vector<8x64xf32>
    %542 = arith.mulf %541, %540 : vector<8x64xf32>
    %cst_159 = arith.constant 5.000000e-01 : f32
    %543 = vector.broadcast %cst_159 : f32 to vector<8x64xf32>
    %544 = arith.addf %542, %543 : vector<8x64xf32>
    %545 = vector.extract_strided_slice %544 {offsets = [0, 0], sizes = [8, 32], strides = [1, 1]} : vector<8x64xf32> to vector<8x32xf32>
    %546 = vector.extract_strided_slice %544 {offsets = [0, 32], sizes = [8, 32], strides = [1, 1]} : vector<8x64xf32> to vector<8x32xf32>
    %547 = vector.extract_strided_slice %533 {offsets = [0, 64], sizes = [8, 32], strides = [1, 1]} : vector<8x96xf32> to vector<8x32xf32>
    %548 = vector.extract_strided_slice %534 {offsets = [0, 64], sizes = [8, 32], strides = [1, 1]} : vector<8x128xf32> to vector<8x32xf32>
    %549 = arith.addf %548, %4 : vector<8x32xf32>
    %550 = arith.mulf %545, %549 : vector<8x32xf32>
    %551 = arith.addf %547, %550 : vector<8x32xf32>
    %552 = math.tanh %551 : vector<8x32xf32>
    %cst_160 = arith.constant 1.000000e+00 : f32
    %553 = vector.broadcast %cst_160 : f32 to vector<8x32xf32>
    %554 = arith.subf %553, %546 : vector<8x32xf32>
    %555 = arith.mulf %554, %552 : vector<8x32xf32>
    %556 = arith.mulf %546, %503 : vector<8x32xf32>
    %557 = arith.addf %555, %556 : vector<8x32xf32>
    %558 = tpu.concatenate %503, %528 in 1 : vector<8x32xf32>, vector<8x32xf32> -> vector<8x64xf32>
    %cst_161 = arith.constant dense<0.000000e+00> : vector<8x128xf32>
    %559 = tpu.matmul %558, %15, %cst_161 {dimension_numbers = #tpu.dot_dimension_numbers<[1], [0], [0], [1], [0, 0, 1, 1], [], []>} : vector<8x64xf32>, vector<64x128xf32>, vector<8x128xf32> -> vector<8x128xf32>
    %560 = vector.extract_strided_slice %559 {offsets = [0, 0], sizes = [8, 64], strides = [1, 1]} : vector<8x128xf32> to vector<8x64xf32>
    %561 = arith.addf %560, %8 : vector<8x64xf32>
    %cst_162 = arith.constant 5.000000e-01 : f32
    %562 = vector.broadcast %cst_162 : f32 to vector<8x64xf32>
    %563 = arith.mulf %562, %561 : vector<8x64xf32>
    %564 = math.tanh %563 : vector<8x64xf32>
    %cst_163 = arith.constant 5.000000e-01 : f32
    %565 = vector.broadcast %cst_163 : f32 to vector<8x64xf32>
    %566 = arith.mulf %565, %564 : vector<8x64xf32>
    %cst_164 = arith.constant 5.000000e-01 : f32
    %567 = vector.broadcast %cst_164 : f32 to vector<8x64xf32>
    %568 = arith.addf %566, %567 : vector<8x64xf32>
    %569 = vector.extract_strided_slice %568 {offsets = [0, 0], sizes = [8, 32], strides = [1, 1]} : vector<8x64xf32> to vector<8x32xf32>
    %570 = vector.extract_strided_slice %568 {offsets = [0, 32], sizes = [8, 32], strides = [1, 1]} : vector<8x64xf32> to vector<8x32xf32>
    %571 = vector.extract_strided_slice %559 {offsets = [0, 64], sizes = [8, 32], strides = [1, 1]} : vector<8x128xf32> to vector<8x32xf32>
    %572 = arith.addf %571, %11 : vector<8x32xf32>
    %573 = vector.extract_strided_slice %559 {offsets = [0, 96], sizes = [8, 32], strides = [1, 1]} : vector<8x128xf32> to vector<8x32xf32>
    %574 = arith.addf %573, %14 : vector<8x32xf32>
    %575 = arith.mulf %569, %574 : vector<8x32xf32>
    %576 = arith.addf %572, %575 : vector<8x32xf32>
    %577 = math.tanh %576 : vector<8x32xf32>
    %cst_165 = arith.constant 1.000000e+00 : f32
    %578 = vector.broadcast %cst_165 : f32 to vector<8x32xf32>
    %579 = arith.subf %578, %570 : vector<8x32xf32>
    %580 = arith.mulf %579, %577 : vector<8x32xf32>
    %581 = arith.mulf %570, %528 : vector<8x32xf32>
    %582 = arith.addf %580, %581 : vector<8x32xf32>
    %c9_166 = arith.constant 9 : index
    %c0_167 = arith.constant 0 : index
    %c0_168 = arith.constant 0 : index
    %583 = vector.load %arg3[%c9_166, %c0_167, %c0_168] : memref<24x8x32xf32, #tpu.memory_space<vmem>>, vector<1x8x32xf32>
    %584 = vector.shape_cast %583 : vector<1x8x32xf32> to vector<8x32xf32>
    %585 = vector.shape_cast %582 : vector<8x32xf32> to vector<1x8x32xf32>
    tpu.vector_store %arg3[%c9_166, %c0_167, %c0_168], %585 {strides = array<i32>} : memref<24x8x32xf32, #tpu.memory_space<vmem>>, vector<1x8x32xf32>,
    %c11 = arith.constant 11 : index
    %c0_169 = arith.constant 0 : index
    %c0_170 = arith.constant 0 : index
    %586 = vector.load %arg0[%c11, %c0_169, %c0_170] : memref<24x8x96xf32, #tpu.memory_space<vmem>>, vector<1x8x96xf32>
    %587 = vector.shape_cast %586 : vector<1x8x96xf32> to vector<8x96xf32>
    %cst_171 = arith.constant dense<0.000000e+00> : vector<8x128xf32>
    %588 = tpu.matmul %557, %0, %cst_171 {dimension_numbers = #tpu.dot_dimension_numbers<[1], [0], [0], [1], [0, 0, 1, 1], [], []>} : vector<8x32xf32>, vector<32x128xf32>, vector<8x128xf32> -> vector<8x128xf32>
    %589 = vector.extract_strided_slice %587 {offsets = [0, 0], sizes = [8, 64], strides = [1, 1]} : vector<8x96xf32> to vector<8x64xf32>
    %590 = vector.extract_strided_slice %588 {offsets = [0, 0], sizes = [8, 64], strides = [1, 1]} : vector<8x128xf32> to vector<8x64xf32>
    %591 = arith.addf %589, %590 : vector<8x64xf32>
    %cst_172 = arith.constant 5.000000e-01 : f32
    %592 = vector.broadcast %cst_172 : f32 to vector<8x64xf32>
    %593 = arith.mulf %592, %591 : vector<8x64xf32>
    %594 = math.tanh %593 : vector<8x64xf32>
    %cst_173 = arith.constant 5.000000e-01 : f32
    %595 = vector.broadcast %cst_173 : f32 to vector<8x64xf32>
    %596 = arith.mulf %595, %594 : vector<8x64xf32>
    %cst_174 = arith.constant 5.000000e-01 : f32
    %597 = vector.broadcast %cst_174 : f32 to vector<8x64xf32>
    %598 = arith.addf %596, %597 : vector<8x64xf32>
    %599 = vector.extract_strided_slice %598 {offsets = [0, 0], sizes = [8, 32], strides = [1, 1]} : vector<8x64xf32> to vector<8x32xf32>
    %600 = vector.extract_strided_slice %598 {offsets = [0, 32], sizes = [8, 32], strides = [1, 1]} : vector<8x64xf32> to vector<8x32xf32>
    %601 = vector.extract_strided_slice %587 {offsets = [0, 64], sizes = [8, 32], strides = [1, 1]} : vector<8x96xf32> to vector<8x32xf32>
    %602 = vector.extract_strided_slice %588 {offsets = [0, 64], sizes = [8, 32], strides = [1, 1]} : vector<8x128xf32> to vector<8x32xf32>
    %603 = arith.addf %602, %4 : vector<8x32xf32>
    %604 = arith.mulf %599, %603 : vector<8x32xf32>
    %605 = arith.addf %601, %604 : vector<8x32xf32>
    %606 = math.tanh %605 : vector<8x32xf32>
    %cst_175 = arith.constant 1.000000e+00 : f32
    %607 = vector.broadcast %cst_175 : f32 to vector<8x32xf32>
    %608 = arith.subf %607, %600 : vector<8x32xf32>
    %609 = arith.mulf %608, %606 : vector<8x32xf32>
    %610 = arith.mulf %600, %557 : vector<8x32xf32>
    %611 = arith.addf %609, %610 : vector<8x32xf32>
    %612 = tpu.concatenate %557, %582 in 1 : vector<8x32xf32>, vector<8x32xf32> -> vector<8x64xf32>
    %cst_176 = arith.constant dense<0.000000e+00> : vector<8x128xf32>
    %613 = tpu.matmul %612, %15, %cst_176 {dimension_numbers = #tpu.dot_dimension_numbers<[1], [0], [0], [1], [0, 0, 1, 1], [], []>} : vector<8x64xf32>, vector<64x128xf32>, vector<8x128xf32> -> vector<8x128xf32>
    %614 = vector.extract_strided_slice %613 {offsets = [0, 0], sizes = [8, 64], strides = [1, 1]} : vector<8x128xf32> to vector<8x64xf32>
    %615 = arith.addf %614, %8 : vector<8x64xf32>
    %cst_177 = arith.constant 5.000000e-01 : f32
    %616 = vector.broadcast %cst_177 : f32 to vector<8x64xf32>
    %617 = arith.mulf %616, %615 : vector<8x64xf32>
    %618 = math.tanh %617 : vector<8x64xf32>
    %cst_178 = arith.constant 5.000000e-01 : f32
    %619 = vector.broadcast %cst_178 : f32 to vector<8x64xf32>
    %620 = arith.mulf %619, %618 : vector<8x64xf32>
    %cst_179 = arith.constant 5.000000e-01 : f32
    %621 = vector.broadcast %cst_179 : f32 to vector<8x64xf32>
    %622 = arith.addf %620, %621 : vector<8x64xf32>
    %623 = vector.extract_strided_slice %622 {offsets = [0, 0], sizes = [8, 32], strides = [1, 1]} : vector<8x64xf32> to vector<8x32xf32>
    %624 = vector.extract_strided_slice %622 {offsets = [0, 32], sizes = [8, 32], strides = [1, 1]} : vector<8x64xf32> to vector<8x32xf32>
    %625 = vector.extract_strided_slice %613 {offsets = [0, 64], sizes = [8, 32], strides = [1, 1]} : vector<8x128xf32> to vector<8x32xf32>
    %626 = arith.addf %625, %11 : vector<8x32xf32>
    %627 = vector.extract_strided_slice %613 {offsets = [0, 96], sizes = [8, 32], strides = [1, 1]} : vector<8x128xf32> to vector<8x32xf32>
    %628 = arith.addf %627, %14 : vector<8x32xf32>
    %629 = arith.mulf %623, %628 : vector<8x32xf32>
    %630 = arith.addf %626, %629 : vector<8x32xf32>
    %631 = math.tanh %630 : vector<8x32xf32>
    %cst_180 = arith.constant 1.000000e+00 : f32
    %632 = vector.broadcast %cst_180 : f32 to vector<8x32xf32>
    %633 = arith.subf %632, %624 : vector<8x32xf32>
    %634 = arith.mulf %633, %631 : vector<8x32xf32>
    %635 = arith.mulf %624, %582 : vector<8x32xf32>
    %636 = arith.addf %634, %635 : vector<8x32xf32>
    %c10_181 = arith.constant 10 : index
    %c0_182 = arith.constant 0 : index
    %c0_183 = arith.constant 0 : index
    %637 = vector.load %arg3[%c10_181, %c0_182, %c0_183] : memref<24x8x32xf32, #tpu.memory_space<vmem>>, vector<1x8x32xf32>
    %638 = vector.shape_cast %637 : vector<1x8x32xf32> to vector<8x32xf32>
    %639 = vector.shape_cast %636 : vector<8x32xf32> to vector<1x8x32xf32>
    tpu.vector_store %arg3[%c10_181, %c0_182, %c0_183], %639 {strides = array<i32>} : memref<24x8x32xf32, #tpu.memory_space<vmem>>, vector<1x8x32xf32>,
    %c12 = arith.constant 12 : index
    %c0_184 = arith.constant 0 : index
    %c0_185 = arith.constant 0 : index
    %640 = vector.load %arg0[%c12, %c0_184, %c0_185] : memref<24x8x96xf32, #tpu.memory_space<vmem>>, vector<1x8x96xf32>
    %641 = vector.shape_cast %640 : vector<1x8x96xf32> to vector<8x96xf32>
    %cst_186 = arith.constant dense<0.000000e+00> : vector<8x128xf32>
    %642 = tpu.matmul %611, %0, %cst_186 {dimension_numbers = #tpu.dot_dimension_numbers<[1], [0], [0], [1], [0, 0, 1, 1], [], []>} : vector<8x32xf32>, vector<32x128xf32>, vector<8x128xf32> -> vector<8x128xf32>
    %643 = vector.extract_strided_slice %641 {offsets = [0, 0], sizes = [8, 64], strides = [1, 1]} : vector<8x96xf32> to vector<8x64xf32>
    %644 = vector.extract_strided_slice %642 {offsets = [0, 0], sizes = [8, 64], strides = [1, 1]} : vector<8x128xf32> to vector<8x64xf32>
    %645 = arith.addf %643, %644 : vector<8x64xf32>
    %cst_187 = arith.constant 5.000000e-01 : f32
    %646 = vector.broadcast %cst_187 : f32 to vector<8x64xf32>
    %647 = arith.mulf %646, %645 : vector<8x64xf32>
    %648 = math.tanh %647 : vector<8x64xf32>
    %cst_188 = arith.constant 5.000000e-01 : f32
    %649 = vector.broadcast %cst_188 : f32 to vector<8x64xf32>
    %650 = arith.mulf %649, %648 : vector<8x64xf32>
    %cst_189 = arith.constant 5.000000e-01 : f32
    %651 = vector.broadcast %cst_189 : f32 to vector<8x64xf32>
    %652 = arith.addf %650, %651 : vector<8x64xf32>
    %653 = vector.extract_strided_slice %652 {offsets = [0, 0], sizes = [8, 32], strides = [1, 1]} : vector<8x64xf32> to vector<8x32xf32>
    %654 = vector.extract_strided_slice %652 {offsets = [0, 32], sizes = [8, 32], strides = [1, 1]} : vector<8x64xf32> to vector<8x32xf32>
    %655 = vector.extract_strided_slice %641 {offsets = [0, 64], sizes = [8, 32], strides = [1, 1]} : vector<8x96xf32> to vector<8x32xf32>
    %656 = vector.extract_strided_slice %642 {offsets = [0, 64], sizes = [8, 32], strides = [1, 1]} : vector<8x128xf32> to vector<8x32xf32>
    %657 = arith.addf %656, %4 : vector<8x32xf32>
    %658 = arith.mulf %653, %657 : vector<8x32xf32>
    %659 = arith.addf %655, %658 : vector<8x32xf32>
    %660 = math.tanh %659 : vector<8x32xf32>
    %cst_190 = arith.constant 1.000000e+00 : f32
    %661 = vector.broadcast %cst_190 : f32 to vector<8x32xf32>
    %662 = arith.subf %661, %654 : vector<8x32xf32>
    %663 = arith.mulf %662, %660 : vector<8x32xf32>
    %664 = arith.mulf %654, %611 : vector<8x32xf32>
    %665 = arith.addf %663, %664 : vector<8x32xf32>
    %666 = tpu.concatenate %611, %636 in 1 : vector<8x32xf32>, vector<8x32xf32> -> vector<8x64xf32>
    %cst_191 = arith.constant dense<0.000000e+00> : vector<8x128xf32>
    %667 = tpu.matmul %666, %15, %cst_191 {dimension_numbers = #tpu.dot_dimension_numbers<[1], [0], [0], [1], [0, 0, 1, 1], [], []>} : vector<8x64xf32>, vector<64x128xf32>, vector<8x128xf32> -> vector<8x128xf32>
    %668 = vector.extract_strided_slice %667 {offsets = [0, 0], sizes = [8, 64], strides = [1, 1]} : vector<8x128xf32> to vector<8x64xf32>
    %669 = arith.addf %668, %8 : vector<8x64xf32>
    %cst_192 = arith.constant 5.000000e-01 : f32
    %670 = vector.broadcast %cst_192 : f32 to vector<8x64xf32>
    %671 = arith.mulf %670, %669 : vector<8x64xf32>
    %672 = math.tanh %671 : vector<8x64xf32>
    %cst_193 = arith.constant 5.000000e-01 : f32
    %673 = vector.broadcast %cst_193 : f32 to vector<8x64xf32>
    %674 = arith.mulf %673, %672 : vector<8x64xf32>
    %cst_194 = arith.constant 5.000000e-01 : f32
    %675 = vector.broadcast %cst_194 : f32 to vector<8x64xf32>
    %676 = arith.addf %674, %675 : vector<8x64xf32>
    %677 = vector.extract_strided_slice %676 {offsets = [0, 0], sizes = [8, 32], strides = [1, 1]} : vector<8x64xf32> to vector<8x32xf32>
    %678 = vector.extract_strided_slice %676 {offsets = [0, 32], sizes = [8, 32], strides = [1, 1]} : vector<8x64xf32> to vector<8x32xf32>
    %679 = vector.extract_strided_slice %667 {offsets = [0, 64], sizes = [8, 32], strides = [1, 1]} : vector<8x128xf32> to vector<8x32xf32>
    %680 = arith.addf %679, %11 : vector<8x32xf32>
    %681 = vector.extract_strided_slice %667 {offsets = [0, 96], sizes = [8, 32], strides = [1, 1]} : vector<8x128xf32> to vector<8x32xf32>
    %682 = arith.addf %681, %14 : vector<8x32xf32>
    %683 = arith.mulf %677, %682 : vector<8x32xf32>
    %684 = arith.addf %680, %683 : vector<8x32xf32>
    %685 = math.tanh %684 : vector<8x32xf32>
    %cst_195 = arith.constant 1.000000e+00 : f32
    %686 = vector.broadcast %cst_195 : f32 to vector<8x32xf32>
    %687 = arith.subf %686, %678 : vector<8x32xf32>
    %688 = arith.mulf %687, %685 : vector<8x32xf32>
    %689 = arith.mulf %678, %636 : vector<8x32xf32>
    %690 = arith.addf %688, %689 : vector<8x32xf32>
    %c11_196 = arith.constant 11 : index
    %c0_197 = arith.constant 0 : index
    %c0_198 = arith.constant 0 : index
    %691 = vector.load %arg3[%c11_196, %c0_197, %c0_198] : memref<24x8x32xf32, #tpu.memory_space<vmem>>, vector<1x8x32xf32>
    %692 = vector.shape_cast %691 : vector<1x8x32xf32> to vector<8x32xf32>
    %693 = vector.shape_cast %690 : vector<8x32xf32> to vector<1x8x32xf32>
    tpu.vector_store %arg3[%c11_196, %c0_197, %c0_198], %693 {strides = array<i32>} : memref<24x8x32xf32, #tpu.memory_space<vmem>>, vector<1x8x32xf32>,
    %c13 = arith.constant 13 : index
    %c0_199 = arith.constant 0 : index
    %c0_200 = arith.constant 0 : index
    %694 = vector.load %arg0[%c13, %c0_199, %c0_200] : memref<24x8x96xf32, #tpu.memory_space<vmem>>, vector<1x8x96xf32>
    %695 = vector.shape_cast %694 : vector<1x8x96xf32> to vector<8x96xf32>
    %cst_201 = arith.constant dense<0.000000e+00> : vector<8x128xf32>
    %696 = tpu.matmul %665, %0, %cst_201 {dimension_numbers = #tpu.dot_dimension_numbers<[1], [0], [0], [1], [0, 0, 1, 1], [], []>} : vector<8x32xf32>, vector<32x128xf32>, vector<8x128xf32> -> vector<8x128xf32>
    %697 = vector.extract_strided_slice %695 {offsets = [0, 0], sizes = [8, 64], strides = [1, 1]} : vector<8x96xf32> to vector<8x64xf32>
    %698 = vector.extract_strided_slice %696 {offsets = [0, 0], sizes = [8, 64], strides = [1, 1]} : vector<8x128xf32> to vector<8x64xf32>
    %699 = arith.addf %697, %698 : vector<8x64xf32>
    %cst_202 = arith.constant 5.000000e-01 : f32
    %700 = vector.broadcast %cst_202 : f32 to vector<8x64xf32>
    %701 = arith.mulf %700, %699 : vector<8x64xf32>
    %702 = math.tanh %701 : vector<8x64xf32>
    %cst_203 = arith.constant 5.000000e-01 : f32
    %703 = vector.broadcast %cst_203 : f32 to vector<8x64xf32>
    %704 = arith.mulf %703, %702 : vector<8x64xf32>
    %cst_204 = arith.constant 5.000000e-01 : f32
    %705 = vector.broadcast %cst_204 : f32 to vector<8x64xf32>
    %706 = arith.addf %704, %705 : vector<8x64xf32>
    %707 = vector.extract_strided_slice %706 {offsets = [0, 0], sizes = [8, 32], strides = [1, 1]} : vector<8x64xf32> to vector<8x32xf32>
    %708 = vector.extract_strided_slice %706 {offsets = [0, 32], sizes = [8, 32], strides = [1, 1]} : vector<8x64xf32> to vector<8x32xf32>
    %709 = vector.extract_strided_slice %695 {offsets = [0, 64], sizes = [8, 32], strides = [1, 1]} : vector<8x96xf32> to vector<8x32xf32>
    %710 = vector.extract_strided_slice %696 {offsets = [0, 64], sizes = [8, 32], strides = [1, 1]} : vector<8x128xf32> to vector<8x32xf32>
    %711 = arith.addf %710, %4 : vector<8x32xf32>
    %712 = arith.mulf %707, %711 : vector<8x32xf32>
    %713 = arith.addf %709, %712 : vector<8x32xf32>
    %714 = math.tanh %713 : vector<8x32xf32>
    %cst_205 = arith.constant 1.000000e+00 : f32
    %715 = vector.broadcast %cst_205 : f32 to vector<8x32xf32>
    %716 = arith.subf %715, %708 : vector<8x32xf32>
    %717 = arith.mulf %716, %714 : vector<8x32xf32>
    %718 = arith.mulf %708, %665 : vector<8x32xf32>
    %719 = arith.addf %717, %718 : vector<8x32xf32>
    %720 = tpu.concatenate %665, %690 in 1 : vector<8x32xf32>, vector<8x32xf32> -> vector<8x64xf32>
    %cst_206 = arith.constant dense<0.000000e+00> : vector<8x128xf32>
    %721 = tpu.matmul %720, %15, %cst_206 {dimension_numbers = #tpu.dot_dimension_numbers<[1], [0], [0], [1], [0, 0, 1, 1], [], []>} : vector<8x64xf32>, vector<64x128xf32>, vector<8x128xf32> -> vector<8x128xf32>
    %722 = vector.extract_strided_slice %721 {offsets = [0, 0], sizes = [8, 64], strides = [1, 1]} : vector<8x128xf32> to vector<8x64xf32>
    %723 = arith.addf %722, %8 : vector<8x64xf32>
    %cst_207 = arith.constant 5.000000e-01 : f32
    %724 = vector.broadcast %cst_207 : f32 to vector<8x64xf32>
    %725 = arith.mulf %724, %723 : vector<8x64xf32>
    %726 = math.tanh %725 : vector<8x64xf32>
    %cst_208 = arith.constant 5.000000e-01 : f32
    %727 = vector.broadcast %cst_208 : f32 to vector<8x64xf32>
    %728 = arith.mulf %727, %726 : vector<8x64xf32>
    %cst_209 = arith.constant 5.000000e-01 : f32
    %729 = vector.broadcast %cst_209 : f32 to vector<8x64xf32>
    %730 = arith.addf %728, %729 : vector<8x64xf32>
    %731 = vector.extract_strided_slice %730 {offsets = [0, 0], sizes = [8, 32], strides = [1, 1]} : vector<8x64xf32> to vector<8x32xf32>
    %732 = vector.extract_strided_slice %730 {offsets = [0, 32], sizes = [8, 32], strides = [1, 1]} : vector<8x64xf32> to vector<8x32xf32>
    %733 = vector.extract_strided_slice %721 {offsets = [0, 64], sizes = [8, 32], strides = [1, 1]} : vector<8x128xf32> to vector<8x32xf32>
    %734 = arith.addf %733, %11 : vector<8x32xf32>
    %735 = vector.extract_strided_slice %721 {offsets = [0, 96], sizes = [8, 32], strides = [1, 1]} : vector<8x128xf32> to vector<8x32xf32>
    %736 = arith.addf %735, %14 : vector<8x32xf32>
    %737 = arith.mulf %731, %736 : vector<8x32xf32>
    %738 = arith.addf %734, %737 : vector<8x32xf32>
    %739 = math.tanh %738 : vector<8x32xf32>
    %cst_210 = arith.constant 1.000000e+00 : f32
    %740 = vector.broadcast %cst_210 : f32 to vector<8x32xf32>
    %741 = arith.subf %740, %732 : vector<8x32xf32>
    %742 = arith.mulf %741, %739 : vector<8x32xf32>
    %743 = arith.mulf %732, %690 : vector<8x32xf32>
    %744 = arith.addf %742, %743 : vector<8x32xf32>
    %c12_211 = arith.constant 12 : index
    %c0_212 = arith.constant 0 : index
    %c0_213 = arith.constant 0 : index
    %745 = vector.load %arg3[%c12_211, %c0_212, %c0_213] : memref<24x8x32xf32, #tpu.memory_space<vmem>>, vector<1x8x32xf32>
    %746 = vector.shape_cast %745 : vector<1x8x32xf32> to vector<8x32xf32>
    %747 = vector.shape_cast %744 : vector<8x32xf32> to vector<1x8x32xf32>
    tpu.vector_store %arg3[%c12_211, %c0_212, %c0_213], %747 {strides = array<i32>} : memref<24x8x32xf32, #tpu.memory_space<vmem>>, vector<1x8x32xf32>,
    %c14 = arith.constant 14 : index
    %c0_214 = arith.constant 0 : index
    %c0_215 = arith.constant 0 : index
    %748 = vector.load %arg0[%c14, %c0_214, %c0_215] : memref<24x8x96xf32, #tpu.memory_space<vmem>>, vector<1x8x96xf32>
    %749 = vector.shape_cast %748 : vector<1x8x96xf32> to vector<8x96xf32>
    %cst_216 = arith.constant dense<0.000000e+00> : vector<8x128xf32>
    %750 = tpu.matmul %719, %0, %cst_216 {dimension_numbers = #tpu.dot_dimension_numbers<[1], [0], [0], [1], [0, 0, 1, 1], [], []>} : vector<8x32xf32>, vector<32x128xf32>, vector<8x128xf32> -> vector<8x128xf32>
    %751 = vector.extract_strided_slice %749 {offsets = [0, 0], sizes = [8, 64], strides = [1, 1]} : vector<8x96xf32> to vector<8x64xf32>
    %752 = vector.extract_strided_slice %750 {offsets = [0, 0], sizes = [8, 64], strides = [1, 1]} : vector<8x128xf32> to vector<8x64xf32>
    %753 = arith.addf %751, %752 : vector<8x64xf32>
    %cst_217 = arith.constant 5.000000e-01 : f32
    %754 = vector.broadcast %cst_217 : f32 to vector<8x64xf32>
    %755 = arith.mulf %754, %753 : vector<8x64xf32>
    %756 = math.tanh %755 : vector<8x64xf32>
    %cst_218 = arith.constant 5.000000e-01 : f32
    %757 = vector.broadcast %cst_218 : f32 to vector<8x64xf32>
    %758 = arith.mulf %757, %756 : vector<8x64xf32>
    %cst_219 = arith.constant 5.000000e-01 : f32
    %759 = vector.broadcast %cst_219 : f32 to vector<8x64xf32>
    %760 = arith.addf %758, %759 : vector<8x64xf32>
    %761 = vector.extract_strided_slice %760 {offsets = [0, 0], sizes = [8, 32], strides = [1, 1]} : vector<8x64xf32> to vector<8x32xf32>
    %762 = vector.extract_strided_slice %760 {offsets = [0, 32], sizes = [8, 32], strides = [1, 1]} : vector<8x64xf32> to vector<8x32xf32>
    %763 = vector.extract_strided_slice %749 {offsets = [0, 64], sizes = [8, 32], strides = [1, 1]} : vector<8x96xf32> to vector<8x32xf32>
    %764 = vector.extract_strided_slice %750 {offsets = [0, 64], sizes = [8, 32], strides = [1, 1]} : vector<8x128xf32> to vector<8x32xf32>
    %765 = arith.addf %764, %4 : vector<8x32xf32>
    %766 = arith.mulf %761, %765 : vector<8x32xf32>
    %767 = arith.addf %763, %766 : vector<8x32xf32>
    %768 = math.tanh %767 : vector<8x32xf32>
    %cst_220 = arith.constant 1.000000e+00 : f32
    %769 = vector.broadcast %cst_220 : f32 to vector<8x32xf32>
    %770 = arith.subf %769, %762 : vector<8x32xf32>
    %771 = arith.mulf %770, %768 : vector<8x32xf32>
    %772 = arith.mulf %762, %719 : vector<8x32xf32>
    %773 = arith.addf %771, %772 : vector<8x32xf32>
    %774 = tpu.concatenate %719, %744 in 1 : vector<8x32xf32>, vector<8x32xf32> -> vector<8x64xf32>
    %cst_221 = arith.constant dense<0.000000e+00> : vector<8x128xf32>
    %775 = tpu.matmul %774, %15, %cst_221 {dimension_numbers = #tpu.dot_dimension_numbers<[1], [0], [0], [1], [0, 0, 1, 1], [], []>} : vector<8x64xf32>, vector<64x128xf32>, vector<8x128xf32> -> vector<8x128xf32>
    %776 = vector.extract_strided_slice %775 {offsets = [0, 0], sizes = [8, 64], strides = [1, 1]} : vector<8x128xf32> to vector<8x64xf32>
    %777 = arith.addf %776, %8 : vector<8x64xf32>
    %cst_222 = arith.constant 5.000000e-01 : f32
    %778 = vector.broadcast %cst_222 : f32 to vector<8x64xf32>
    %779 = arith.mulf %778, %777 : vector<8x64xf32>
    %780 = math.tanh %779 : vector<8x64xf32>
    %cst_223 = arith.constant 5.000000e-01 : f32
    %781 = vector.broadcast %cst_223 : f32 to vector<8x64xf32>
    %782 = arith.mulf %781, %780 : vector<8x64xf32>
    %cst_224 = arith.constant 5.000000e-01 : f32
    %783 = vector.broadcast %cst_224 : f32 to vector<8x64xf32>
    %784 = arith.addf %782, %783 : vector<8x64xf32>
    %785 = vector.extract_strided_slice %784 {offsets = [0, 0], sizes = [8, 32], strides = [1, 1]} : vector<8x64xf32> to vector<8x32xf32>
    %786 = vector.extract_strided_slice %784 {offsets = [0, 32], sizes = [8, 32], strides = [1, 1]} : vector<8x64xf32> to vector<8x32xf32>
    %787 = vector.extract_strided_slice %775 {offsets = [0, 64], sizes = [8, 32], strides = [1, 1]} : vector<8x128xf32> to vector<8x32xf32>
    %788 = arith.addf %787, %11 : vector<8x32xf32>
    %789 = vector.extract_strided_slice %775 {offsets = [0, 96], sizes = [8, 32], strides = [1, 1]} : vector<8x128xf32> to vector<8x32xf32>
    %790 = arith.addf %789, %14 : vector<8x32xf32>
    %791 = arith.mulf %785, %790 : vector<8x32xf32>
    %792 = arith.addf %788, %791 : vector<8x32xf32>
    %793 = math.tanh %792 : vector<8x32xf32>
    %cst_225 = arith.constant 1.000000e+00 : f32
    %794 = vector.broadcast %cst_225 : f32 to vector<8x32xf32>
    %795 = arith.subf %794, %786 : vector<8x32xf32>
    %796 = arith.mulf %795, %793 : vector<8x32xf32>
    %797 = arith.mulf %786, %744 : vector<8x32xf32>
    %798 = arith.addf %796, %797 : vector<8x32xf32>
    %c13_226 = arith.constant 13 : index
    %c0_227 = arith.constant 0 : index
    %c0_228 = arith.constant 0 : index
    %799 = vector.load %arg3[%c13_226, %c0_227, %c0_228] : memref<24x8x32xf32, #tpu.memory_space<vmem>>, vector<1x8x32xf32>
    %800 = vector.shape_cast %799 : vector<1x8x32xf32> to vector<8x32xf32>
    %801 = vector.shape_cast %798 : vector<8x32xf32> to vector<1x8x32xf32>
    tpu.vector_store %arg3[%c13_226, %c0_227, %c0_228], %801 {strides = array<i32>} : memref<24x8x32xf32, #tpu.memory_space<vmem>>, vector<1x8x32xf32>,
    %c15 = arith.constant 15 : index
    %c0_229 = arith.constant 0 : index
    %c0_230 = arith.constant 0 : index
    %802 = vector.load %arg0[%c15, %c0_229, %c0_230] : memref<24x8x96xf32, #tpu.memory_space<vmem>>, vector<1x8x96xf32>
    %803 = vector.shape_cast %802 : vector<1x8x96xf32> to vector<8x96xf32>
    %cst_231 = arith.constant dense<0.000000e+00> : vector<8x128xf32>
    %804 = tpu.matmul %773, %0, %cst_231 {dimension_numbers = #tpu.dot_dimension_numbers<[1], [0], [0], [1], [0, 0, 1, 1], [], []>} : vector<8x32xf32>, vector<32x128xf32>, vector<8x128xf32> -> vector<8x128xf32>
    %805 = vector.extract_strided_slice %803 {offsets = [0, 0], sizes = [8, 64], strides = [1, 1]} : vector<8x96xf32> to vector<8x64xf32>
    %806 = vector.extract_strided_slice %804 {offsets = [0, 0], sizes = [8, 64], strides = [1, 1]} : vector<8x128xf32> to vector<8x64xf32>
    %807 = arith.addf %805, %806 : vector<8x64xf32>
    %cst_232 = arith.constant 5.000000e-01 : f32
    %808 = vector.broadcast %cst_232 : f32 to vector<8x64xf32>
    %809 = arith.mulf %808, %807 : vector<8x64xf32>
    %810 = math.tanh %809 : vector<8x64xf32>
    %cst_233 = arith.constant 5.000000e-01 : f32
    %811 = vector.broadcast %cst_233 : f32 to vector<8x64xf32>
    %812 = arith.mulf %811, %810 : vector<8x64xf32>
    %cst_234 = arith.constant 5.000000e-01 : f32
    %813 = vector.broadcast %cst_234 : f32 to vector<8x64xf32>
    %814 = arith.addf %812, %813 : vector<8x64xf32>
    %815 = vector.extract_strided_slice %814 {offsets = [0, 0], sizes = [8, 32], strides = [1, 1]} : vector<8x64xf32> to vector<8x32xf32>
    %816 = vector.extract_strided_slice %814 {offsets = [0, 32], sizes = [8, 32], strides = [1, 1]} : vector<8x64xf32> to vector<8x32xf32>
    %817 = vector.extract_strided_slice %803 {offsets = [0, 64], sizes = [8, 32], strides = [1, 1]} : vector<8x96xf32> to vector<8x32xf32>
    %818 = vector.extract_strided_slice %804 {offsets = [0, 64], sizes = [8, 32], strides = [1, 1]} : vector<8x128xf32> to vector<8x32xf32>
    %819 = arith.addf %818, %4 : vector<8x32xf32>
    %820 = arith.mulf %815, %819 : vector<8x32xf32>
    %821 = arith.addf %817, %820 : vector<8x32xf32>
    %822 = math.tanh %821 : vector<8x32xf32>
    %cst_235 = arith.constant 1.000000e+00 : f32
    %823 = vector.broadcast %cst_235 : f32 to vector<8x32xf32>
    %824 = arith.subf %823, %816 : vector<8x32xf32>
    %825 = arith.mulf %824, %822 : vector<8x32xf32>
    %826 = arith.mulf %816, %773 : vector<8x32xf32>
    %827 = arith.addf %825, %826 : vector<8x32xf32>
    %828 = tpu.concatenate %773, %798 in 1 : vector<8x32xf32>, vector<8x32xf32> -> vector<8x64xf32>
    %cst_236 = arith.constant dense<0.000000e+00> : vector<8x128xf32>
    %829 = tpu.matmul %828, %15, %cst_236 {dimension_numbers = #tpu.dot_dimension_numbers<[1], [0], [0], [1], [0, 0, 1, 1], [], []>} : vector<8x64xf32>, vector<64x128xf32>, vector<8x128xf32> -> vector<8x128xf32>
    %830 = vector.extract_strided_slice %829 {offsets = [0, 0], sizes = [8, 64], strides = [1, 1]} : vector<8x128xf32> to vector<8x64xf32>
    %831 = arith.addf %830, %8 : vector<8x64xf32>
    %cst_237 = arith.constant 5.000000e-01 : f32
    %832 = vector.broadcast %cst_237 : f32 to vector<8x64xf32>
    %833 = arith.mulf %832, %831 : vector<8x64xf32>
    %834 = math.tanh %833 : vector<8x64xf32>
    %cst_238 = arith.constant 5.000000e-01 : f32
    %835 = vector.broadcast %cst_238 : f32 to vector<8x64xf32>
    %836 = arith.mulf %835, %834 : vector<8x64xf32>
    %cst_239 = arith.constant 5.000000e-01 : f32
    %837 = vector.broadcast %cst_239 : f32 to vector<8x64xf32>
    %838 = arith.addf %836, %837 : vector<8x64xf32>
    %839 = vector.extract_strided_slice %838 {offsets = [0, 0], sizes = [8, 32], strides = [1, 1]} : vector<8x64xf32> to vector<8x32xf32>
    %840 = vector.extract_strided_slice %838 {offsets = [0, 32], sizes = [8, 32], strides = [1, 1]} : vector<8x64xf32> to vector<8x32xf32>
    %841 = vector.extract_strided_slice %829 {offsets = [0, 64], sizes = [8, 32], strides = [1, 1]} : vector<8x128xf32> to vector<8x32xf32>
    %842 = arith.addf %841, %11 : vector<8x32xf32>
    %843 = vector.extract_strided_slice %829 {offsets = [0, 96], sizes = [8, 32], strides = [1, 1]} : vector<8x128xf32> to vector<8x32xf32>
    %844 = arith.addf %843, %14 : vector<8x32xf32>
    %845 = arith.mulf %839, %844 : vector<8x32xf32>
    %846 = arith.addf %842, %845 : vector<8x32xf32>
    %847 = math.tanh %846 : vector<8x32xf32>
    %cst_240 = arith.constant 1.000000e+00 : f32
    %848 = vector.broadcast %cst_240 : f32 to vector<8x32xf32>
    %849 = arith.subf %848, %840 : vector<8x32xf32>
    %850 = arith.mulf %849, %847 : vector<8x32xf32>
    %851 = arith.mulf %840, %798 : vector<8x32xf32>
    %852 = arith.addf %850, %851 : vector<8x32xf32>
    %c14_241 = arith.constant 14 : index
    %c0_242 = arith.constant 0 : index
    %c0_243 = arith.constant 0 : index
    %853 = vector.load %arg3[%c14_241, %c0_242, %c0_243] : memref<24x8x32xf32, #tpu.memory_space<vmem>>, vector<1x8x32xf32>
    %854 = vector.shape_cast %853 : vector<1x8x32xf32> to vector<8x32xf32>
    %855 = vector.shape_cast %852 : vector<8x32xf32> to vector<1x8x32xf32>
    tpu.vector_store %arg3[%c14_241, %c0_242, %c0_243], %855 {strides = array<i32>} : memref<24x8x32xf32, #tpu.memory_space<vmem>>, vector<1x8x32xf32>,
    %c16 = arith.constant 16 : index
    %c0_244 = arith.constant 0 : index
    %c0_245 = arith.constant 0 : index
    %856 = vector.load %arg0[%c16, %c0_244, %c0_245] : memref<24x8x96xf32, #tpu.memory_space<vmem>>, vector<1x8x96xf32>
    %857 = vector.shape_cast %856 : vector<1x8x96xf32> to vector<8x96xf32>
    %cst_246 = arith.constant dense<0.000000e+00> : vector<8x128xf32>
    %858 = tpu.matmul %827, %0, %cst_246 {dimension_numbers = #tpu.dot_dimension_numbers<[1], [0], [0], [1], [0, 0, 1, 1], [], []>} : vector<8x32xf32>, vector<32x128xf32>, vector<8x128xf32> -> vector<8x128xf32>
    %859 = vector.extract_strided_slice %857 {offsets = [0, 0], sizes = [8, 64], strides = [1, 1]} : vector<8x96xf32> to vector<8x64xf32>
    %860 = vector.extract_strided_slice %858 {offsets = [0, 0], sizes = [8, 64], strides = [1, 1]} : vector<8x128xf32> to vector<8x64xf32>
    %861 = arith.addf %859, %860 : vector<8x64xf32>
    %cst_247 = arith.constant 5.000000e-01 : f32
    %862 = vector.broadcast %cst_247 : f32 to vector<8x64xf32>
    %863 = arith.mulf %862, %861 : vector<8x64xf32>
    %864 = math.tanh %863 : vector<8x64xf32>
    %cst_248 = arith.constant 5.000000e-01 : f32
    %865 = vector.broadcast %cst_248 : f32 to vector<8x64xf32>
    %866 = arith.mulf %865, %864 : vector<8x64xf32>
    %cst_249 = arith.constant 5.000000e-01 : f32
    %867 = vector.broadcast %cst_249 : f32 to vector<8x64xf32>
    %868 = arith.addf %866, %867 : vector<8x64xf32>
    %869 = vector.extract_strided_slice %868 {offsets = [0, 0], sizes = [8, 32], strides = [1, 1]} : vector<8x64xf32> to vector<8x32xf32>
    %870 = vector.extract_strided_slice %868 {offsets = [0, 32], sizes = [8, 32], strides = [1, 1]} : vector<8x64xf32> to vector<8x32xf32>
    %871 = vector.extract_strided_slice %857 {offsets = [0, 64], sizes = [8, 32], strides = [1, 1]} : vector<8x96xf32> to vector<8x32xf32>
    %872 = vector.extract_strided_slice %858 {offsets = [0, 64], sizes = [8, 32], strides = [1, 1]} : vector<8x128xf32> to vector<8x32xf32>
    %873 = arith.addf %872, %4 : vector<8x32xf32>
    %874 = arith.mulf %869, %873 : vector<8x32xf32>
    %875 = arith.addf %871, %874 : vector<8x32xf32>
    %876 = math.tanh %875 : vector<8x32xf32>
    %cst_250 = arith.constant 1.000000e+00 : f32
    %877 = vector.broadcast %cst_250 : f32 to vector<8x32xf32>
    %878 = arith.subf %877, %870 : vector<8x32xf32>
    %879 = arith.mulf %878, %876 : vector<8x32xf32>
    %880 = arith.mulf %870, %827 : vector<8x32xf32>
    %881 = arith.addf %879, %880 : vector<8x32xf32>
    %882 = tpu.concatenate %827, %852 in 1 : vector<8x32xf32>, vector<8x32xf32> -> vector<8x64xf32>
    %cst_251 = arith.constant dense<0.000000e+00> : vector<8x128xf32>
    %883 = tpu.matmul %882, %15, %cst_251 {dimension_numbers = #tpu.dot_dimension_numbers<[1], [0], [0], [1], [0, 0, 1, 1], [], []>} : vector<8x64xf32>, vector<64x128xf32>, vector<8x128xf32> -> vector<8x128xf32>
    %884 = vector.extract_strided_slice %883 {offsets = [0, 0], sizes = [8, 64], strides = [1, 1]} : vector<8x128xf32> to vector<8x64xf32>
    %885 = arith.addf %884, %8 : vector<8x64xf32>
    %cst_252 = arith.constant 5.000000e-01 : f32
    %886 = vector.broadcast %cst_252 : f32 to vector<8x64xf32>
    %887 = arith.mulf %886, %885 : vector<8x64xf32>
    %888 = math.tanh %887 : vector<8x64xf32>
    %cst_253 = arith.constant 5.000000e-01 : f32
    %889 = vector.broadcast %cst_253 : f32 to vector<8x64xf32>
    %890 = arith.mulf %889, %888 : vector<8x64xf32>
    %cst_254 = arith.constant 5.000000e-01 : f32
    %891 = vector.broadcast %cst_254 : f32 to vector<8x64xf32>
    %892 = arith.addf %890, %891 : vector<8x64xf32>
    %893 = vector.extract_strided_slice %892 {offsets = [0, 0], sizes = [8, 32], strides = [1, 1]} : vector<8x64xf32> to vector<8x32xf32>
    %894 = vector.extract_strided_slice %892 {offsets = [0, 32], sizes = [8, 32], strides = [1, 1]} : vector<8x64xf32> to vector<8x32xf32>
    %895 = vector.extract_strided_slice %883 {offsets = [0, 64], sizes = [8, 32], strides = [1, 1]} : vector<8x128xf32> to vector<8x32xf32>
    %896 = arith.addf %895, %11 : vector<8x32xf32>
    %897 = vector.extract_strided_slice %883 {offsets = [0, 96], sizes = [8, 32], strides = [1, 1]} : vector<8x128xf32> to vector<8x32xf32>
    %898 = arith.addf %897, %14 : vector<8x32xf32>
    %899 = arith.mulf %893, %898 : vector<8x32xf32>
    %900 = arith.addf %896, %899 : vector<8x32xf32>
    %901 = math.tanh %900 : vector<8x32xf32>
    %cst_255 = arith.constant 1.000000e+00 : f32
    %902 = vector.broadcast %cst_255 : f32 to vector<8x32xf32>
    %903 = arith.subf %902, %894 : vector<8x32xf32>
    %904 = arith.mulf %903, %901 : vector<8x32xf32>
    %905 = arith.mulf %894, %852 : vector<8x32xf32>
    %906 = arith.addf %904, %905 : vector<8x32xf32>
    %c15_256 = arith.constant 15 : index
    %c0_257 = arith.constant 0 : index
    %c0_258 = arith.constant 0 : index
    %907 = vector.load %arg3[%c15_256, %c0_257, %c0_258] : memref<24x8x32xf32, #tpu.memory_space<vmem>>, vector<1x8x32xf32>
    %908 = vector.shape_cast %907 : vector<1x8x32xf32> to vector<8x32xf32>
    %909 = vector.shape_cast %906 : vector<8x32xf32> to vector<1x8x32xf32>
    tpu.vector_store %arg3[%c15_256, %c0_257, %c0_258], %909 {strides = array<i32>} : memref<24x8x32xf32, #tpu.memory_space<vmem>>, vector<1x8x32xf32>,
    %c17 = arith.constant 17 : index
    %c0_259 = arith.constant 0 : index
    %c0_260 = arith.constant 0 : index
    %910 = vector.load %arg0[%c17, %c0_259, %c0_260] : memref<24x8x96xf32, #tpu.memory_space<vmem>>, vector<1x8x96xf32>
    %911 = vector.shape_cast %910 : vector<1x8x96xf32> to vector<8x96xf32>
    %cst_261 = arith.constant dense<0.000000e+00> : vector<8x128xf32>
    %912 = tpu.matmul %881, %0, %cst_261 {dimension_numbers = #tpu.dot_dimension_numbers<[1], [0], [0], [1], [0, 0, 1, 1], [], []>} : vector<8x32xf32>, vector<32x128xf32>, vector<8x128xf32> -> vector<8x128xf32>
    %913 = vector.extract_strided_slice %911 {offsets = [0, 0], sizes = [8, 64], strides = [1, 1]} : vector<8x96xf32> to vector<8x64xf32>
    %914 = vector.extract_strided_slice %912 {offsets = [0, 0], sizes = [8, 64], strides = [1, 1]} : vector<8x128xf32> to vector<8x64xf32>
    %915 = arith.addf %913, %914 : vector<8x64xf32>
    %cst_262 = arith.constant 5.000000e-01 : f32
    %916 = vector.broadcast %cst_262 : f32 to vector<8x64xf32>
    %917 = arith.mulf %916, %915 : vector<8x64xf32>
    %918 = math.tanh %917 : vector<8x64xf32>
    %cst_263 = arith.constant 5.000000e-01 : f32
    %919 = vector.broadcast %cst_263 : f32 to vector<8x64xf32>
    %920 = arith.mulf %919, %918 : vector<8x64xf32>
    %cst_264 = arith.constant 5.000000e-01 : f32
    %921 = vector.broadcast %cst_264 : f32 to vector<8x64xf32>
    %922 = arith.addf %920, %921 : vector<8x64xf32>
    %923 = vector.extract_strided_slice %922 {offsets = [0, 0], sizes = [8, 32], strides = [1, 1]} : vector<8x64xf32> to vector<8x32xf32>
    %924 = vector.extract_strided_slice %922 {offsets = [0, 32], sizes = [8, 32], strides = [1, 1]} : vector<8x64xf32> to vector<8x32xf32>
    %925 = vector.extract_strided_slice %911 {offsets = [0, 64], sizes = [8, 32], strides = [1, 1]} : vector<8x96xf32> to vector<8x32xf32>
    %926 = vector.extract_strided_slice %912 {offsets = [0, 64], sizes = [8, 32], strides = [1, 1]} : vector<8x128xf32> to vector<8x32xf32>
    %927 = arith.addf %926, %4 : vector<8x32xf32>
    %928 = arith.mulf %923, %927 : vector<8x32xf32>
    %929 = arith.addf %925, %928 : vector<8x32xf32>
    %930 = math.tanh %929 : vector<8x32xf32>
    %cst_265 = arith.constant 1.000000e+00 : f32
    %931 = vector.broadcast %cst_265 : f32 to vector<8x32xf32>
    %932 = arith.subf %931, %924 : vector<8x32xf32>
    %933 = arith.mulf %932, %930 : vector<8x32xf32>
    %934 = arith.mulf %924, %881 : vector<8x32xf32>
    %935 = arith.addf %933, %934 : vector<8x32xf32>
    %936 = tpu.concatenate %881, %906 in 1 : vector<8x32xf32>, vector<8x32xf32> -> vector<8x64xf32>
    %cst_266 = arith.constant dense<0.000000e+00> : vector<8x128xf32>
    %937 = tpu.matmul %936, %15, %cst_266 {dimension_numbers = #tpu.dot_dimension_numbers<[1], [0], [0], [1], [0, 0, 1, 1], [], []>} : vector<8x64xf32>, vector<64x128xf32>, vector<8x128xf32> -> vector<8x128xf32>
    %938 = vector.extract_strided_slice %937 {offsets = [0, 0], sizes = [8, 64], strides = [1, 1]} : vector<8x128xf32> to vector<8x64xf32>
    %939 = arith.addf %938, %8 : vector<8x64xf32>
    %cst_267 = arith.constant 5.000000e-01 : f32
    %940 = vector.broadcast %cst_267 : f32 to vector<8x64xf32>
    %941 = arith.mulf %940, %939 : vector<8x64xf32>
    %942 = math.tanh %941 : vector<8x64xf32>
    %cst_268 = arith.constant 5.000000e-01 : f32
    %943 = vector.broadcast %cst_268 : f32 to vector<8x64xf32>
    %944 = arith.mulf %943, %942 : vector<8x64xf32>
    %cst_269 = arith.constant 5.000000e-01 : f32
    %945 = vector.broadcast %cst_269 : f32 to vector<8x64xf32>
    %946 = arith.addf %944, %945 : vector<8x64xf32>
    %947 = vector.extract_strided_slice %946 {offsets = [0, 0], sizes = [8, 32], strides = [1, 1]} : vector<8x64xf32> to vector<8x32xf32>
    %948 = vector.extract_strided_slice %946 {offsets = [0, 32], sizes = [8, 32], strides = [1, 1]} : vector<8x64xf32> to vector<8x32xf32>
    %949 = vector.extract_strided_slice %937 {offsets = [0, 64], sizes = [8, 32], strides = [1, 1]} : vector<8x128xf32> to vector<8x32xf32>
    %950 = arith.addf %949, %11 : vector<8x32xf32>
    %951 = vector.extract_strided_slice %937 {offsets = [0, 96], sizes = [8, 32], strides = [1, 1]} : vector<8x128xf32> to vector<8x32xf32>
    %952 = arith.addf %951, %14 : vector<8x32xf32>
    %953 = arith.mulf %947, %952 : vector<8x32xf32>
    %954 = arith.addf %950, %953 : vector<8x32xf32>
    %955 = math.tanh %954 : vector<8x32xf32>
    %cst_270 = arith.constant 1.000000e+00 : f32
    %956 = vector.broadcast %cst_270 : f32 to vector<8x32xf32>
    %957 = arith.subf %956, %948 : vector<8x32xf32>
    %958 = arith.mulf %957, %955 : vector<8x32xf32>
    %959 = arith.mulf %948, %906 : vector<8x32xf32>
    %960 = arith.addf %958, %959 : vector<8x32xf32>
    %c16_271 = arith.constant 16 : index
    %c0_272 = arith.constant 0 : index
    %c0_273 = arith.constant 0 : index
    %961 = vector.load %arg3[%c16_271, %c0_272, %c0_273] : memref<24x8x32xf32, #tpu.memory_space<vmem>>, vector<1x8x32xf32>
    %962 = vector.shape_cast %961 : vector<1x8x32xf32> to vector<8x32xf32>
    %963 = vector.shape_cast %960 : vector<8x32xf32> to vector<1x8x32xf32>
    tpu.vector_store %arg3[%c16_271, %c0_272, %c0_273], %963 {strides = array<i32>} : memref<24x8x32xf32, #tpu.memory_space<vmem>>, vector<1x8x32xf32>,
    %c18 = arith.constant 18 : index
    %c0_274 = arith.constant 0 : index
    %c0_275 = arith.constant 0 : index
    %964 = vector.load %arg0[%c18, %c0_274, %c0_275] : memref<24x8x96xf32, #tpu.memory_space<vmem>>, vector<1x8x96xf32>
    %965 = vector.shape_cast %964 : vector<1x8x96xf32> to vector<8x96xf32>
    %cst_276 = arith.constant dense<0.000000e+00> : vector<8x128xf32>
    %966 = tpu.matmul %935, %0, %cst_276 {dimension_numbers = #tpu.dot_dimension_numbers<[1], [0], [0], [1], [0, 0, 1, 1], [], []>} : vector<8x32xf32>, vector<32x128xf32>, vector<8x128xf32> -> vector<8x128xf32>
    %967 = vector.extract_strided_slice %965 {offsets = [0, 0], sizes = [8, 64], strides = [1, 1]} : vector<8x96xf32> to vector<8x64xf32>
    %968 = vector.extract_strided_slice %966 {offsets = [0, 0], sizes = [8, 64], strides = [1, 1]} : vector<8x128xf32> to vector<8x64xf32>
    %969 = arith.addf %967, %968 : vector<8x64xf32>
    %cst_277 = arith.constant 5.000000e-01 : f32
    %970 = vector.broadcast %cst_277 : f32 to vector<8x64xf32>
    %971 = arith.mulf %970, %969 : vector<8x64xf32>
    %972 = math.tanh %971 : vector<8x64xf32>
    %cst_278 = arith.constant 5.000000e-01 : f32
    %973 = vector.broadcast %cst_278 : f32 to vector<8x64xf32>
    %974 = arith.mulf %973, %972 : vector<8x64xf32>
    %cst_279 = arith.constant 5.000000e-01 : f32
    %975 = vector.broadcast %cst_279 : f32 to vector<8x64xf32>
    %976 = arith.addf %974, %975 : vector<8x64xf32>
    %977 = vector.extract_strided_slice %976 {offsets = [0, 0], sizes = [8, 32], strides = [1, 1]} : vector<8x64xf32> to vector<8x32xf32>
    %978 = vector.extract_strided_slice %976 {offsets = [0, 32], sizes = [8, 32], strides = [1, 1]} : vector<8x64xf32> to vector<8x32xf32>
    %979 = vector.extract_strided_slice %965 {offsets = [0, 64], sizes = [8, 32], strides = [1, 1]} : vector<8x96xf32> to vector<8x32xf32>
    %980 = vector.extract_strided_slice %966 {offsets = [0, 64], sizes = [8, 32], strides = [1, 1]} : vector<8x128xf32> to vector<8x32xf32>
    %981 = arith.addf %980, %4 : vector<8x32xf32>
    %982 = arith.mulf %977, %981 : vector<8x32xf32>
    %983 = arith.addf %979, %982 : vector<8x32xf32>
    %984 = math.tanh %983 : vector<8x32xf32>
    %cst_280 = arith.constant 1.000000e+00 : f32
    %985 = vector.broadcast %cst_280 : f32 to vector<8x32xf32>
    %986 = arith.subf %985, %978 : vector<8x32xf32>
    %987 = arith.mulf %986, %984 : vector<8x32xf32>
    %988 = arith.mulf %978, %935 : vector<8x32xf32>
    %989 = arith.addf %987, %988 : vector<8x32xf32>
    %990 = tpu.concatenate %935, %960 in 1 : vector<8x32xf32>, vector<8x32xf32> -> vector<8x64xf32>
    %cst_281 = arith.constant dense<0.000000e+00> : vector<8x128xf32>
    %991 = tpu.matmul %990, %15, %cst_281 {dimension_numbers = #tpu.dot_dimension_numbers<[1], [0], [0], [1], [0, 0, 1, 1], [], []>} : vector<8x64xf32>, vector<64x128xf32>, vector<8x128xf32> -> vector<8x128xf32>
    %992 = vector.extract_strided_slice %991 {offsets = [0, 0], sizes = [8, 64], strides = [1, 1]} : vector<8x128xf32> to vector<8x64xf32>
    %993 = arith.addf %992, %8 : vector<8x64xf32>
    %cst_282 = arith.constant 5.000000e-01 : f32
    %994 = vector.broadcast %cst_282 : f32 to vector<8x64xf32>
    %995 = arith.mulf %994, %993 : vector<8x64xf32>
    %996 = math.tanh %995 : vector<8x64xf32>
    %cst_283 = arith.constant 5.000000e-01 : f32
    %997 = vector.broadcast %cst_283 : f32 to vector<8x64xf32>
    %998 = arith.mulf %997, %996 : vector<8x64xf32>
    %cst_284 = arith.constant 5.000000e-01 : f32
    %999 = vector.broadcast %cst_284 : f32 to vector<8x64xf32>
    %1000 = arith.addf %998, %999 : vector<8x64xf32>
    %1001 = vector.extract_strided_slice %1000 {offsets = [0, 0], sizes = [8, 32], strides = [1, 1]} : vector<8x64xf32> to vector<8x32xf32>
    %1002 = vector.extract_strided_slice %1000 {offsets = [0, 32], sizes = [8, 32], strides = [1, 1]} : vector<8x64xf32> to vector<8x32xf32>
    %1003 = vector.extract_strided_slice %991 {offsets = [0, 64], sizes = [8, 32], strides = [1, 1]} : vector<8x128xf32> to vector<8x32xf32>
    %1004 = arith.addf %1003, %11 : vector<8x32xf32>
    %1005 = vector.extract_strided_slice %991 {offsets = [0, 96], sizes = [8, 32], strides = [1, 1]} : vector<8x128xf32> to vector<8x32xf32>
    %1006 = arith.addf %1005, %14 : vector<8x32xf32>
    %1007 = arith.mulf %1001, %1006 : vector<8x32xf32>
    %1008 = arith.addf %1004, %1007 : vector<8x32xf32>
    %1009 = math.tanh %1008 : vector<8x32xf32>
    %cst_285 = arith.constant 1.000000e+00 : f32
    %1010 = vector.broadcast %cst_285 : f32 to vector<8x32xf32>
    %1011 = arith.subf %1010, %1002 : vector<8x32xf32>
    %1012 = arith.mulf %1011, %1009 : vector<8x32xf32>
    %1013 = arith.mulf %1002, %960 : vector<8x32xf32>
    %1014 = arith.addf %1012, %1013 : vector<8x32xf32>
    %c17_286 = arith.constant 17 : index
    %c0_287 = arith.constant 0 : index
    %c0_288 = arith.constant 0 : index
    %1015 = vector.load %arg3[%c17_286, %c0_287, %c0_288] : memref<24x8x32xf32, #tpu.memory_space<vmem>>, vector<1x8x32xf32>
    %1016 = vector.shape_cast %1015 : vector<1x8x32xf32> to vector<8x32xf32>
    %1017 = vector.shape_cast %1014 : vector<8x32xf32> to vector<1x8x32xf32>
    tpu.vector_store %arg3[%c17_286, %c0_287, %c0_288], %1017 {strides = array<i32>} : memref<24x8x32xf32, #tpu.memory_space<vmem>>, vector<1x8x32xf32>,
    %c19 = arith.constant 19 : index
    %c0_289 = arith.constant 0 : index
    %c0_290 = arith.constant 0 : index
    %1018 = vector.load %arg0[%c19, %c0_289, %c0_290] : memref<24x8x96xf32, #tpu.memory_space<vmem>>, vector<1x8x96xf32>
    %1019 = vector.shape_cast %1018 : vector<1x8x96xf32> to vector<8x96xf32>
    %cst_291 = arith.constant dense<0.000000e+00> : vector<8x128xf32>
    %1020 = tpu.matmul %989, %0, %cst_291 {dimension_numbers = #tpu.dot_dimension_numbers<[1], [0], [0], [1], [0, 0, 1, 1], [], []>} : vector<8x32xf32>, vector<32x128xf32>, vector<8x128xf32> -> vector<8x128xf32>
    %1021 = vector.extract_strided_slice %1019 {offsets = [0, 0], sizes = [8, 64], strides = [1, 1]} : vector<8x96xf32> to vector<8x64xf32>
    %1022 = vector.extract_strided_slice %1020 {offsets = [0, 0], sizes = [8, 64], strides = [1, 1]} : vector<8x128xf32> to vector<8x64xf32>
    %1023 = arith.addf %1021, %1022 : vector<8x64xf32>
    %cst_292 = arith.constant 5.000000e-01 : f32
    %1024 = vector.broadcast %cst_292 : f32 to vector<8x64xf32>
    %1025 = arith.mulf %1024, %1023 : vector<8x64xf32>
    %1026 = math.tanh %1025 : vector<8x64xf32>
    %cst_293 = arith.constant 5.000000e-01 : f32
    %1027 = vector.broadcast %cst_293 : f32 to vector<8x64xf32>
    %1028 = arith.mulf %1027, %1026 : vector<8x64xf32>
    %cst_294 = arith.constant 5.000000e-01 : f32
    %1029 = vector.broadcast %cst_294 : f32 to vector<8x64xf32>
    %1030 = arith.addf %1028, %1029 : vector<8x64xf32>
    %1031 = vector.extract_strided_slice %1030 {offsets = [0, 0], sizes = [8, 32], strides = [1, 1]} : vector<8x64xf32> to vector<8x32xf32>
    %1032 = vector.extract_strided_slice %1030 {offsets = [0, 32], sizes = [8, 32], strides = [1, 1]} : vector<8x64xf32> to vector<8x32xf32>
    %1033 = vector.extract_strided_slice %1019 {offsets = [0, 64], sizes = [8, 32], strides = [1, 1]} : vector<8x96xf32> to vector<8x32xf32>
    %1034 = vector.extract_strided_slice %1020 {offsets = [0, 64], sizes = [8, 32], strides = [1, 1]} : vector<8x128xf32> to vector<8x32xf32>
    %1035 = arith.addf %1034, %4 : vector<8x32xf32>
    %1036 = arith.mulf %1031, %1035 : vector<8x32xf32>
    %1037 = arith.addf %1033, %1036 : vector<8x32xf32>
    %1038 = math.tanh %1037 : vector<8x32xf32>
    %cst_295 = arith.constant 1.000000e+00 : f32
    %1039 = vector.broadcast %cst_295 : f32 to vector<8x32xf32>
    %1040 = arith.subf %1039, %1032 : vector<8x32xf32>
    %1041 = arith.mulf %1040, %1038 : vector<8x32xf32>
    %1042 = arith.mulf %1032, %989 : vector<8x32xf32>
    %1043 = arith.addf %1041, %1042 : vector<8x32xf32>
    %1044 = tpu.concatenate %989, %1014 in 1 : vector<8x32xf32>, vector<8x32xf32> -> vector<8x64xf32>
    %cst_296 = arith.constant dense<0.000000e+00> : vector<8x128xf32>
    %1045 = tpu.matmul %1044, %15, %cst_296 {dimension_numbers = #tpu.dot_dimension_numbers<[1], [0], [0], [1], [0, 0, 1, 1], [], []>} : vector<8x64xf32>, vector<64x128xf32>, vector<8x128xf32> -> vector<8x128xf32>
    %1046 = vector.extract_strided_slice %1045 {offsets = [0, 0], sizes = [8, 64], strides = [1, 1]} : vector<8x128xf32> to vector<8x64xf32>
    %1047 = arith.addf %1046, %8 : vector<8x64xf32>
    %cst_297 = arith.constant 5.000000e-01 : f32
    %1048 = vector.broadcast %cst_297 : f32 to vector<8x64xf32>
    %1049 = arith.mulf %1048, %1047 : vector<8x64xf32>
    %1050 = math.tanh %1049 : vector<8x64xf32>
    %cst_298 = arith.constant 5.000000e-01 : f32
    %1051 = vector.broadcast %cst_298 : f32 to vector<8x64xf32>
    %1052 = arith.mulf %1051, %1050 : vector<8x64xf32>
    %cst_299 = arith.constant 5.000000e-01 : f32
    %1053 = vector.broadcast %cst_299 : f32 to vector<8x64xf32>
    %1054 = arith.addf %1052, %1053 : vector<8x64xf32>
    %1055 = vector.extract_strided_slice %1054 {offsets = [0, 0], sizes = [8, 32], strides = [1, 1]} : vector<8x64xf32> to vector<8x32xf32>
    %1056 = vector.extract_strided_slice %1054 {offsets = [0, 32], sizes = [8, 32], strides = [1, 1]} : vector<8x64xf32> to vector<8x32xf32>
    %1057 = vector.extract_strided_slice %1045 {offsets = [0, 64], sizes = [8, 32], strides = [1, 1]} : vector<8x128xf32> to vector<8x32xf32>
    %1058 = arith.addf %1057, %11 : vector<8x32xf32>
    %1059 = vector.extract_strided_slice %1045 {offsets = [0, 96], sizes = [8, 32], strides = [1, 1]} : vector<8x128xf32> to vector<8x32xf32>
    %1060 = arith.addf %1059, %14 : vector<8x32xf32>
    %1061 = arith.mulf %1055, %1060 : vector<8x32xf32>
    %1062 = arith.addf %1058, %1061 : vector<8x32xf32>
    %1063 = math.tanh %1062 : vector<8x32xf32>
    %cst_300 = arith.constant 1.000000e+00 : f32
    %1064 = vector.broadcast %cst_300 : f32 to vector<8x32xf32>
    %1065 = arith.subf %1064, %1056 : vector<8x32xf32>
    %1066 = arith.mulf %1065, %1063 : vector<8x32xf32>
    %1067 = arith.mulf %1056, %1014 : vector<8x32xf32>
    %1068 = arith.addf %1066, %1067 : vector<8x32xf32>
    %c18_301 = arith.constant 18 : index
    %c0_302 = arith.constant 0 : index
    %c0_303 = arith.constant 0 : index
    %1069 = vector.load %arg3[%c18_301, %c0_302, %c0_303] : memref<24x8x32xf32, #tpu.memory_space<vmem>>, vector<1x8x32xf32>
    %1070 = vector.shape_cast %1069 : vector<1x8x32xf32> to vector<8x32xf32>
    %1071 = vector.shape_cast %1068 : vector<8x32xf32> to vector<1x8x32xf32>
    tpu.vector_store %arg3[%c18_301, %c0_302, %c0_303], %1071 {strides = array<i32>} : memref<24x8x32xf32, #tpu.memory_space<vmem>>, vector<1x8x32xf32>,
    %c20 = arith.constant 20 : index
    %c0_304 = arith.constant 0 : index
    %c0_305 = arith.constant 0 : index
    %1072 = vector.load %arg0[%c20, %c0_304, %c0_305] : memref<24x8x96xf32, #tpu.memory_space<vmem>>, vector<1x8x96xf32>
    %1073 = vector.shape_cast %1072 : vector<1x8x96xf32> to vector<8x96xf32>
    %cst_306 = arith.constant dense<0.000000e+00> : vector<8x128xf32>
    %1074 = tpu.matmul %1043, %0, %cst_306 {dimension_numbers = #tpu.dot_dimension_numbers<[1], [0], [0], [1], [0, 0, 1, 1], [], []>} : vector<8x32xf32>, vector<32x128xf32>, vector<8x128xf32> -> vector<8x128xf32>
    %1075 = vector.extract_strided_slice %1073 {offsets = [0, 0], sizes = [8, 64], strides = [1, 1]} : vector<8x96xf32> to vector<8x64xf32>
    %1076 = vector.extract_strided_slice %1074 {offsets = [0, 0], sizes = [8, 64], strides = [1, 1]} : vector<8x128xf32> to vector<8x64xf32>
    %1077 = arith.addf %1075, %1076 : vector<8x64xf32>
    %cst_307 = arith.constant 5.000000e-01 : f32
    %1078 = vector.broadcast %cst_307 : f32 to vector<8x64xf32>
    %1079 = arith.mulf %1078, %1077 : vector<8x64xf32>
    %1080 = math.tanh %1079 : vector<8x64xf32>
    %cst_308 = arith.constant 5.000000e-01 : f32
    %1081 = vector.broadcast %cst_308 : f32 to vector<8x64xf32>
    %1082 = arith.mulf %1081, %1080 : vector<8x64xf32>
    %cst_309 = arith.constant 5.000000e-01 : f32
    %1083 = vector.broadcast %cst_309 : f32 to vector<8x64xf32>
    %1084 = arith.addf %1082, %1083 : vector<8x64xf32>
    %1085 = vector.extract_strided_slice %1084 {offsets = [0, 0], sizes = [8, 32], strides = [1, 1]} : vector<8x64xf32> to vector<8x32xf32>
    %1086 = vector.extract_strided_slice %1084 {offsets = [0, 32], sizes = [8, 32], strides = [1, 1]} : vector<8x64xf32> to vector<8x32xf32>
    %1087 = vector.extract_strided_slice %1073 {offsets = [0, 64], sizes = [8, 32], strides = [1, 1]} : vector<8x96xf32> to vector<8x32xf32>
    %1088 = vector.extract_strided_slice %1074 {offsets = [0, 64], sizes = [8, 32], strides = [1, 1]} : vector<8x128xf32> to vector<8x32xf32>
    %1089 = arith.addf %1088, %4 : vector<8x32xf32>
    %1090 = arith.mulf %1085, %1089 : vector<8x32xf32>
    %1091 = arith.addf %1087, %1090 : vector<8x32xf32>
    %1092 = math.tanh %1091 : vector<8x32xf32>
    %cst_310 = arith.constant 1.000000e+00 : f32
    %1093 = vector.broadcast %cst_310 : f32 to vector<8x32xf32>
    %1094 = arith.subf %1093, %1086 : vector<8x32xf32>
    %1095 = arith.mulf %1094, %1092 : vector<8x32xf32>
    %1096 = arith.mulf %1086, %1043 : vector<8x32xf32>
    %1097 = arith.addf %1095, %1096 : vector<8x32xf32>
    %1098 = tpu.concatenate %1043, %1068 in 1 : vector<8x32xf32>, vector<8x32xf32> -> vector<8x64xf32>
    %cst_311 = arith.constant dense<0.000000e+00> : vector<8x128xf32>
    %1099 = tpu.matmul %1098, %15, %cst_311 {dimension_numbers = #tpu.dot_dimension_numbers<[1], [0], [0], [1], [0, 0, 1, 1], [], []>} : vector<8x64xf32>, vector<64x128xf32>, vector<8x128xf32> -> vector<8x128xf32>
    %1100 = vector.extract_strided_slice %1099 {offsets = [0, 0], sizes = [8, 64], strides = [1, 1]} : vector<8x128xf32> to vector<8x64xf32>
    %1101 = arith.addf %1100, %8 : vector<8x64xf32>
    %cst_312 = arith.constant 5.000000e-01 : f32
    %1102 = vector.broadcast %cst_312 : f32 to vector<8x64xf32>
    %1103 = arith.mulf %1102, %1101 : vector<8x64xf32>
    %1104 = math.tanh %1103 : vector<8x64xf32>
    %cst_313 = arith.constant 5.000000e-01 : f32
    %1105 = vector.broadcast %cst_313 : f32 to vector<8x64xf32>
    %1106 = arith.mulf %1105, %1104 : vector<8x64xf32>
    %cst_314 = arith.constant 5.000000e-01 : f32
    %1107 = vector.broadcast %cst_314 : f32 to vector<8x64xf32>
    %1108 = arith.addf %1106, %1107 : vector<8x64xf32>
    %1109 = vector.extract_strided_slice %1108 {offsets = [0, 0], sizes = [8, 32], strides = [1, 1]} : vector<8x64xf32> to vector<8x32xf32>
    %1110 = vector.extract_strided_slice %1108 {offsets = [0, 32], sizes = [8, 32], strides = [1, 1]} : vector<8x64xf32> to vector<8x32xf32>
    %1111 = vector.extract_strided_slice %1099 {offsets = [0, 64], sizes = [8, 32], strides = [1, 1]} : vector<8x128xf32> to vector<8x32xf32>
    %1112 = arith.addf %1111, %11 : vector<8x32xf32>
    %1113 = vector.extract_strided_slice %1099 {offsets = [0, 96], sizes = [8, 32], strides = [1, 1]} : vector<8x128xf32> to vector<8x32xf32>
    %1114 = arith.addf %1113, %14 : vector<8x32xf32>
    %1115 = arith.mulf %1109, %1114 : vector<8x32xf32>
    %1116 = arith.addf %1112, %1115 : vector<8x32xf32>
    %1117 = math.tanh %1116 : vector<8x32xf32>
    %cst_315 = arith.constant 1.000000e+00 : f32
    %1118 = vector.broadcast %cst_315 : f32 to vector<8x32xf32>
    %1119 = arith.subf %1118, %1110 : vector<8x32xf32>
    %1120 = arith.mulf %1119, %1117 : vector<8x32xf32>
    %1121 = arith.mulf %1110, %1068 : vector<8x32xf32>
    %1122 = arith.addf %1120, %1121 : vector<8x32xf32>
    %c19_316 = arith.constant 19 : index
    %c0_317 = arith.constant 0 : index
    %c0_318 = arith.constant 0 : index
    %1123 = vector.load %arg3[%c19_316, %c0_317, %c0_318] : memref<24x8x32xf32, #tpu.memory_space<vmem>>, vector<1x8x32xf32>
    %1124 = vector.shape_cast %1123 : vector<1x8x32xf32> to vector<8x32xf32>
    %1125 = vector.shape_cast %1122 : vector<8x32xf32> to vector<1x8x32xf32>
    tpu.vector_store %arg3[%c19_316, %c0_317, %c0_318], %1125 {strides = array<i32>} : memref<24x8x32xf32, #tpu.memory_space<vmem>>, vector<1x8x32xf32>,
    %c21 = arith.constant 21 : index
    %c0_319 = arith.constant 0 : index
    %c0_320 = arith.constant 0 : index
    %1126 = vector.load %arg0[%c21, %c0_319, %c0_320] : memref<24x8x96xf32, #tpu.memory_space<vmem>>, vector<1x8x96xf32>
    %1127 = vector.shape_cast %1126 : vector<1x8x96xf32> to vector<8x96xf32>
    %cst_321 = arith.constant dense<0.000000e+00> : vector<8x128xf32>
    %1128 = tpu.matmul %1097, %0, %cst_321 {dimension_numbers = #tpu.dot_dimension_numbers<[1], [0], [0], [1], [0, 0, 1, 1], [], []>} : vector<8x32xf32>, vector<32x128xf32>, vector<8x128xf32> -> vector<8x128xf32>
    %1129 = vector.extract_strided_slice %1127 {offsets = [0, 0], sizes = [8, 64], strides = [1, 1]} : vector<8x96xf32> to vector<8x64xf32>
    %1130 = vector.extract_strided_slice %1128 {offsets = [0, 0], sizes = [8, 64], strides = [1, 1]} : vector<8x128xf32> to vector<8x64xf32>
    %1131 = arith.addf %1129, %1130 : vector<8x64xf32>
    %cst_322 = arith.constant 5.000000e-01 : f32
    %1132 = vector.broadcast %cst_322 : f32 to vector<8x64xf32>
    %1133 = arith.mulf %1132, %1131 : vector<8x64xf32>
    %1134 = math.tanh %1133 : vector<8x64xf32>
    %cst_323 = arith.constant 5.000000e-01 : f32
    %1135 = vector.broadcast %cst_323 : f32 to vector<8x64xf32>
    %1136 = arith.mulf %1135, %1134 : vector<8x64xf32>
    %cst_324 = arith.constant 5.000000e-01 : f32
    %1137 = vector.broadcast %cst_324 : f32 to vector<8x64xf32>
    %1138 = arith.addf %1136, %1137 : vector<8x64xf32>
    %1139 = vector.extract_strided_slice %1138 {offsets = [0, 0], sizes = [8, 32], strides = [1, 1]} : vector<8x64xf32> to vector<8x32xf32>
    %1140 = vector.extract_strided_slice %1138 {offsets = [0, 32], sizes = [8, 32], strides = [1, 1]} : vector<8x64xf32> to vector<8x32xf32>
    %1141 = vector.extract_strided_slice %1127 {offsets = [0, 64], sizes = [8, 32], strides = [1, 1]} : vector<8x96xf32> to vector<8x32xf32>
    %1142 = vector.extract_strided_slice %1128 {offsets = [0, 64], sizes = [8, 32], strides = [1, 1]} : vector<8x128xf32> to vector<8x32xf32>
    %1143 = arith.addf %1142, %4 : vector<8x32xf32>
    %1144 = arith.mulf %1139, %1143 : vector<8x32xf32>
    %1145 = arith.addf %1141, %1144 : vector<8x32xf32>
    %1146 = math.tanh %1145 : vector<8x32xf32>
    %cst_325 = arith.constant 1.000000e+00 : f32
    %1147 = vector.broadcast %cst_325 : f32 to vector<8x32xf32>
    %1148 = arith.subf %1147, %1140 : vector<8x32xf32>
    %1149 = arith.mulf %1148, %1146 : vector<8x32xf32>
    %1150 = arith.mulf %1140, %1097 : vector<8x32xf32>
    %1151 = arith.addf %1149, %1150 : vector<8x32xf32>
    %1152 = tpu.concatenate %1097, %1122 in 1 : vector<8x32xf32>, vector<8x32xf32> -> vector<8x64xf32>
    %cst_326 = arith.constant dense<0.000000e+00> : vector<8x128xf32>
    %1153 = tpu.matmul %1152, %15, %cst_326 {dimension_numbers = #tpu.dot_dimension_numbers<[1], [0], [0], [1], [0, 0, 1, 1], [], []>} : vector<8x64xf32>, vector<64x128xf32>, vector<8x128xf32> -> vector<8x128xf32>
    %1154 = vector.extract_strided_slice %1153 {offsets = [0, 0], sizes = [8, 64], strides = [1, 1]} : vector<8x128xf32> to vector<8x64xf32>
    %1155 = arith.addf %1154, %8 : vector<8x64xf32>
    %cst_327 = arith.constant 5.000000e-01 : f32
    %1156 = vector.broadcast %cst_327 : f32 to vector<8x64xf32>
    %1157 = arith.mulf %1156, %1155 : vector<8x64xf32>
    %1158 = math.tanh %1157 : vector<8x64xf32>
    %cst_328 = arith.constant 5.000000e-01 : f32
    %1159 = vector.broadcast %cst_328 : f32 to vector<8x64xf32>
    %1160 = arith.mulf %1159, %1158 : vector<8x64xf32>
    %cst_329 = arith.constant 5.000000e-01 : f32
    %1161 = vector.broadcast %cst_329 : f32 to vector<8x64xf32>
    %1162 = arith.addf %1160, %1161 : vector<8x64xf32>
    %1163 = vector.extract_strided_slice %1162 {offsets = [0, 0], sizes = [8, 32], strides = [1, 1]} : vector<8x64xf32> to vector<8x32xf32>
    %1164 = vector.extract_strided_slice %1162 {offsets = [0, 32], sizes = [8, 32], strides = [1, 1]} : vector<8x64xf32> to vector<8x32xf32>
    %1165 = vector.extract_strided_slice %1153 {offsets = [0, 64], sizes = [8, 32], strides = [1, 1]} : vector<8x128xf32> to vector<8x32xf32>
    %1166 = arith.addf %1165, %11 : vector<8x32xf32>
    %1167 = vector.extract_strided_slice %1153 {offsets = [0, 96], sizes = [8, 32], strides = [1, 1]} : vector<8x128xf32> to vector<8x32xf32>
    %1168 = arith.addf %1167, %14 : vector<8x32xf32>
    %1169 = arith.mulf %1163, %1168 : vector<8x32xf32>
    %1170 = arith.addf %1166, %1169 : vector<8x32xf32>
    %1171 = math.tanh %1170 : vector<8x32xf32>
    %cst_330 = arith.constant 1.000000e+00 : f32
    %1172 = vector.broadcast %cst_330 : f32 to vector<8x32xf32>
    %1173 = arith.subf %1172, %1164 : vector<8x32xf32>
    %1174 = arith.mulf %1173, %1171 : vector<8x32xf32>
    %1175 = arith.mulf %1164, %1122 : vector<8x32xf32>
    %1176 = arith.addf %1174, %1175 : vector<8x32xf32>
    %c20_331 = arith.constant 20 : index
    %c0_332 = arith.constant 0 : index
    %c0_333 = arith.constant 0 : index
    %1177 = vector.load %arg3[%c20_331, %c0_332, %c0_333] : memref<24x8x32xf32, #tpu.memory_space<vmem>>, vector<1x8x32xf32>
    %1178 = vector.shape_cast %1177 : vector<1x8x32xf32> to vector<8x32xf32>
    %1179 = vector.shape_cast %1176 : vector<8x32xf32> to vector<1x8x32xf32>
    tpu.vector_store %arg3[%c20_331, %c0_332, %c0_333], %1179 {strides = array<i32>} : memref<24x8x32xf32, #tpu.memory_space<vmem>>, vector<1x8x32xf32>,
    %c22 = arith.constant 22 : index
    %c0_334 = arith.constant 0 : index
    %c0_335 = arith.constant 0 : index
    %1180 = vector.load %arg0[%c22, %c0_334, %c0_335] : memref<24x8x96xf32, #tpu.memory_space<vmem>>, vector<1x8x96xf32>
    %1181 = vector.shape_cast %1180 : vector<1x8x96xf32> to vector<8x96xf32>
    %cst_336 = arith.constant dense<0.000000e+00> : vector<8x128xf32>
    %1182 = tpu.matmul %1151, %0, %cst_336 {dimension_numbers = #tpu.dot_dimension_numbers<[1], [0], [0], [1], [0, 0, 1, 1], [], []>} : vector<8x32xf32>, vector<32x128xf32>, vector<8x128xf32> -> vector<8x128xf32>
    %1183 = vector.extract_strided_slice %1181 {offsets = [0, 0], sizes = [8, 64], strides = [1, 1]} : vector<8x96xf32> to vector<8x64xf32>
    %1184 = vector.extract_strided_slice %1182 {offsets = [0, 0], sizes = [8, 64], strides = [1, 1]} : vector<8x128xf32> to vector<8x64xf32>
    %1185 = arith.addf %1183, %1184 : vector<8x64xf32>
    %cst_337 = arith.constant 5.000000e-01 : f32
    %1186 = vector.broadcast %cst_337 : f32 to vector<8x64xf32>
    %1187 = arith.mulf %1186, %1185 : vector<8x64xf32>
    %1188 = math.tanh %1187 : vector<8x64xf32>
    %cst_338 = arith.constant 5.000000e-01 : f32
    %1189 = vector.broadcast %cst_338 : f32 to vector<8x64xf32>
    %1190 = arith.mulf %1189, %1188 : vector<8x64xf32>
    %cst_339 = arith.constant 5.000000e-01 : f32
    %1191 = vector.broadcast %cst_339 : f32 to vector<8x64xf32>
    %1192 = arith.addf %1190, %1191 : vector<8x64xf32>
    %1193 = vector.extract_strided_slice %1192 {offsets = [0, 0], sizes = [8, 32], strides = [1, 1]} : vector<8x64xf32> to vector<8x32xf32>
    %1194 = vector.extract_strided_slice %1192 {offsets = [0, 32], sizes = [8, 32], strides = [1, 1]} : vector<8x64xf32> to vector<8x32xf32>
    %1195 = vector.extract_strided_slice %1181 {offsets = [0, 64], sizes = [8, 32], strides = [1, 1]} : vector<8x96xf32> to vector<8x32xf32>
    %1196 = vector.extract_strided_slice %1182 {offsets = [0, 64], sizes = [8, 32], strides = [1, 1]} : vector<8x128xf32> to vector<8x32xf32>
    %1197 = arith.addf %1196, %4 : vector<8x32xf32>
    %1198 = arith.mulf %1193, %1197 : vector<8x32xf32>
    %1199 = arith.addf %1195, %1198 : vector<8x32xf32>
    %1200 = math.tanh %1199 : vector<8x32xf32>
    %cst_340 = arith.constant 1.000000e+00 : f32
    %1201 = vector.broadcast %cst_340 : f32 to vector<8x32xf32>
    %1202 = arith.subf %1201, %1194 : vector<8x32xf32>
    %1203 = arith.mulf %1202, %1200 : vector<8x32xf32>
    %1204 = arith.mulf %1194, %1151 : vector<8x32xf32>
    %1205 = arith.addf %1203, %1204 : vector<8x32xf32>
    %1206 = tpu.concatenate %1151, %1176 in 1 : vector<8x32xf32>, vector<8x32xf32> -> vector<8x64xf32>
    %cst_341 = arith.constant dense<0.000000e+00> : vector<8x128xf32>
    %1207 = tpu.matmul %1206, %15, %cst_341 {dimension_numbers = #tpu.dot_dimension_numbers<[1], [0], [0], [1], [0, 0, 1, 1], [], []>} : vector<8x64xf32>, vector<64x128xf32>, vector<8x128xf32> -> vector<8x128xf32>
    %1208 = vector.extract_strided_slice %1207 {offsets = [0, 0], sizes = [8, 64], strides = [1, 1]} : vector<8x128xf32> to vector<8x64xf32>
    %1209 = arith.addf %1208, %8 : vector<8x64xf32>
    %cst_342 = arith.constant 5.000000e-01 : f32
    %1210 = vector.broadcast %cst_342 : f32 to vector<8x64xf32>
    %1211 = arith.mulf %1210, %1209 : vector<8x64xf32>
    %1212 = math.tanh %1211 : vector<8x64xf32>
    %cst_343 = arith.constant 5.000000e-01 : f32
    %1213 = vector.broadcast %cst_343 : f32 to vector<8x64xf32>
    %1214 = arith.mulf %1213, %1212 : vector<8x64xf32>
    %cst_344 = arith.constant 5.000000e-01 : f32
    %1215 = vector.broadcast %cst_344 : f32 to vector<8x64xf32>
    %1216 = arith.addf %1214, %1215 : vector<8x64xf32>
    %1217 = vector.extract_strided_slice %1216 {offsets = [0, 0], sizes = [8, 32], strides = [1, 1]} : vector<8x64xf32> to vector<8x32xf32>
    %1218 = vector.extract_strided_slice %1216 {offsets = [0, 32], sizes = [8, 32], strides = [1, 1]} : vector<8x64xf32> to vector<8x32xf32>
    %1219 = vector.extract_strided_slice %1207 {offsets = [0, 64], sizes = [8, 32], strides = [1, 1]} : vector<8x128xf32> to vector<8x32xf32>
    %1220 = arith.addf %1219, %11 : vector<8x32xf32>
    %1221 = vector.extract_strided_slice %1207 {offsets = [0, 96], sizes = [8, 32], strides = [1, 1]} : vector<8x128xf32> to vector<8x32xf32>
    %1222 = arith.addf %1221, %14 : vector<8x32xf32>
    %1223 = arith.mulf %1217, %1222 : vector<8x32xf32>
    %1224 = arith.addf %1220, %1223 : vector<8x32xf32>
    %1225 = math.tanh %1224 : vector<8x32xf32>
    %cst_345 = arith.constant 1.000000e+00 : f32
    %1226 = vector.broadcast %cst_345 : f32 to vector<8x32xf32>
    %1227 = arith.subf %1226, %1218 : vector<8x32xf32>
    %1228 = arith.mulf %1227, %1225 : vector<8x32xf32>
    %1229 = arith.mulf %1218, %1176 : vector<8x32xf32>
    %1230 = arith.addf %1228, %1229 : vector<8x32xf32>
    %c21_346 = arith.constant 21 : index
    %c0_347 = arith.constant 0 : index
    %c0_348 = arith.constant 0 : index
    %1231 = vector.load %arg3[%c21_346, %c0_347, %c0_348] : memref<24x8x32xf32, #tpu.memory_space<vmem>>, vector<1x8x32xf32>
    %1232 = vector.shape_cast %1231 : vector<1x8x32xf32> to vector<8x32xf32>
    %1233 = vector.shape_cast %1230 : vector<8x32xf32> to vector<1x8x32xf32>
    tpu.vector_store %arg3[%c21_346, %c0_347, %c0_348], %1233 {strides = array<i32>} : memref<24x8x32xf32, #tpu.memory_space<vmem>>, vector<1x8x32xf32>,
    %c23 = arith.constant 23 : index
    %c0_349 = arith.constant 0 : index
    %c0_350 = arith.constant 0 : index
    %1234 = vector.load %arg0[%c23, %c0_349, %c0_350] : memref<24x8x96xf32, #tpu.memory_space<vmem>>, vector<1x8x96xf32>
    %1235 = vector.shape_cast %1234 : vector<1x8x96xf32> to vector<8x96xf32>
    %cst_351 = arith.constant dense<0.000000e+00> : vector<8x128xf32>
    %1236 = tpu.matmul %1205, %0, %cst_351 {dimension_numbers = #tpu.dot_dimension_numbers<[1], [0], [0], [1], [0, 0, 1, 1], [], []>} : vector<8x32xf32>, vector<32x128xf32>, vector<8x128xf32> -> vector<8x128xf32>
    %1237 = vector.extract_strided_slice %1235 {offsets = [0, 0], sizes = [8, 64], strides = [1, 1]} : vector<8x96xf32> to vector<8x64xf32>
    %1238 = vector.extract_strided_slice %1236 {offsets = [0, 0], sizes = [8, 64], strides = [1, 1]} : vector<8x128xf32> to vector<8x64xf32>
    %1239 = arith.addf %1237, %1238 : vector<8x64xf32>
    %cst_352 = arith.constant 5.000000e-01 : f32
    %1240 = vector.broadcast %cst_352 : f32 to vector<8x64xf32>
    %1241 = arith.mulf %1240, %1239 : vector<8x64xf32>
    %1242 = math.tanh %1241 : vector<8x64xf32>
    %cst_353 = arith.constant 5.000000e-01 : f32
    %1243 = vector.broadcast %cst_353 : f32 to vector<8x64xf32>
    %1244 = arith.mulf %1243, %1242 : vector<8x64xf32>
    %cst_354 = arith.constant 5.000000e-01 : f32
    %1245 = vector.broadcast %cst_354 : f32 to vector<8x64xf32>
    %1246 = arith.addf %1244, %1245 : vector<8x64xf32>
    %1247 = vector.extract_strided_slice %1246 {offsets = [0, 0], sizes = [8, 32], strides = [1, 1]} : vector<8x64xf32> to vector<8x32xf32>
    %1248 = vector.extract_strided_slice %1246 {offsets = [0, 32], sizes = [8, 32], strides = [1, 1]} : vector<8x64xf32> to vector<8x32xf32>
    %1249 = vector.extract_strided_slice %1235 {offsets = [0, 64], sizes = [8, 32], strides = [1, 1]} : vector<8x96xf32> to vector<8x32xf32>
    %1250 = vector.extract_strided_slice %1236 {offsets = [0, 64], sizes = [8, 32], strides = [1, 1]} : vector<8x128xf32> to vector<8x32xf32>
    %1251 = arith.addf %1250, %4 : vector<8x32xf32>
    %1252 = arith.mulf %1247, %1251 : vector<8x32xf32>
    %1253 = arith.addf %1249, %1252 : vector<8x32xf32>
    %1254 = math.tanh %1253 : vector<8x32xf32>
    %cst_355 = arith.constant 1.000000e+00 : f32
    %1255 = vector.broadcast %cst_355 : f32 to vector<8x32xf32>
    %1256 = arith.subf %1255, %1248 : vector<8x32xf32>
    %1257 = arith.mulf %1256, %1254 : vector<8x32xf32>
    %1258 = arith.mulf %1248, %1205 : vector<8x32xf32>
    %1259 = arith.addf %1257, %1258 : vector<8x32xf32>
    %1260 = tpu.concatenate %1205, %1230 in 1 : vector<8x32xf32>, vector<8x32xf32> -> vector<8x64xf32>
    %cst_356 = arith.constant dense<0.000000e+00> : vector<8x128xf32>
    %1261 = tpu.matmul %1260, %15, %cst_356 {dimension_numbers = #tpu.dot_dimension_numbers<[1], [0], [0], [1], [0, 0, 1, 1], [], []>} : vector<8x64xf32>, vector<64x128xf32>, vector<8x128xf32> -> vector<8x128xf32>
    %1262 = vector.extract_strided_slice %1261 {offsets = [0, 0], sizes = [8, 64], strides = [1, 1]} : vector<8x128xf32> to vector<8x64xf32>
    %1263 = arith.addf %1262, %8 : vector<8x64xf32>
    %cst_357 = arith.constant 5.000000e-01 : f32
    %1264 = vector.broadcast %cst_357 : f32 to vector<8x64xf32>
    %1265 = arith.mulf %1264, %1263 : vector<8x64xf32>
    %1266 = math.tanh %1265 : vector<8x64xf32>
    %cst_358 = arith.constant 5.000000e-01 : f32
    %1267 = vector.broadcast %cst_358 : f32 to vector<8x64xf32>
    %1268 = arith.mulf %1267, %1266 : vector<8x64xf32>
    %cst_359 = arith.constant 5.000000e-01 : f32
    %1269 = vector.broadcast %cst_359 : f32 to vector<8x64xf32>
    %1270 = arith.addf %1268, %1269 : vector<8x64xf32>
    %1271 = vector.extract_strided_slice %1270 {offsets = [0, 0], sizes = [8, 32], strides = [1, 1]} : vector<8x64xf32> to vector<8x32xf32>
    %1272 = vector.extract_strided_slice %1270 {offsets = [0, 32], sizes = [8, 32], strides = [1, 1]} : vector<8x64xf32> to vector<8x32xf32>
    %1273 = vector.extract_strided_slice %1261 {offsets = [0, 64], sizes = [8, 32], strides = [1, 1]} : vector<8x128xf32> to vector<8x32xf32>
    %1274 = arith.addf %1273, %11 : vector<8x32xf32>
    %1275 = vector.extract_strided_slice %1261 {offsets = [0, 96], sizes = [8, 32], strides = [1, 1]} : vector<8x128xf32> to vector<8x32xf32>
    %1276 = arith.addf %1275, %14 : vector<8x32xf32>
    %1277 = arith.mulf %1271, %1276 : vector<8x32xf32>
    %1278 = arith.addf %1274, %1277 : vector<8x32xf32>
    %1279 = math.tanh %1278 : vector<8x32xf32>
    %cst_360 = arith.constant 1.000000e+00 : f32
    %1280 = vector.broadcast %cst_360 : f32 to vector<8x32xf32>
    %1281 = arith.subf %1280, %1272 : vector<8x32xf32>
    %1282 = arith.mulf %1281, %1279 : vector<8x32xf32>
    %1283 = arith.mulf %1272, %1230 : vector<8x32xf32>
    %1284 = arith.addf %1282, %1283 : vector<8x32xf32>
    %c22_361 = arith.constant 22 : index
    %c0_362 = arith.constant 0 : index
    %c0_363 = arith.constant 0 : index
    %1285 = vector.load %arg3[%c22_361, %c0_362, %c0_363] : memref<24x8x32xf32, #tpu.memory_space<vmem>>, vector<1x8x32xf32>
    %1286 = vector.shape_cast %1285 : vector<1x8x32xf32> to vector<8x32xf32>
    %1287 = vector.shape_cast %1284 : vector<8x32xf32> to vector<1x8x32xf32>
    tpu.vector_store %arg3[%c22_361, %c0_362, %c0_363], %1287 {strides = array<i32>} : memref<24x8x32xf32, #tpu.memory_space<vmem>>, vector<1x8x32xf32>,
    %1288 = tpu.concatenate %1259, %1284 in 1 : vector<8x32xf32>, vector<8x32xf32> -> vector<8x64xf32>
    %cst_364 = arith.constant dense<0.000000e+00> : vector<8x128xf32>
    %1289 = tpu.matmul %1288, %15, %cst_364 {dimension_numbers = #tpu.dot_dimension_numbers<[1], [0], [0], [1], [0, 0, 1, 1], [], []>} : vector<8x64xf32>, vector<64x128xf32>, vector<8x128xf32> -> vector<8x128xf32>
    %1290 = vector.extract_strided_slice %1289 {offsets = [0, 0], sizes = [8, 64], strides = [1, 1]} : vector<8x128xf32> to vector<8x64xf32>
    %1291 = arith.addf %1290, %8 : vector<8x64xf32>
    %cst_365 = arith.constant 5.000000e-01 : f32
    %1292 = vector.broadcast %cst_365 : f32 to vector<8x64xf32>
    %1293 = arith.mulf %1292, %1291 : vector<8x64xf32>
    %1294 = math.tanh %1293 : vector<8x64xf32>
    %cst_366 = arith.constant 5.000000e-01 : f32
    %1295 = vector.broadcast %cst_366 : f32 to vector<8x64xf32>
    %1296 = arith.mulf %1295, %1294 : vector<8x64xf32>
    %cst_367 = arith.constant 5.000000e-01 : f32
    %1297 = vector.broadcast %cst_367 : f32 to vector<8x64xf32>
    %1298 = arith.addf %1296, %1297 : vector<8x64xf32>
    %1299 = vector.extract_strided_slice %1298 {offsets = [0, 0], sizes = [8, 32], strides = [1, 1]} : vector<8x64xf32> to vector<8x32xf32>
    %1300 = vector.extract_strided_slice %1298 {offsets = [0, 32], sizes = [8, 32], strides = [1, 1]} : vector<8x64xf32> to vector<8x32xf32>
    %1301 = vector.extract_strided_slice %1289 {offsets = [0, 64], sizes = [8, 32], strides = [1, 1]} : vector<8x128xf32> to vector<8x32xf32>
    %1302 = arith.addf %1301, %11 : vector<8x32xf32>
    %1303 = vector.extract_strided_slice %1289 {offsets = [0, 96], sizes = [8, 32], strides = [1, 1]} : vector<8x128xf32> to vector<8x32xf32>
    %1304 = arith.addf %1303, %14 : vector<8x32xf32>
    %1305 = arith.mulf %1299, %1304 : vector<8x32xf32>
    %1306 = arith.addf %1302, %1305 : vector<8x32xf32>
    %1307 = math.tanh %1306 : vector<8x32xf32>
    %cst_368 = arith.constant 1.000000e+00 : f32
    %1308 = vector.broadcast %cst_368 : f32 to vector<8x32xf32>
    %1309 = arith.subf %1308, %1300 : vector<8x32xf32>
    %1310 = arith.mulf %1309, %1307 : vector<8x32xf32>
    %1311 = arith.mulf %1300, %1284 : vector<8x32xf32>
    %1312 = arith.addf %1310, %1311 : vector<8x32xf32>
    %c23_369 = arith.constant 23 : index
    %c0_370 = arith.constant 0 : index
    %c0_371 = arith.constant 0 : index
    %1313 = vector.load %arg3[%c23_369, %c0_370, %c0_371] : memref<24x8x32xf32, #tpu.memory_space<vmem>>, vector<1x8x32xf32>
    %1314 = vector.shape_cast %1313 : vector<1x8x32xf32> to vector<8x32xf32>
    %1315 = vector.shape_cast %1312 : vector<8x32xf32> to vector<1x8x32xf32>
    tpu.vector_store %arg3[%c23_369, %c0_370, %c0_371], %1315 {strides = array<i32>} : memref<24x8x32xf32, #tpu.memory_space<vmem>>, vector<1x8x32xf32>,
    return
  }
}

</mosaic_0001>

<llo_original>
// kernel: tpu_custom_call.1
$region0: #{tpu_custom_call.1}
  #allocation0 [shape = 'u32[]', space=smem, size = 0x4, offset = 0x4, fixed_abs, tag = 'smem constant byte address 0x4 - core index']
  #allocation1 [shape = 'u32[72,128]{1,0:T(1,128)}', space=vmem, size = 0x9000, scoped, tag = 'internal scratch']
  %s0 = inlined_call_operand.hbm [shape: f32[24,8,96], index: 0, kind: input, shape index: {}]
  %s1 = inlined_call_operand.hbm [shape: f32[2,8,32], index: 1, kind: input, shape index: {}]
  %s2 = inlined_call_operand.hbm [shape: f32[104,128], index: 2, kind: input, shape index: {}]
  %s3 = inlined_call_operand.hbm [shape: f32[24,8,32], index: 3, kind: output, shape index: {}]
  %s4 = sld [smem:[#allocation0]]
  $region34: #{tpu_custom_call.1} parent=0
    _
  %s6 = ssub.s32 1, %s4
  %s7 = scalar_select 0, %s6, %s4
  $region1: #{tpu_custom_call.1} parent=0
    #allocation2 [shape = 'u8[98304]{0}', space=vmem, size = 0x18000, scoped, tag = 'input window, operand 0, single buffered']
    #allocation3 [shape = 's32[1]{0}', space=sflag, size = 0x4, scoped, tag = 'scoped memory for tpu_custom_call.1']
    #allocation4 [shape = 's32[1]{0}', space=sflag, size = 0x4, scoped, tag = 'scoped memory for tpu_custom_call.1']
    #allocation5 [shape = 'u8[8192]{0}', space=vmem, size = 0x2000, scoped, tag = 'input window, operand 1, single buffered']
    #allocation6 [shape = 's32[1]{0}', space=sflag, size = 0x4, scoped, tag = 'scoped memory for tpu_custom_call.1']
    #allocation7 [shape = 'u8[53248]{0}', space=vmem, size = 0xd000, scoped, tag = 'input window, operand 2, single buffered']
    #allocation8 [shape = 'u8[98304]{0}', space=vmem, size = 0x18000, scoped, tag = 'output window, operand 0, single buffered']
    %8 = vsyncpa [#allocation3], 0
    %9 = vsyncpa [#allocation6], 0
    %10 = vsyncpa [#allocation4], 0
    // Predicated region
    $region2: #{tpu_custom_call.1} parent=1 // pred_check
      _
    $region3: #{tpu_custom_call.1} parent=1 // pred_check_branch
      %12 = sbr.rel (0) target = $region5
    $region4: #{tpu_custom_call.1} parent=1 // pred_region
      %14 = vsyncadd [#allocation3], 0
      %s15 = sshll.u32 %s0, 4
      %s16 = int_to_ptr.hbm [resolvable:$true] %s15
      %s17 = sshll.u32 [#allocation2], 4
      %s18 = int_to_ptr.vmem [resolvable:$true] %s17
      %23 = dma.hbm_to_vmem [thread:$0]  %s16, 3072, %s18, [#allocation3], 128, 128, 8
    $region5: #{tpu_custom_call.1} parent=1 // pred_fallthru
      _
    // Predicated region
    $region6: #{tpu_custom_call.1} parent=1 // pred_check
      _
    $region7: #{tpu_custom_call.1} parent=1 // pred_check_branch
      %25 = sbr.rel (0) target = $region9
    $region8: #{tpu_custom_call.1} parent=1 // pred_region
      %27 = vsyncadd [#allocation6], 0
      %s28 = sshll.u32 %s1, 4
      %s29 = int_to_ptr.hbm [resolvable:$true] %s28
      %s30 = sshll.u32 [#allocation5], 4
      %s31 = int_to_ptr.vmem [resolvable:$true] %s30
      %36 = dma.hbm_to_vmem [thread:$0]  %s29, 256, %s31, [#allocation6], 128, 128, 8
    $region9: #{tpu_custom_call.1} parent=1 // pred_fallthru
      _
    // Predicated region
    $region10: #{tpu_custom_call.1} parent=1 // pred_check
      _
    $region11: #{tpu_custom_call.1} parent=1 // pred_check_branch
      %38 = sbr.rel (0) target = $region13
    $region12: #{tpu_custom_call.1} parent=1 // pred_region
      %40 = vsyncadd [#allocation6], 0
      %s41 = sshll.u32 %s2, 4
      %s42 = int_to_ptr.hbm [resolvable:$true] %s41
      %s43 = sshll.u32 [#allocation7], 4
      %s44 = int_to_ptr.vmem [resolvable:$true] %s43
      %49 = dma.hbm_to_vmem [thread:$0]  %s42, 1664, %s44, [#allocation6], 128, 128, 8
    $region13: #{tpu_custom_call.1} parent=1 // pred_fallthru
      _
    // Predicated region
    $region14: #{tpu_custom_call.1} parent=1 // pred_check
      _
    $region15: #{tpu_custom_call.1} parent=1 // pred_check_branch
      %51 = sbr.rel (0) target = $region17
    $region16: #{tpu_custom_call.1} parent=1 // pred_region
      %53 = dma.done [#allocation3], 3072
    $region17: #{tpu_custom_call.1} parent=1 // pred_fallthru
      _
    // Predicated region
    $region18: #{tpu_custom_call.1} parent=1 // pred_check
      _
    $region19: #{tpu_custom_call.1} parent=1 // pred_check_branch
      %55 = sbr.rel (0) target = $region21
    $region20: #{tpu_custom_call.1} parent=1 // pred_region
      %57 = dma.done [#allocation6], 256
    $region21: #{tpu_custom_call.1} parent=1 // pred_fallthru
      _
    // Predicated region
    $region22: #{tpu_custom_call.1} parent=1 // pred_check
      _
    $region23: #{tpu_custom_call.1} parent=1 // pred_check_branch
      %59 = sbr.rel (0) target = $region25
    $region24: #{tpu_custom_call.1} parent=1 // pred_region
      %61 = dma.done [#allocation6], 1664
    $region25: #{tpu_custom_call.1} parent=1 // pred_fallthru
      _
    %v62 = vld [vmem:[#allocation7 + $0x8] sm:$0xff]
    %v63 = vld [vmem:[#allocation7 + $0x10] sm:$0xff]
    %v64 = vld [vmem:[#allocation7 + $0x18] sm:$0xff]
    %v65 = vld [vmem:[#allocation7 + $0x20] sm:$0xff]
    %v66 = vld [vmem:[#allocation7] sm:$0x1]
    %v67 = vperm.slane %v66, 0
    %v68 = vld [vmem:[#allocation7 + $0x1] sm:$0x1]
    %v69 = vperm.slane %v68, 0
    %v70 = vld [vmem:[#allocation7 + $0x28] sm:$0xff]
    %v71 = vld [vmem:[#allocation7 + $0x30] sm:$0xff]
    %v72 = vld [vmem:[#allocation7 + $0x38] sm:$0xff]
    %v73 = vld [vmem:[#allocation7 + $0x40] sm:$0xff]
    %v74 = vld [vmem:[#allocation7 + $0x48] sm:$0xff]
    %v75 = vld [vmem:[#allocation7 + $0x50] sm:$0xff]
    %v76 = vld [vmem:[#allocation7 + $0x58] sm:$0xff]
    %v77 = vld [vmem:[#allocation7 + $0x60] sm:$0xff]
    %v78 = vld [vmem:[#allocation5] sm:$0xff]
    %s79 = scalar_lea.vmem [#allocation5], 8
    %v80 = vld [vmem:[%s79] sm:$0xff]
    %v81 = vld [vmem:[#allocation2] sm:$0xff]
    %vm82 = vcmask 261120
    %v84 = vsel %vm82, %v78, 0
    %86 = vmatpush.msra.mxu0 0.0
    %87 = vmatpush.msra.mxu0 0.0
    %88 = vmatpush.msra.mxu0 0.0
    %89 = vmatpush.msra.mxu0 0.0
    %90 = vmatpush.msra.mxu0 0.0
    %91 = vmatpush.msra.mxu0 0.0
    %92 = vmatpush.msra.mxu0 0.0
    %93 = vmatpush.msra.mxu0 0.0
    %94 = vmatpush.msra.mxu0 0.0
    %95 = vmatpush.msra.mxu0 0.0
    %96 = vmatpush.msra.mxu0 0.0
    %97 = vmatpush.msra.mxu0 0.0
    %98 = vmatpush.msra.mxu0 %v65
    %99 = vmatpush.msra.mxu0 %v64
    %100 = vmatpush.msra.mxu0 %v63
    %101 = vmatpush.msra.mxu0 %v62
    %102 = vmatmul.f32.gmra.mxu0 %v84
    %v103 = vpop.f32.mrf.mxu0
    %v104 = vadd.f32 0.0, %v103
    %105 = vdwg.mxu0
    %v106 = vadd.f32 %v81, %v104
    %v107 = vmul.f32 %v106, 0.5
    %v108 = vtanh.pop %v107
    %v109 = vmul.f32 %v108, 0.5
    %v110 = vadd.f32 %v109, 0.5
    %112 = vrot.lane.b32.xlu0 %v67, 96
    %v113 = vpop.permute.xlu0 %112
    %v115 = vadd.f32 %v104, %v113
    %117 = vrot.lane.b32.xlu0 %v115, 64
    %v118 = vpop.permute.xlu0 %117
    %v120 = vmul.f32 %v110, %v118
    %122 = vrot.lane.b32.xlu0 %v120, 64
    %v123 = vpop.permute.xlu0 %122
    %v125 = vadd.f32 %v81, %v123
    %v126 = vtanh.pop %v125
    %v127 = vsub.f32 1.0, %v110
    %129 = vrot.lane.b32.xlu0 %v126, 96
    %v130 = vpop.permute.xlu0 %129
    %v132 = vmul.f32 %v127, %v130
    %133 = vrot.lane.b32.xlu0 %v78, 32
    %v134 = vpop.permute.xlu0 %133
    %v136 = vmul.f32 %v110, %v134
    %v137 = vadd.f32 %v132, %v136
    %s138 = scalar_lea.vmem [#allocation2], 8
    %v139 = vld [vmem:[%s138] sm:$0xff]
    %141 = vrot.lane.b32.xlu0 %v137, 96
    %v142 = vpop.permute.xlu0 %141
    %v143 = vsel %vm82, %v142, 0
    %145 = vmatpush.msra.mxu0 0.0
    %146 = vmatpush.msra.mxu0 0.0
    %147 = vmatpush.msra.mxu0 0.0
    %148 = vmatpush.msra.mxu0 0.0
    %149 = vmatpush.msra.mxu0 0.0
    %150 = vmatpush.msra.mxu0 0.0
    %151 = vmatpush.msra.mxu0 0.0
    %152 = vmatpush.msra.mxu0 0.0
    %153 = vmatpush.msra.mxu0 0.0
    %154 = vmatpush.msra.mxu0 0.0
    %155 = vmatpush.msra.mxu0 0.0
    %156 = vmatpush.msra.mxu0 0.0
    %157 = vmatpush.msra.mxu0 %v65
    %158 = vmatpush.msra.mxu0 %v64
    %159 = vmatpush.msra.mxu0 %v63
    %160 = vmatpush.msra.mxu0 %v62
    %161 = vmatmul.f32.gmra.mxu0 %v143
    %v162 = vpop.f32.mrf.mxu0
    %v163 = vadd.f32 0.0, %v162
    %164 = vdwg.mxu0
    %v165 = vadd.f32 %v139, %v163
    %v166 = vmul.f32 %v165, 0.5
    %v167 = vtanh.pop %v166
    %v168 = vmul.f32 %v167, 0.5
    %v169 = vadd.f32 %v168, 0.5
    %v170 = vadd.f32 %v163, %v113
    %172 = vrot.lane.b32.xlu0 %v170, 64
    %v173 = vpop.permute.xlu0 %172
    %v175 = vmul.f32 %v169, %v173
    %177 = vrot.lane.b32.xlu0 %v175, 64
    %v178 = vpop.permute.xlu0 %177
    %v180 = vadd.f32 %v139, %v178
    %v181 = vtanh.pop %v180
    %v182 = vsub.f32 1.0, %v169
    %184 = vrot.lane.b32.xlu0 %v181, 96
    %v185 = vpop.permute.xlu0 %184
    %v187 = vmul.f32 %v182, %v185
    %v188 = vmul.f32 %v169, %v137
    %v189 = vadd.f32 %v187, %v188
    %192 = vrot.lane.b32.xlu0 %v80, 32
    %v193 = vpop.permute.xlu0 %192
    %v195 = vsel %vm82, %v142, %v193
    %vm196 = vcmask 523264
    %v198 = vsel %vm196, %v195, 0
    %200 = vmatpush.msra.mxu0 0.0
    %201 = vmatpush.msra.mxu0 0.0
    %202 = vmatpush.msra.mxu0 0.0
    %203 = vmatpush.msra.mxu0 0.0
    %204 = vmatpush.msra.mxu0 0.0
    %205 = vmatpush.msra.mxu0 0.0
    %206 = vmatpush.msra.mxu0 0.0
    %207 = vmatpush.msra.mxu0 0.0
    %208 = vmatpush.msra.mxu0 %v77
    %209 = vmatpush.msra.mxu0 %v76
    %210 = vmatpush.msra.mxu0 %v75
    %211 = vmatpush.msra.mxu0 %v74
    %212 = vmatpush.msra.mxu0 %v73
    %213 = vmatpush.msra.mxu0 %v72
    %214 = vmatpush.msra.mxu0 %v71
    %215 = vmatpush.msra.mxu0 %v70
    %216 = vmatmul.f32.gmra.mxu0 %v198
    %v217 = vpop.f32.mrf.mxu0
    %v218 = vadd.f32 0.0, %v217
    %219 = vdwg.mxu0
    %v220 = vadd.f32 %v218, %v69
    %v221 = vmul.f32 %v220, 0.5
    %v222 = vtanh.pop %v221
    %v223 = vmul.f32 %v222, 0.5
    %v224 = vadd.f32 %v223, 0.5
    %226 = vrot.lane.b32.xlu0 %v220, 32
    %v227 = vpop.permute.xlu0 %226
    %v229 = vmul.f32 %v224, %v227
    %231 = vrot.lane.b32.xlu0 %v229, 64
    %v232 = vpop.permute.xlu0 %231
    %v234 = vadd.f32 %v220, %v232
    %v235 = vtanh.pop %v234
    %v236 = vsub.f32 1.0, %v224
    %238 = vrot.lane.b32.xlu0 %v235, 96
    %v239 = vpop.permute.xlu0 %238
    %v241 = vmul.f32 %v236, %v239
    %v242 = vmul.f32 %v224, %v193
    %v243 = vadd.f32 %v241, %v242
    %245 = vrot.lane.b32.xlu0 %v243, 96
    %v246 = vpop.permute.xlu0 %245
    %248 = vst.msk [vmem:[#allocation8] sm:$0xff] %vm82, %v246
    %s249 = scalar_lea.vmem [#allocation2], 16
    %v250 = vld [vmem:[%s249] sm:$0xff]
    %252 = vrot.lane.b32.xlu0 %v189, 96
    %v253 = vpop.permute.xlu0 %252
    %v254 = vsel %vm82, %v253, 0
    %256 = vmatpush.msra.mxu0 0.0
    %257 = vmatpush.msra.mxu0 0.0
    %258 = vmatpush.msra.mxu0 0.0
    %259 = vmatpush.msra.mxu0 0.0
    %260 = vmatpush.msra.mxu0 0.0
    %261 = vmatpush.msra.mxu0 0.0
    %262 = vmatpush.msra.mxu0 0.0
    %263 = vmatpush.msra.mxu0 0.0
    %264 = vmatpush.msra.mxu0 0.0
    %265 = vmatpush.msra.mxu0 0.0
    %266 = vmatpush.msra.mxu0 0.0
    %267 = vmatpush.msra.mxu0 0.0
    %268 = vmatpush.msra.mxu0 %v65
    %269 = vmatpush.msra.mxu0 %v64
    %270 = vmatpush.msra.mxu0 %v63
    %271 = vmatpush.msra.mxu0 %v62
    %272 = vmatmul.f32.gmra.mxu0 %v254
    %v273 = vpop.f32.mrf.mxu0
    %v274 = vadd.f32 0.0, %v273
    %275 = vdwg.mxu0
    %v276 = vadd.f32 %v250, %v274
    %v277 = vmul.f32 %v276, 0.5
    %v278 = vtanh.pop %v277
    %v279 = vmul.f32 %v278, 0.5
    %v280 = vadd.f32 %v279, 0.5
    %v281 = vadd.f32 %v274, %v113
    %283 = vrot.lane.b32.xlu0 %v281, 64
    %v284 = vpop.permute.xlu0 %283
    %v286 = vmul.f32 %v280, %v284
    %288 = vrot.lane.b32.xlu0 %v286, 64
    %v289 = vpop.permute.xlu0 %288
    %v291 = vadd.f32 %v250, %v289
    %v292 = vtanh.pop %v291
    %v293 = vsub.f32 1.0, %v280
    %295 = vrot.lane.b32.xlu0 %v292, 96
    %v296 = vpop.permute.xlu0 %295
    %v298 = vmul.f32 %v293, %v296
    %v299 = vmul.f32 %v280, %v189
    %v300 = vadd.f32 %v298, %v299
    %v302 = vsel %vm82, %v253, %v243
    %v304 = vsel %vm196, %v302, 0
    %306 = vmatpush.msra.mxu0 0.0
    %307 = vmatpush.msra.mxu0 0.0
    %308 = vmatpush.msra.mxu0 0.0
    %309 = vmatpush.msra.mxu0 0.0
    %310 = vmatpush.msra.mxu0 0.0
    %311 = vmatpush.msra.mxu0 0.0
    %312 = vmatpush.msra.mxu0 0.0
    %313 = vmatpush.msra.mxu0 0.0
    %314 = vmatpush.msra.mxu0 %v77
    %315 = vmatpush.msra.mxu0 %v76
    %316 = vmatpush.msra.mxu0 %v75
    %317 = vmatpush.msra.mxu0 %v74
    %318 = vmatpush.msra.mxu0 %v73
    %319 = vmatpush.msra.mxu0 %v72
    %320 = vmatpush.msra.mxu0 %v71
    %321 = vmatpush.msra.mxu0 %v70
    %322 = vmatmul.f32.gmra.mxu0 %v304
    %v323 = vpop.f32.mrf.mxu0
    %v324 = vadd.f32 0.0, %v323
    %325 = vdwg.mxu0
    %v326 = vadd.f32 %v324, %v69
    %v327 = vmul.f32 %v326, 0.5
    %v328 = vtanh.pop %v327
    %v329 = vmul.f32 %v328, 0.5
    %v330 = vadd.f32 %v329, 0.5
    %332 = vrot.lane.b32.xlu0 %v326, 32
    %v333 = vpop.permute.xlu0 %332
    %v335 = vmul.f32 %v330, %v333
    %337 = vrot.lane.b32.xlu0 %v335, 64
    %v338 = vpop.permute.xlu0 %337
    %v340 = vadd.f32 %v326, %v338
    %v341 = vtanh.pop %v340
    %v342 = vsub.f32 1.0, %v330
    %344 = vrot.lane.b32.xlu0 %v341, 96
    %v345 = vpop.permute.xlu0 %344
    %v347 = vmul.f32 %v342, %v345
    %v348 = vmul.f32 %v330, %v243
    %v349 = vadd.f32 %v347, %v348
    %351 = vrot.lane.b32.xlu0 %v349, 96
    %v352 = vpop.permute.xlu0 %351
    %s354 = scalar_lea.vmem [#allocation8], 8
    %355 = vst.msk [vmem:[%s354] sm:$0xff] %vm82, %v352
    %s356 = scalar_lea.vmem [#allocation2], 24
    %v357 = vld [vmem:[%s356] sm:$0xff]
    %359 = vrot.lane.b32.xlu0 %v300, 96
    %v360 = vpop.permute.xlu0 %359
    %v361 = vsel %vm82, %v360, 0
    %363 = vmatpush.msra.mxu0 0.0
    %364 = vmatpush.msra.mxu0 0.0
    %365 = vmatpush.msra.mxu0 0.0
    %366 = vmatpush.msra.mxu0 0.0
    %367 = vmatpush.msra.mxu0 0.0
    %368 = vmatpush.msra.mxu0 0.0
    %369 = vmatpush.msra.mxu0 0.0
    %370 = vmatpush.msra.mxu0 0.0
    %371 = vmatpush.msra.mxu0 0.0
    %372 = vmatpush.msra.mxu0 0.0
    %373 = vmatpush.msra.mxu0 0.0
    %374 = vmatpush.msra.mxu0 0.0
    %375 = vmatpush.msra.mxu0 %v65
    %376 = vmatpush.msra.mxu0 %v64
    %377 = vmatpush.msra.mxu0 %v63
    %378 = vmatpush.msra.mxu0 %v62
    %379 = vmatmul.f32.gmra.mxu0 %v361
    %v380 = vpop.f32.mrf.mxu0
    %v381 = vadd.f32 0.0, %v380
    %382 = vdwg.mxu0
    %v383 = vadd.f32 %v357, %v381
    %v384 = vmul.f32 %v383, 0.5
    %v385 = vtanh.pop %v384
    %v386 = vmul.f32 %v385, 0.5
    %v387 = vadd.f32 %v386, 0.5
    %v388 = vadd.f32 %v381, %v113
    %390 = vrot.lane.b32.xlu0 %v388, 64
    %v391 = vpop.permute.xlu0 %390
    %v393 = vmul.f32 %v387, %v391
    %395 = vrot.lane.b32.xlu0 %v393, 64
    %v396 = vpop.permute.xlu0 %395
    %v398 = vadd.f32 %v357, %v396
    %v399 = vtanh.pop %v398
    %v400 = vsub.f32 1.0, %v387
    %402 = vrot.lane.b32.xlu0 %v399, 96
    %v403 = vpop.permute.xlu0 %402
    %v405 = vmul.f32 %v400, %v403
    %v406 = vmul.f32 %v387, %v300
    %v407 = vadd.f32 %v405, %v406
    %v409 = vsel %vm82, %v360, %v349
    %v411 = vsel %vm196, %v409, 0
    %413 = vmatpush.msra.mxu0 0.0
    %414 = vmatpush.msra.mxu0 0.0
    %415 = vmatpush.msra.mxu0 0.0
    %416 = vmatpush.msra.mxu0 0.0
    %417 = vmatpush.msra.mxu0 0.0
    %418 = vmatpush.msra.mxu0 0.0
    %419 = vmatpush.msra.mxu0 0.0
    %420 = vmatpush.msra.mxu0 0.0
    %421 = vmatpush.msra.mxu0 %v77
    %422 = vmatpush.msra.mxu0 %v76
    %423 = vmatpush.msra.mxu0 %v75
    %424 = vmatpush.msra.mxu0 %v74
    %425 = vmatpush.msra.mxu0 %v73
    %426 = vmatpush.msra.mxu0 %v72
    %427 = vmatpush.msra.mxu0 %v71
    %428 = vmatpush.msra.mxu0 %v70
    %429 = vmatmul.f32.gmra.mxu0 %v411
    %v430 = vpop.f32.mrf.mxu0
    %v431 = vadd.f32 0.0, %v430
    %432 = vdwg.mxu0
    %v433 = vadd.f32 %v431, %v69
    %v434 = vmul.f32 %v433, 0.5
    %v435 = vtanh.pop %v434
    %v436 = vmul.f32 %v435, 0.5
    %v437 = vadd.f32 %v436, 0.5
    %439 = vrot.lane.b32.xlu0 %v433, 32
    %v440 = vpop.permute.xlu0 %439
    %v442 = vmul.f32 %v437, %v440
    %444 = vrot.lane.b32.xlu0 %v442, 64
    %v445 = vpop.permute.xlu0 %444
    %v447 = vadd.f32 %v433, %v445
    %v448 = vtanh.pop %v447
    %v449 = vsub.f32 1.0, %v437
    %451 = vrot.lane.b32.xlu0 %v448, 96
    %v452 = vpop.permute.xlu0 %451
    %v454 = vmul.f32 %v449, %v452
    %v455 = vmul.f32 %v437, %v349
    %v456 = vadd.f32 %v454, %v455
    %458 = vrot.lane.b32.xlu0 %v456, 96
    %v459 = vpop.permute.xlu0 %458
    %s461 = scalar_lea.vmem [#allocation8], 16
    %462 = vst.msk [vmem:[%s461] sm:$0xff] %vm82, %v459
    %s463 = scalar_lea.vmem [#allocation2], 32
    %v464 = vld [vmem:[%s463] sm:$0xff]
    %466 = vrot.lane.b32.xlu0 %v407, 96
    %v467 = vpop.permute.xlu0 %466
    %v468 = vsel %vm82, %v467, 0
    %470 = vmatpush.msra.mxu0 0.0
    %471 = vmatpush.msra.mxu0 0.0
    %472 = vmatpush.msra.mxu0 0.0
    %473 = vmatpush.msra.mxu0 0.0
    %474 = vmatpush.msra.mxu0 0.0
    %475 = vmatpush.msra.mxu0 0.0
    %476 = vmatpush.msra.mxu0 0.0
    %477 = vmatpush.msra.mxu0 0.0
    %478 = vmatpush.msra.mxu0 0.0
    %479 = vmatpush.msra.mxu0 0.0
    %480 = vmatpush.msra.mxu0 0.0
    %481 = vmatpush.msra.mxu0 0.0
    %482 = vmatpush.msra.mxu0 %v65
    %483 = vmatpush.msra.mxu0 %v64
    %484 = vmatpush.msra.mxu0 %v63
    %485 = vmatpush.msra.mxu0 %v62
    %486 = vmatmul.f32.gmra.mxu0 %v468
    %v487 = vpop.f32.mrf.mxu0
    %v488 = vadd.f32 0.0, %v487
    %489 = vdwg.mxu0
    %v490 = vadd.f32 %v464, %v488
    %v491 = vmul.f32 %v490, 0.5
    %v492 = vtanh.pop %v491
    %v493 = vmul.f32 %v492, 0.5
    %v494 = vadd.f32 %v493, 0.5
    %v495 = vadd.f32 %v488, %v113
    %497 = vrot.lane.b32.xlu0 %v495, 64
    %v498 = vpop.permute.xlu0 %497
    %v500 = vmul.f32 %v494, %v498
    %502 = vrot.lane.b32.xlu0 %v500, 64
    %v503 = vpop.permute.xlu0 %502
    %v505 = vadd.f32 %v464, %v503
    %v506 = vtanh.pop %v505
    %v507 = vsub.f32 1.0, %v494
    %509 = vrot.lane.b32.xlu0 %v506, 96
    %v510 = vpop.permute.xlu0 %509
    %v512 = vmul.f32 %v507, %v510
    %v513 = vmul.f32 %v494, %v407
    %v514 = vadd.f32 %v512, %v513
    %v516 = vsel %vm82, %v467, %v456
    %v518 = vsel %vm196, %v516, 0
    %520 = vmatpush.msra.mxu0 0.0
    %521 = vmatpush.msra.mxu0 0.0
    %522 = vmatpush.msra.mxu0 0.0
    %523 = vmatpush.msra.mxu0 0.0
    %524 = vmatpush.msra.mxu0 0.0
    %525 = vmatpush.msra.mxu0 0.0
    %526 = vmatpush.msra.mxu0 0.0
    %527 = vmatpush.msra.mxu0 0.0
    %528 = vmatpush.msra.mxu0 %v77
    %529 = vmatpush.msra.mxu0 %v76
    %530 = vmatpush.msra.mxu0 %v75
    %531 = vmatpush.msra.mxu0 %v74
    %532 = vmatpush.msra.mxu0 %v73
    %533 = vmatpush.msra.mxu0 %v72
    %534 = vmatpush.msra.mxu0 %v71
    %535 = vmatpush.msra.mxu0 %v70
    %536 = vmatmul.f32.gmra.mxu0 %v518
    %v537 = vpop.f32.mrf.mxu0
    %v538 = vadd.f32 0.0, %v537
    %539 = vdwg.mxu0
    %v540 = vadd.f32 %v538, %v69
    %v541 = vmul.f32 %v540, 0.5
    %v542 = vtanh.pop %v541
    %v543 = vmul.f32 %v542, 0.5
    %v544 = vadd.f32 %v543, 0.5
    %546 = vrot.lane.b32.xlu0 %v540, 32
    %v547 = vpop.permute.xlu0 %546
    %v549 = vmul.f32 %v544, %v547
    %551 = vrot.lane.b32.xlu0 %v549, 64
    %v552 = vpop.permute.xlu0 %551
    %v554 = vadd.f32 %v540, %v552
    %v555 = vtanh.pop %v554
    %v556 = vsub.f32 1.0, %v544
    %558 = vrot.lane.b32.xlu0 %v555, 96
    %v559 = vpop.permute.xlu0 %558
    %v561 = vmul.f32 %v556, %v559
    %v562 = vmul.f32 %v544, %v456
    %v563 = vadd.f32 %v561, %v562
    %565 = vrot.lane.b32.xlu0 %v563, 96
    %v566 = vpop.permute.xlu0 %565
    %s568 = scalar_lea.vmem [#allocation8], 24
    %569 = vst.msk [vmem:[%s568] sm:$0xff] %vm82, %v566
    %s570 = scalar_lea.vmem [#allocation2], 40
    %v571 = vld [vmem:[%s570] sm:$0xff]
    %573 = vrot.lane.b32.xlu0 %v514, 96
    %v574 = vpop.permute.xlu0 %573
    %v575 = vsel %vm82, %v574, 0
    %577 = vmatpush.msra.mxu0 0.0
    %578 = vmatpush.msra.mxu0 0.0
    %579 = vmatpush.msra.mxu0 0.0
    %580 = vmatpush.msra.mxu0 0.0
    %581 = vmatpush.msra.mxu0 0.0
    %582 = vmatpush.msra.mxu0 0.0
    %583 = vmatpush.msra.mxu0 0.0
    %584 = vmatpush.msra.mxu0 0.0
    %585 = vmatpush.msra.mxu0 0.0
    %586 = vmatpush.msra.mxu0 0.0
    %587 = vmatpush.msra.mxu0 0.0
    %588 = vmatpush.msra.mxu0 0.0
    %589 = vmatpush.msra.mxu0 %v65
    %590 = vmatpush.msra.mxu0 %v64
    %591 = vmatpush.msra.mxu0 %v63
    %592 = vmatpush.msra.mxu0 %v62
    %593 = vmatmul.f32.gmra.mxu0 %v575
    %v594 = vpop.f32.mrf.mxu0
    %v595 = vadd.f32 0.0, %v594
    %596 = vdwg.mxu0
    %v597 = vadd.f32 %v571, %v595
    %v598 = vmul.f32 %v597, 0.5
    %v599 = vtanh.pop %v598
    %v600 = vmul.f32 %v599, 0.5
    %v601 = vadd.f32 %v600, 0.5
    %v602 = vadd.f32 %v595, %v113
    %604 = vrot.lane.b32.xlu0 %v602, 64
    %v605 = vpop.permute.xlu0 %604
    %v607 = vmul.f32 %v601, %v605
    %609 = vrot.lane.b32.xlu0 %v607, 64
    %v610 = vpop.permute.xlu0 %609
    %v612 = vadd.f32 %v571, %v610
    %v613 = vtanh.pop %v612
    %v614 = vsub.f32 1.0, %v601
    %616 = vrot.lane.b32.xlu0 %v613, 96
    %v617 = vpop.permute.xlu0 %616
    %v619 = vmul.f32 %v614, %v617
    %v620 = vmul.f32 %v601, %v514
    %v621 = vadd.f32 %v619, %v620
    %v623 = vsel %vm82, %v574, %v563
    %v625 = vsel %vm196, %v623, 0
    %627 = vmatpush.msra.mxu0 0.0
    %628 = vmatpush.msra.mxu0 0.0
    %629 = vmatpush.msra.mxu0 0.0
    %630 = vmatpush.msra.mxu0 0.0
    %631 = vmatpush.msra.mxu0 0.0
    %632 = vmatpush.msra.mxu0 0.0
    %633 = vmatpush.msra.mxu0 0.0
    %634 = vmatpush.msra.mxu0 0.0
    %635 = vmatpush.msra.mxu0 %v77
    %636 = vmatpush.msra.mxu0 %v76
    %637 = vmatpush.msra.mxu0 %v75
    %638 = vmatpush.msra.mxu0 %v74
    %639 = vmatpush.msra.mxu0 %v73
    %640 = vmatpush.msra.mxu0 %v72
    %641 = vmatpush.msra.mxu0 %v71
    %642 = vmatpush.msra.mxu0 %v70
    %643 = vmatmul.f32.gmra.mxu0 %v625
    %v644 = vpop.f32.mrf.mxu0
    %v645 = vadd.f32 0.0, %v644
    %646 = vdwg.mxu0
    %v647 = vadd.f32 %v645, %v69
    %v648 = vmul.f32 %v647, 0.5
    %v649 = vtanh.pop %v648
    %v650 = vmul.f32 %v649, 0.5
    %v651 = vadd.f32 %v650, 0.5
    %653 = vrot.lane.b32.xlu0 %v647, 32
    %v654 = vpop.permute.xlu0 %653
    %v656 = vmul.f32 %v651, %v654
    %658 = vrot.lane.b32.xlu0 %v656, 64
    %v659 = vpop.permute.xlu0 %658
    %v661 = vadd.f32 %v647, %v659
    %v662 = vtanh.pop %v661
    %v663 = vsub.f32 1.0, %v651
    %665 = vrot.lane.b32.xlu0 %v662, 96
    %v666 = vpop.permute.xlu0 %665
    %v668 = vmul.f32 %v663, %v666
    %v669 = vmul.f32 %v651, %v563
    %v670 = vadd.f32 %v668, %v669
    %672 = vrot.lane.b32.xlu0 %v670, 96
    %v673 = vpop.permute.xlu0 %672
    %s675 = scalar_lea.vmem [#allocation8], 32
    %676 = vst.msk [vmem:[%s675] sm:$0xff] %vm82, %v673
    %s677 = scalar_lea.vmem [#allocation2], 48
    %v678 = vld [vmem:[%s677] sm:$0xff]
    %680 = vrot.lane.b32.xlu0 %v621, 96
    %v681 = vpop.permute.xlu0 %680
    %v682 = vsel %vm82, %v681, 0
    %684 = vmatpush.msra.mxu0 0.0
    %685 = vmatpush.msra.mxu0 0.0
    %686 = vmatpush.msra.mxu0 0.0
    %687 = vmatpush.msra.mxu0 0.0
    %688 = vmatpush.msra.mxu0 0.0
    %689 = vmatpush.msra.mxu0 0.0
    %690 = vmatpush.msra.mxu0 0.0
    %691 = vmatpush.msra.mxu0 0.0
    %692 = vmatpush.msra.mxu0 0.0
    %693 = vmatpush.msra.mxu0 0.0
    %694 = vmatpush.msra.mxu0 0.0
    %695 = vmatpush.msra.mxu0 0.0
    %696 = vmatpush.msra.mxu0 %v65
    %697 = vmatpush.msra.mxu0 %v64
    %698 = vmatpush.msra.mxu0 %v63
    %699 = vmatpush.msra.mxu0 %v62
    %700 = vmatmul.f32.gmra.mxu0 %v682
    %v701 = vpop.f32.mrf.mxu0
    %v702 = vadd.f32 0.0, %v701
    %703 = vdwg.mxu0
    %v704 = vadd.f32 %v678, %v702
    %v705 = vmul.f32 %v704, 0.5
    %v706 = vtanh.pop %v705
    %v707 = vmul.f32 %v706, 0.5
    %v708 = vadd.f32 %v707, 0.5
    %v709 = vadd.f32 %v702, %v113
    %711 = vrot.lane.b32.xlu0 %v709, 64
    %v712 = vpop.permute.xlu0 %711
    %v714 = vmul.f32 %v708, %v712
    %716 = vrot.lane.b32.xlu0 %v714, 64
    %v717 = vpop.permute.xlu0 %716
    %v719 = vadd.f32 %v678, %v717
    %v720 = vtanh.pop %v719
    %v721 = vsub.f32 1.0, %v708
    %723 = vrot.lane.b32.xlu0 %v720, 96
    %v724 = vpop.permute.xlu0 %723
    %v726 = vmul.f32 %v721, %v724
    %v727 = vmul.f32 %v708, %v621
    %v728 = vadd.f32 %v726, %v727
    %v730 = vsel %vm82, %v681, %v670
    %v732 = vsel %vm196, %v730, 0
    %734 = vmatpush.msra.mxu0 0.0
    %735 = vmatpush.msra.mxu0 0.0
    %736 = vmatpush.msra.mxu0 0.0
    %737 = vmatpush.msra.mxu0 0.0
    %738 = vmatpush.msra.mxu0 0.0
    %739 = vmatpush.msra.mxu0 0.0
    %740 = vmatpush.msra.mxu0 0.0
    %741 = vmatpush.msra.mxu0 0.0
    %742 = vmatpush.msra.mxu0 %v77
    %743 = vmatpush.msra.mxu0 %v76
    %744 = vmatpush.msra.mxu0 %v75
    %745 = vmatpush.msra.mxu0 %v74
    %746 = vmatpush.msra.mxu0 %v73
    %747 = vmatpush.msra.mxu0 %v72
    %748 = vmatpush.msra.mxu0 %v71
    %749 = vmatpush.msra.mxu0 %v70
    %750 = vmatmul.f32.gmra.mxu0 %v732
    %v751 = vpop.f32.mrf.mxu0
    %v752 = vadd.f32 0.0, %v751
    %753 = vdwg.mxu0
    %v754 = vadd.f32 %v752, %v69
    %v755 = vmul.f32 %v754, 0.5
    %v756 = vtanh.pop %v755
    %v757 = vmul.f32 %v756, 0.5
    %v758 = vadd.f32 %v757, 0.5
    %760 = vrot.lane.b32.xlu0 %v754, 32
    %v761 = vpop.permute.xlu0 %760
    %v763 = vmul.f32 %v758, %v761
    %765 = vrot.lane.b32.xlu0 %v763, 64
    %v766 = vpop.permute.xlu0 %765
    %v768 = vadd.f32 %v754, %v766
    %v769 = vtanh.pop %v768
    %v770 = vsub.f32 1.0, %v758
    %772 = vrot.lane.b32.xlu0 %v769, 96
    %v773 = vpop.permute.xlu0 %772
    %v775 = vmul.f32 %v770, %v773
    %v776 = vmul.f32 %v758, %v670
    %v777 = vadd.f32 %v775, %v776
    %779 = vrot.lane.b32.xlu0 %v777, 96
    %v780 = vpop.permute.xlu0 %779
    %s782 = scalar_lea.vmem [#allocation8], 40
    %783 = vst.msk [vmem:[%s782] sm:$0xff] %vm82, %v780
    %s784 = scalar_lea.vmem [#allocation2], 56
    %v785 = vld [vmem:[%s784] sm:$0xff]
    %787 = vrot.lane.b32.xlu0 %v728, 96
    %v788 = vpop.permute.xlu0 %787
    %v789 = vsel %vm82, %v788, 0
    %791 = vmatpush.msra.mxu0 0.0
    %792 = vmatpush.msra.mxu0 0.0
    %793 = vmatpush.msra.mxu0 0.0
    %794 = vmatpush.msra.mxu0 0.0
    %795 = vmatpush.msra.mxu0 0.0
    %796 = vmatpush.msra.mxu0 0.0
    %797 = vmatpush.msra.mxu0 0.0
    %798 = vmatpush.msra.mxu0 0.0
    %799 = vmatpush.msra.mxu0 0.0
    %800 = vmatpush.msra.mxu0 0.0
    %801 = vmatpush.msra.mxu0 0.0
    %802 = vmatpush.msra.mxu0 0.0
    %803 = vmatpush.msra.mxu0 %v65
    %804 = vmatpush.msra.mxu0 %v64
    %805 = vmatpush.msra.mxu0 %v63
    %806 = vmatpush.msra.mxu0 %v62
    %807 = vmatmul.f32.gmra.mxu0 %v789
    %v808 = vpop.f32.mrf.mxu0
    %v809 = vadd.f32 0.0, %v808
    %810 = vdwg.mxu0
    %v811 = vadd.f32 %v785, %v809
    %v812 = vmul.f32 %v811, 0.5
    %v813 = vtanh.pop %v812
    %v814 = vmul.f32 %v813, 0.5
    %v815 = vadd.f32 %v814, 0.5
    %v816 = vadd.f32 %v809, %v113
    %818 = vrot.lane.b32.xlu0 %v816, 64
    %v819 = vpop.permute.xlu0 %818
    %v821 = vmul.f32 %v815, %v819
    %823 = vrot.lane.b32.xlu0 %v821, 64
    %v824 = vpop.permute.xlu0 %823
    %v826 = vadd.f32 %v785, %v824
    %v827 = vtanh.pop %v826
    %v828 = vsub.f32 1.0, %v815
    %830 = vrot.lane.b32.xlu0 %v827, 96
    %v831 = vpop.permute.xlu0 %830
    %v833 = vmul.f32 %v828, %v831
    %v834 = vmul.f32 %v815, %v728
    %v835 = vadd.f32 %v833, %v834
    %v837 = vsel %vm82, %v788, %v777
    %v839 = vsel %vm196, %v837, 0
    %841 = vmatpush.msra.mxu0 0.0
    %842 = vmatpush.msra.mxu0 0.0
    %843 = vmatpush.msra.mxu0 0.0
    %844 = vmatpush.msra.mxu0 0.0
    %845 = vmatpush.msra.mxu0 0.0
    %846 = vmatpush.msra.mxu0 0.0
    %847 = vmatpush.msra.mxu0 0.0
    %848 = vmatpush.msra.mxu0 0.0
    %849 = vmatpush.msra.mxu0 %v77
    %850 = vmatpush.msra.mxu0 %v76
    %851 = vmatpush.msra.mxu0 %v75
    %852 = vmatpush.msra.mxu0 %v74
    %853 = vmatpush.msra.mxu0 %v73
    %854 = vmatpush.msra.mxu0 %v72
    %855 = vmatpush.msra.mxu0 %v71
    %856 = vmatpush.msra.mxu0 %v70
    %857 = vmatmul.f32.gmra.mxu0 %v839
    %v858 = vpop.f32.mrf.mxu0
    %v859 = vadd.f32 0.0, %v858
    %860 = vdwg.mxu0
    %v861 = vadd.f32 %v859, %v69
    %v862 = vmul.f32 %v861, 0.5
    %v863 = vtanh.pop %v862
    %v864 = vmul.f32 %v863, 0.5
    %v865 = vadd.f32 %v864, 0.5
    %867 = vrot.lane.b32.xlu0 %v861, 32
    %v868 = vpop.permute.xlu0 %867
    %v870 = vmul.f32 %v865, %v868
    %872 = vrot.lane.b32.xlu0 %v870, 64
    %v873 = vpop.permute.xlu0 %872
    %v875 = vadd.f32 %v861, %v873
    %v876 = vtanh.pop %v875
    %v877 = vsub.f32 1.0, %v865
    %879 = vrot.lane.b32.xlu0 %v876, 96
    %v880 = vpop.permute.xlu0 %879
    %v882 = vmul.f32 %v877, %v880
    %v883 = vmul.f32 %v865, %v777
    %v884 = vadd.f32 %v882, %v883
    %886 = vrot.lane.b32.xlu0 %v884, 96
    %v887 = vpop.permute.xlu0 %886
    %s889 = scalar_lea.vmem [#allocation8], 48
    %890 = vst.msk [vmem:[%s889] sm:$0xff] %vm82, %v887
    %s891 = scalar_lea.vmem [#allocation2], 64
    %v892 = vld [vmem:[%s891] sm:$0xff]
    %894 = vrot.lane.b32.xlu0 %v835, 96
    %v895 = vpop.permute.xlu0 %894
    %v896 = vsel %vm82, %v895, 0
    %898 = vmatpush.msra.mxu0 0.0
    %899 = vmatpush.msra.mxu0 0.0
    %900 = vmatpush.msra.mxu0 0.0
    %901 = vmatpush.msra.mxu0 0.0
    %902 = vmatpush.msra.mxu0 0.0
    %903 = vmatpush.msra.mxu0 0.0
    %904 = vmatpush.msra.mxu0 0.0
    %905 = vmatpush.msra.mxu0 0.0
    %906 = vmatpush.msra.mxu0 0.0
    %907 = vmatpush.msra.mxu0 0.0
    %908 = vmatpush.msra.mxu0 0.0
    %909 = vmatpush.msra.mxu0 0.0
    %910 = vmatpush.msra.mxu0 %v65
    %911 = vmatpush.msra.mxu0 %v64
    %912 = vmatpush.msra.mxu0 %v63
    %913 = vmatpush.msra.mxu0 %v62
    %914 = vmatmul.f32.gmra.mxu0 %v896
    %v915 = vpop.f32.mrf.mxu0
    %v916 = vadd.f32 0.0, %v915
    %917 = vdwg.mxu0
    %v918 = vadd.f32 %v892, %v916
    %v919 = vmul.f32 %v918, 0.5
    %v920 = vtanh.pop %v919
    %v921 = vmul.f32 %v920, 0.5
    %v922 = vadd.f32 %v921, 0.5
    %v923 = vadd.f32 %v916, %v113
    %925 = vrot.lane.b32.xlu0 %v923, 64
    %v926 = vpop.permute.xlu0 %925
    %v928 = vmul.f32 %v922, %v926
    %930 = vrot.lane.b32.xlu0 %v928, 64
    %v931 = vpop.permute.xlu0 %930
    %v933 = vadd.f32 %v892, %v931
    %v934 = vtanh.pop %v933
    %v935 = vsub.f32 1.0, %v922
    %937 = vrot.lane.b32.xlu0 %v934, 96
    %v938 = vpop.permute.xlu0 %937
    %v940 = vmul.f32 %v935, %v938
    %v941 = vmul.f32 %v922, %v835
    %v942 = vadd.f32 %v940, %v941
    %v944 = vsel %vm82, %v895, %v884
    %v946 = vsel %vm196, %v944, 0
    %948 = vmatpush.msra.mxu0 0.0
    %949 = vmatpush.msra.mxu0 0.0
    %950 = vmatpush.msra.mxu0 0.0
    %951 = vmatpush.msra.mxu0 0.0
    %952 = vmatpush.msra.mxu0 0.0
    %953 = vmatpush.msra.mxu0 0.0
    %954 = vmatpush.msra.mxu0 0.0
    %955 = vmatpush.msra.mxu0 0.0
    %956 = vmatpush.msra.mxu0 %v77
    %957 = vmatpush.msra.mxu0 %v76
    %958 = vmatpush.msra.mxu0 %v75
    %959 = vmatpush.msra.mxu0 %v74
    %960 = vmatpush.msra.mxu0 %v73
    %961 = vmatpush.msra.mxu0 %v72
    %962 = vmatpush.msra.mxu0 %v71
    %963 = vmatpush.msra.mxu0 %v70
    %964 = vmatmul.f32.gmra.mxu0 %v946
    %v965 = vpop.f32.mrf.mxu0
    %v966 = vadd.f32 0.0, %v965
    %967 = vdwg.mxu0
    %v968 = vadd.f32 %v966, %v69
    %v969 = vmul.f32 %v968, 0.5
    %v970 = vtanh.pop %v969
    %v971 = vmul.f32 %v970, 0.5
    %v972 = vadd.f32 %v971, 0.5
    %974 = vrot.lane.b32.xlu0 %v968, 32
    %v975 = vpop.permute.xlu0 %974
    %v977 = vmul.f32 %v972, %v975
    %979 = vrot.lane.b32.xlu0 %v977, 64
    %v980 = vpop.permute.xlu0 %979
    %v982 = vadd.f32 %v968, %v980
    %v983 = vtanh.pop %v982
    %v984 = vsub.f32 1.0, %v972
    %986 = vrot.lane.b32.xlu0 %v983, 96
    %v987 = vpop.permute.xlu0 %986
    %v989 = vmul.f32 %v984, %v987
    %v990 = vmul.f32 %v972, %v884
    %v991 = vadd.f32 %v989, %v990
    %993 = vrot.lane.b32.xlu0 %v991, 96
    %v994 = vpop.permute.xlu0 %993
    %s996 = scalar_lea.vmem [#allocation8], 56
    %997 = vst.msk [vmem:[%s996] sm:$0xff] %vm82, %v994
    %s998 = scalar_lea.vmem [#allocation2], 72
    %v999 = vld [vmem:[%s998] sm:$0xff]
    %1001 = vrot.lane.b32.xlu0 %v942, 96
    %v1002 = vpop.permute.xlu0 %1001
    %v1003 = vsel %vm82, %v1002, 0
    %1005 = vmatpush.msra.mxu0 0.0
    %1006 = vmatpush.msra.mxu0 0.0
    %1007 = vmatpush.msra.mxu0 0.0
    %1008 = vmatpush.msra.mxu0 0.0
    %1009 = vmatpush.msra.mxu0 0.0
    %1010 = vmatpush.msra.mxu0 0.0
    %1011 = vmatpush.msra.mxu0 0.0
    %1012 = vmatpush.msra.mxu0 0.0
    %1013 = vmatpush.msra.mxu0 0.0
    %1014 = vmatpush.msra.mxu0 0.0
    %1015 = vmatpush.msra.mxu0 0.0
    %1016 = vmatpush.msra.mxu0 0.0
    %1017 = vmatpush.msra.mxu0 %v65
    %1018 = vmatpush.msra.mxu0 %v64
    %1019 = vmatpush.msra.mxu0 %v63
    %1020 = vmatpush.msra.mxu0 %v62
    %1021 = vmatmul.f32.gmra.mxu0 %v1003
    %v1022 = vpop.f32.mrf.mxu0
    %v1023 = vadd.f32 0.0, %v1022
    %1024 = vdwg.mxu0
    %v1025 = vadd.f32 %v999, %v1023
    %v1026 = vmul.f32 %v1025, 0.5
    %v1027 = vtanh.pop %v1026
    %v1028 = vmul.f32 %v1027, 0.5
    %v1029 = vadd.f32 %v1028, 0.5
    %v1030 = vadd.f32 %v1023, %v113
    %1032 = vrot.lane.b32.xlu0 %v1030, 64
    %v1033 = vpop.permute.xlu0 %1032
    %v1035 = vmul.f32 %v1029, %v1033
    %1037 = vrot.lane.b32.xlu0 %v1035, 64
    %v1038 = vpop.permute.xlu0 %1037
    %v1040 = vadd.f32 %v999, %v1038
    %v1041 = vtanh.pop %v1040
    %v1042 = vsub.f32 1.0, %v1029
    %1044 = vrot.lane.b32.xlu0 %v1041, 96
    %v1045 = vpop.permute.xlu0 %1044
    %v1047 = vmul.f32 %v1042, %v1045
    %v1048 = vmul.f32 %v1029, %v942
    %v1049 = vadd.f32 %v1047, %v1048
    %v1051 = vsel %vm82, %v1002, %v991
    %v1053 = vsel %vm196, %v1051, 0
    %1055 = vmatpush.msra.mxu0 0.0
    %1056 = vmatpush.msra.mxu0 0.0
    %1057 = vmatpush.msra.mxu0 0.0
    %1058 = vmatpush.msra.mxu0 0.0
    %1059 = vmatpush.msra.mxu0 0.0
    %1060 = vmatpush.msra.mxu0 0.0
    %1061 = vmatpush.msra.mxu0 0.0
    %1062 = vmatpush.msra.mxu0 0.0
    %1063 = vmatpush.msra.mxu0 %v77
    %1064 = vmatpush.msra.mxu0 %v76
    %1065 = vmatpush.msra.mxu0 %v75
    %1066 = vmatpush.msra.mxu0 %v74
    %1067 = vmatpush.msra.mxu0 %v73
    %1068 = vmatpush.msra.mxu0 %v72
    %1069 = vmatpush.msra.mxu0 %v71
    %1070 = vmatpush.msra.mxu0 %v70
    %1071 = vmatmul.f32.gmra.mxu0 %v1053
    %v1072 = vpop.f32.mrf.mxu0
    %v1073 = vadd.f32 0.0, %v1072
    %1074 = vdwg.mxu0
    %v1075 = vadd.f32 %v1073, %v69
    %v1076 = vmul.f32 %v1075, 0.5
    %v1077 = vtanh.pop %v1076
    %v1078 = vmul.f32 %v1077, 0.5
    %v1079 = vadd.f32 %v1078, 0.5
    %1081 = vrot.lane.b32.xlu0 %v1075, 32
    %v1082 = vpop.permute.xlu0 %1081
    %v1084 = vmul.f32 %v1079, %v1082
    %1086 = vrot.lane.b32.xlu0 %v1084, 64
    %v1087 = vpop.permute.xlu0 %1086
    %v1089 = vadd.f32 %v1075, %v1087
    %v1090 = vtanh.pop %v1089
    %v1091 = vsub.f32 1.0, %v1079
    %1093 = vrot.lane.b32.xlu0 %v1090, 96
    %v1094 = vpop.permute.xlu0 %1093
    %v1096 = vmul.f32 %v1091, %v1094
    %v1097 = vmul.f32 %v1079, %v991
    %v1098 = vadd.f32 %v1096, %v1097
    %1100 = vrot.lane.b32.xlu0 %v1098, 96
    %v1101 = vpop.permute.xlu0 %1100
    %s1103 = scalar_lea.vmem [#allocation8], 64
    %1104 = vst.msk [vmem:[%s1103] sm:$0xff] %vm82, %v1101
    %s1105 = scalar_lea.vmem [#allocation2], 80
    %v1106 = vld [vmem:[%s1105] sm:$0xff]
    %1108 = vrot.lane.b32.xlu0 %v1049, 96
    %v1109 = vpop.permute.xlu0 %1108
    %v1110 = vsel %vm82, %v1109, 0
    %1112 = vmatpush.msra.mxu0 0.0
    %1113 = vmatpush.msra.mxu0 0.0
    %1114 = vmatpush.msra.mxu0 0.0
    %1115 = vmatpush.msra.mxu0 0.0
    %1116 = vmatpush.msra.mxu0 0.0
    %1117 = vmatpush.msra.mxu0 0.0
    %1118 = vmatpush.msra.mxu0 0.0
    %1119 = vmatpush.msra.mxu0 0.0
    %1120 = vmatpush.msra.mxu0 0.0
    %1121 = vmatpush.msra.mxu0 0.0
    %1122 = vmatpush.msra.mxu0 0.0
    %1123 = vmatpush.msra.mxu0 0.0
    %1124 = vmatpush.msra.mxu0 %v65
    %1125 = vmatpush.msra.mxu0 %v64
    %1126 = vmatpush.msra.mxu0 %v63
    %1127 = vmatpush.msra.mxu0 %v62
    %1128 = vmatmul.f32.gmra.mxu0 %v1110
    %v1129 = vpop.f32.mrf.mxu0
    %v1130 = vadd.f32 0.0, %v1129
    %1131 = vdwg.mxu0
    %v1132 = vadd.f32 %v1106, %v1130
    %v1133 = vmul.f32 %v1132, 0.5
    %v1134 = vtanh.pop %v1133
    %v1135 = vmul.f32 %v1134, 0.5
    %v1136 = vadd.f32 %v1135, 0.5
    %v1137 = vadd.f32 %v1130, %v113
    %1139 = vrot.lane.b32.xlu0 %v1137, 64
    %v1140 = vpop.permute.xlu0 %1139
    %v1142 = vmul.f32 %v1136, %v1140
    %1144 = vrot.lane.b32.xlu0 %v1142, 64
    %v1145 = vpop.permute.xlu0 %1144
    %v1147 = vadd.f32 %v1106, %v1145
    %v1148 = vtanh.pop %v1147
    %v1149 = vsub.f32 1.0, %v1136
    %1151 = vrot.lane.b32.xlu0 %v1148, 96
    %v1152 = vpop.permute.xlu0 %1151
    %v1154 = vmul.f32 %v1149, %v1152
    %v1155 = vmul.f32 %v1136, %v1049
    %v1156 = vadd.f32 %v1154, %v1155
    %v1158 = vsel %vm82, %v1109, %v1098
    %v1160 = vsel %vm196, %v1158, 0
    %1162 = vmatpush.msra.mxu0 0.0
    %1163 = vmatpush.msra.mxu0 0.0
    %1164 = vmatpush.msra.mxu0 0.0
    %1165 = vmatpush.msra.mxu0 0.0
    %1166 = vmatpush.msra.mxu0 0.0
    %1167 = vmatpush.msra.mxu0 0.0
    %1168 = vmatpush.msra.mxu0 0.0
    %1169 = vmatpush.msra.mxu0 0.0
    %1170 = vmatpush.msra.mxu0 %v77
    %1171 = vmatpush.msra.mxu0 %v76
    %1172 = vmatpush.msra.mxu0 %v75
    %1173 = vmatpush.msra.mxu0 %v74
    %1174 = vmatpush.msra.mxu0 %v73
    %1175 = vmatpush.msra.mxu0 %v72
    %1176 = vmatpush.msra.mxu0 %v71
    %1177 = vmatpush.msra.mxu0 %v70
    %1178 = vmatmul.f32.gmra.mxu0 %v1160
    %v1179 = vpop.f32.mrf.mxu0
    %v1180 = vadd.f32 0.0, %v1179
    %1181 = vdwg.mxu0
    %v1182 = vadd.f32 %v1180, %v69
    %v1183 = vmul.f32 %v1182, 0.5
    %v1184 = vtanh.pop %v1183
    %v1185 = vmul.f32 %v1184, 0.5
    %v1186 = vadd.f32 %v1185, 0.5
    %1188 = vrot.lane.b32.xlu0 %v1182, 32
    %v1189 = vpop.permute.xlu0 %1188
    %v1191 = vmul.f32 %v1186, %v1189
    %1193 = vrot.lane.b32.xlu0 %v1191, 64
    %v1194 = vpop.permute.xlu0 %1193
    %v1196 = vadd.f32 %v1182, %v1194
    %v1197 = vtanh.pop %v1196
    %v1198 = vsub.f32 1.0, %v1186
    %1200 = vrot.lane.b32.xlu0 %v1197, 96
    %v1201 = vpop.permute.xlu0 %1200
    %v1203 = vmul.f32 %v1198, %v1201
    %v1204 = vmul.f32 %v1186, %v1098
    %v1205 = vadd.f32 %v1203, %v1204
    %1207 = vrot.lane.b32.xlu0 %v1205, 96
    %v1208 = vpop.permute.xlu0 %1207
    %s1210 = scalar_lea.vmem [#allocation8], 72
    %1211 = vst.msk [vmem:[%s1210] sm:$0xff] %vm82, %v1208
    %s1212 = scalar_lea.vmem [#allocation2], 88
    %v1213 = vld [vmem:[%s1212] sm:$0xff]
    %1215 = vrot.lane.b32.xlu0 %v1156, 96
    %v1216 = vpop.permute.xlu0 %1215
    %v1217 = vsel %vm82, %v1216, 0
    %1219 = vmatpush.msra.mxu0 0.0
    %1220 = vmatpush.msra.mxu0 0.0
    %1221 = vmatpush.msra.mxu0 0.0
    %1222 = vmatpush.msra.mxu0 0.0
    %1223 = vmatpush.msra.mxu0 0.0
    %1224 = vmatpush.msra.mxu0 0.0
    %1225 = vmatpush.msra.mxu0 0.0
    %1226 = vmatpush.msra.mxu0 0.0
    %1227 = vmatpush.msra.mxu0 0.0
    %1228 = vmatpush.msra.mxu0 0.0
    %1229 = vmatpush.msra.mxu0 0.0
    %1230 = vmatpush.msra.mxu0 0.0
    %1231 = vmatpush.msra.mxu0 %v65
    %1232 = vmatpush.msra.mxu0 %v64
    %1233 = vmatpush.msra.mxu0 %v63
    %1234 = vmatpush.msra.mxu0 %v62
    %1235 = vmatmul.f32.gmra.mxu0 %v1217
    %v1236 = vpop.f32.mrf.mxu0
    %v1237 = vadd.f32 0.0, %v1236
    %1238 = vdwg.mxu0
    %v1239 = vadd.f32 %v1213, %v1237
    %v1240 = vmul.f32 %v1239, 0.5
    %v1241 = vtanh.pop %v1240
    %v1242 = vmul.f32 %v1241, 0.5
    %v1243 = vadd.f32 %v1242, 0.5
    %v1244 = vadd.f32 %v1237, %v113
    %1246 = vrot.lane.b32.xlu0 %v1244, 64
    %v1247 = vpop.permute.xlu0 %1246
    %v1249 = vmul.f32 %v1243, %v1247
    %1251 = vrot.lane.b32.xlu0 %v1249, 64
    %v1252 = vpop.permute.xlu0 %1251
    %v1254 = vadd.f32 %v1213, %v1252
    %v1255 = vtanh.pop %v1254
    %v1256 = vsub.f32 1.0, %v1243
    %1258 = vrot.lane.b32.xlu0 %v1255, 96
    %v1259 = vpop.permute.xlu0 %1258
    %v1261 = vmul.f32 %v1256, %v1259
    %v1262 = vmul.f32 %v1243, %v1156
    %v1263 = vadd.f32 %v1261, %v1262
    %v1265 = vsel %vm82, %v1216, %v1205
    %v1267 = vsel %vm196, %v1265, 0
    %1269 = vmatpush.msra.mxu0 0.0
    %1270 = vmatpush.msra.mxu0 0.0
    %1271 = vmatpush.msra.mxu0 0.0
    %1272 = vmatpush.msra.mxu0 0.0
    %1273 = vmatpush.msra.mxu0 0.0
    %1274 = vmatpush.msra.mxu0 0.0
    %1275 = vmatpush.msra.mxu0 0.0
    %1276 = vmatpush.msra.mxu0 0.0
    %1277 = vmatpush.msra.mxu0 %v77
    %1278 = vmatpush.msra.mxu0 %v76
    %1279 = vmatpush.msra.mxu0 %v75
    %1280 = vmatpush.msra.mxu0 %v74
    %1281 = vmatpush.msra.mxu0 %v73
    %1282 = vmatpush.msra.mxu0 %v72
    %1283 = vmatpush.msra.mxu0 %v71
    %1284 = vmatpush.msra.mxu0 %v70
    %1285 = vmatmul.f32.gmra.mxu0 %v1267
    %v1286 = vpop.f32.mrf.mxu0
    %v1287 = vadd.f32 0.0, %v1286
    %1288 = vdwg.mxu0
    %v1289 = vadd.f32 %v1287, %v69
    %v1290 = vmul.f32 %v1289, 0.5
    %v1291 = vtanh.pop %v1290
    %v1292 = vmul.f32 %v1291, 0.5
    %v1293 = vadd.f32 %v1292, 0.5
    %1295 = vrot.lane.b32.xlu0 %v1289, 32
    %v1296 = vpop.permute.xlu0 %1295
    %v1298 = vmul.f32 %v1293, %v1296
    %1300 = vrot.lane.b32.xlu0 %v1298, 64
    %v1301 = vpop.permute.xlu0 %1300
    %v1303 = vadd.f32 %v1289, %v1301
    %v1304 = vtanh.pop %v1303
    %v1305 = vsub.f32 1.0, %v1293
    %1307 = vrot.lane.b32.xlu0 %v1304, 96
    %v1308 = vpop.permute.xlu0 %1307
    %v1310 = vmul.f32 %v1305, %v1308
    %v1311 = vmul.f32 %v1293, %v1205
    %v1312 = vadd.f32 %v1310, %v1311
    %1314 = vrot.lane.b32.xlu0 %v1312, 96
    %v1315 = vpop.permute.xlu0 %1314
    %s1317 = scalar_lea.vmem [#allocation8], 80
    %1318 = vst.msk [vmem:[%s1317] sm:$0xff] %vm82, %v1315
    %s1319 = scalar_lea.vmem [#allocation2], 96
    %v1320 = vld [vmem:[%s1319] sm:$0xff]
    %1322 = vrot.lane.b32.xlu0 %v1263, 96
    %v1323 = vpop.permute.xlu0 %1322
    %v1324 = vsel %vm82, %v1323, 0
    %1326 = vmatpush.msra.mxu0 0.0
    %1327 = vmatpush.msra.mxu0 0.0
    %1328 = vmatpush.msra.mxu0 0.0
    %1329 = vmatpush.msra.mxu0 0.0
    %1330 = vmatpush.msra.mxu0 0.0
    %1331 = vmatpush.msra.mxu0 0.0
    %1332 = vmatpush.msra.mxu0 0.0
    %1333 = vmatpush.msra.mxu0 0.0
    %1334 = vmatpush.msra.mxu0 0.0
    %1335 = vmatpush.msra.mxu0 0.0
    %1336 = vmatpush.msra.mxu0 0.0
    %1337 = vmatpush.msra.mxu0 0.0
    %1338 = vmatpush.msra.mxu0 %v65
    %1339 = vmatpush.msra.mxu0 %v64
    %1340 = vmatpush.msra.mxu0 %v63
    %1341 = vmatpush.msra.mxu0 %v62
    %1342 = vmatmul.f32.gmra.mxu0 %v1324
    %v1343 = vpop.f32.mrf.mxu0
    %v1344 = vadd.f32 0.0, %v1343
    %1345 = vdwg.mxu0
    %v1346 = vadd.f32 %v1320, %v1344
    %v1347 = vmul.f32 %v1346, 0.5
    %v1348 = vtanh.pop %v1347
    %v1349 = vmul.f32 %v1348, 0.5
    %v1350 = vadd.f32 %v1349, 0.5
    %v1351 = vadd.f32 %v1344, %v113
    %1353 = vrot.lane.b32.xlu0 %v1351, 64
    %v1354 = vpop.permute.xlu0 %1353
    %v1356 = vmul.f32 %v1350, %v1354
    %1358 = vrot.lane.b32.xlu0 %v1356, 64
    %v1359 = vpop.permute.xlu0 %1358
    %v1361 = vadd.f32 %v1320, %v1359
    %v1362 = vtanh.pop %v1361
    %v1363 = vsub.f32 1.0, %v1350
    %1365 = vrot.lane.b32.xlu0 %v1362, 96
    %v1366 = vpop.permute.xlu0 %1365
    %v1368 = vmul.f32 %v1363, %v1366
    %v1369 = vmul.f32 %v1350, %v1263
    %v1370 = vadd.f32 %v1368, %v1369
    %v1372 = vsel %vm82, %v1323, %v1312
    %v1374 = vsel %vm196, %v1372, 0
    %1376 = vmatpush.msra.mxu0 0.0
    %1377 = vmatpush.msra.mxu0 0.0
    %1378 = vmatpush.msra.mxu0 0.0
    %1379 = vmatpush.msra.mxu0 0.0
    %1380 = vmatpush.msra.mxu0 0.0
    %1381 = vmatpush.msra.mxu0 0.0
    %1382 = vmatpush.msra.mxu0 0.0
    %1383 = vmatpush.msra.mxu0 0.0
    %1384 = vmatpush.msra.mxu0 %v77
    %1385 = vmatpush.msra.mxu0 %v76
    %1386 = vmatpush.msra.mxu0 %v75
    %1387 = vmatpush.msra.mxu0 %v74
    %1388 = vmatpush.msra.mxu0 %v73
    %1389 = vmatpush.msra.mxu0 %v72
    %1390 = vmatpush.msra.mxu0 %v71
    %1391 = vmatpush.msra.mxu0 %v70
    %1392 = vmatmul.f32.gmra.mxu0 %v1374
    %v1393 = vpop.f32.mrf.mxu0
    %v1394 = vadd.f32 0.0, %v1393
    %1395 = vdwg.mxu0
    %v1396 = vadd.f32 %v1394, %v69
    %v1397 = vmul.f32 %v1396, 0.5
    %v1398 = vtanh.pop %v1397
    %v1399 = vmul.f32 %v1398, 0.5
    %v1400 = vadd.f32 %v1399, 0.5
    %1402 = vrot.lane.b32.xlu0 %v1396, 32
    %v1403 = vpop.permute.xlu0 %1402
    %v1405 = vmul.f32 %v1400, %v1403
    %1407 = vrot.lane.b32.xlu0 %v1405, 64
    %v1408 = vpop.permute.xlu0 %1407
    %v1410 = vadd.f32 %v1396, %v1408
    %v1411 = vtanh.pop %v1410
    %v1412 = vsub.f32 1.0, %v1400
    %1414 = vrot.lane.b32.xlu0 %v1411, 96
    %v1415 = vpop.permute.xlu0 %1414
    %v1417 = vmul.f32 %v1412, %v1415
    %v1418 = vmul.f32 %v1400, %v1312
    %v1419 = vadd.f32 %v1417, %v1418
    %1421 = vrot.lane.b32.xlu0 %v1419, 96
    %v1422 = vpop.permute.xlu0 %1421
    %s1424 = scalar_lea.vmem [#allocation8], 88
    %1425 = vst.msk [vmem:[%s1424] sm:$0xff] %vm82, %v1422
    %s1426 = scalar_lea.vmem [#allocation2], 104
    %v1427 = vld [vmem:[%s1426] sm:$0xff]
    %1429 = vrot.lane.b32.xlu0 %v1370, 96
    %v1430 = vpop.permute.xlu0 %1429
    %v1431 = vsel %vm82, %v1430, 0
    %1433 = vmatpush.msra.mxu0 0.0
    %1434 = vmatpush.msra.mxu0 0.0
    %1435 = vmatpush.msra.mxu0 0.0
    %1436 = vmatpush.msra.mxu0 0.0
    %1437 = vmatpush.msra.mxu0 0.0
    %1438 = vmatpush.msra.mxu0 0.0
    %1439 = vmatpush.msra.mxu0 0.0
    %1440 = vmatpush.msra.mxu0 0.0
    %1441 = vmatpush.msra.mxu0 0.0
    %1442 = vmatpush.msra.mxu0 0.0
    %1443 = vmatpush.msra.mxu0 0.0
    %1444 = vmatpush.msra.mxu0 0.0
    %1445 = vmatpush.msra.mxu0 %v65
    %1446 = vmatpush.msra.mxu0 %v64
    %1447 = vmatpush.msra.mxu0 %v63
    %1448 = vmatpush.msra.mxu0 %v62
    %1449 = vmatmul.f32.gmra.mxu0 %v1431
    %v1450 = vpop.f32.mrf.mxu0
    %v1451 = vadd.f32 0.0, %v1450
    %1452 = vdwg.mxu0
    %v1453 = vadd.f32 %v1427, %v1451
    %v1454 = vmul.f32 %v1453, 0.5
    %v1455 = vtanh.pop %v1454
    %v1456 = vmul.f32 %v1455, 0.5
    %v1457 = vadd.f32 %v1456, 0.5
    %v1458 = vadd.f32 %v1451, %v113
    %1460 = vrot.lane.b32.xlu0 %v1458, 64
    %v1461 = vpop.permute.xlu0 %1460
    %v1463 = vmul.f32 %v1457, %v1461
    %1465 = vrot.lane.b32.xlu0 %v1463, 64
    %v1466 = vpop.permute.xlu0 %1465
    %v1468 = vadd.f32 %v1427, %v1466
    %v1469 = vtanh.pop %v1468
    %v1470 = vsub.f32 1.0, %v1457
    %1472 = vrot.lane.b32.xlu0 %v1469, 96
    %v1473 = vpop.permute.xlu0 %1472
    %v1475 = vmul.f32 %v1470, %v1473
    %v1476 = vmul.f32 %v1457, %v1370
    %v1477 = vadd.f32 %v1475, %v1476
    %v1479 = vsel %vm82, %v1430, %v1419
    %v1481 = vsel %vm196, %v1479, 0
    %1483 = vmatpush.msra.mxu0 0.0
    %1484 = vmatpush.msra.mxu0 0.0
    %1485 = vmatpush.msra.mxu0 0.0
    %1486 = vmatpush.msra.mxu0 0.0
    %1487 = vmatpush.msra.mxu0 0.0
    %1488 = vmatpush.msra.mxu0 0.0
    %1489 = vmatpush.msra.mxu0 0.0
    %1490 = vmatpush.msra.mxu0 0.0
    %1491 = vmatpush.msra.mxu0 %v77
    %1492 = vmatpush.msra.mxu0 %v76
    %1493 = vmatpush.msra.mxu0 %v75
    %1494 = vmatpush.msra.mxu0 %v74
    %1495 = vmatpush.msra.mxu0 %v73
    %1496 = vmatpush.msra.mxu0 %v72
    %1497 = vmatpush.msra.mxu0 %v71
    %1498 = vmatpush.msra.mxu0 %v70
    %1499 = vmatmul.f32.gmra.mxu0 %v1481
    %v1500 = vpop.f32.mrf.mxu0
    %v1501 = vadd.f32 0.0, %v1500
    %1502 = vdwg.mxu0
    %v1503 = vadd.f32 %v1501, %v69
    %v1504 = vmul.f32 %v1503, 0.5
    %v1505 = vtanh.pop %v1504
    %v1506 = vmul.f32 %v1505, 0.5
    %v1507 = vadd.f32 %v1506, 0.5
    %1509 = vrot.lane.b32.xlu0 %v1503, 32
    %v1510 = vpop.permute.xlu0 %1509
    %v1512 = vmul.f32 %v1507, %v1510
    %1514 = vrot.lane.b32.xlu0 %v1512, 64
    %v1515 = vpop.permute.xlu0 %1514
    %v1517 = vadd.f32 %v1503, %v1515
    %v1518 = vtanh.pop %v1517
    %v1519 = vsub.f32 1.0, %v1507
    %1521 = vrot.lane.b32.xlu0 %v1518, 96
    %v1522 = vpop.permute.xlu0 %1521
    %v1524 = vmul.f32 %v1519, %v1522
    %v1525 = vmul.f32 %v1507, %v1419
    %v1526 = vadd.f32 %v1524, %v1525
    %1528 = vrot.lane.b32.xlu0 %v1526, 96
    %v1529 = vpop.permute.xlu0 %1528
    %s1531 = scalar_lea.vmem [#allocation8], 96
    %1532 = vst.msk [vmem:[%s1531] sm:$0xff] %vm82, %v1529
    %s1533 = scalar_lea.vmem [#allocation2], 112
    %v1534 = vld [vmem:[%s1533] sm:$0xff]
    %1536 = vrot.lane.b32.xlu0 %v1477, 96
    %v1537 = vpop.permute.xlu0 %1536
    %v1538 = vsel %vm82, %v1537, 0
    %1540 = vmatpush.msra.mxu0 0.0
    %1541 = vmatpush.msra.mxu0 0.0
    %1542 = vmatpush.msra.mxu0 0.0
    %1543 = vmatpush.msra.mxu0 0.0
    %1544 = vmatpush.msra.mxu0 0.0
    %1545 = vmatpush.msra.mxu0 0.0
    %1546 = vmatpush.msra.mxu0 0.0
    %1547 = vmatpush.msra.mxu0 0.0
    %1548 = vmatpush.msra.mxu0 0.0
    %1549 = vmatpush.msra.mxu0 0.0
    %1550 = vmatpush.msra.mxu0 0.0
    %1551 = vmatpush.msra.mxu0 0.0
    %1552 = vmatpush.msra.mxu0 %v65
    %1553 = vmatpush.msra.mxu0 %v64
    %1554 = vmatpush.msra.mxu0 %v63
    %1555 = vmatpush.msra.mxu0 %v62
    %1556 = vmatmul.f32.gmra.mxu0 %v1538
    %v1557 = vpop.f32.mrf.mxu0
    %v1558 = vadd.f32 0.0, %v1557
    %1559 = vdwg.mxu0
    %v1560 = vadd.f32 %v1534, %v1558
    %v1561 = vmul.f32 %v1560, 0.5
    %v1562 = vtanh.pop %v1561
    %v1563 = vmul.f32 %v1562, 0.5
    %v1564 = vadd.f32 %v1563, 0.5
    %v1565 = vadd.f32 %v1558, %v113
    %1567 = vrot.lane.b32.xlu0 %v1565, 64
    %v1568 = vpop.permute.xlu0 %1567
    %v1570 = vmul.f32 %v1564, %v1568
    %1572 = vrot.lane.b32.xlu0 %v1570, 64
    %v1573 = vpop.permute.xlu0 %1572
    %v1575 = vadd.f32 %v1534, %v1573
    %v1576 = vtanh.pop %v1575
    %v1577 = vsub.f32 1.0, %v1564
    %1579 = vrot.lane.b32.xlu0 %v1576, 96
    %v1580 = vpop.permute.xlu0 %1579
    %v1582 = vmul.f32 %v1577, %v1580
    %v1583 = vmul.f32 %v1564, %v1477
    %v1584 = vadd.f32 %v1582, %v1583
    %v1586 = vsel %vm82, %v1537, %v1526
    %v1588 = vsel %vm196, %v1586, 0
    %1590 = vmatpush.msra.mxu0 0.0
    %1591 = vmatpush.msra.mxu0 0.0
    %1592 = vmatpush.msra.mxu0 0.0
    %1593 = vmatpush.msra.mxu0 0.0
    %1594 = vmatpush.msra.mxu0 0.0
    %1595 = vmatpush.msra.mxu0 0.0
    %1596 = vmatpush.msra.mxu0 0.0
    %1597 = vmatpush.msra.mxu0 0.0
    %1598 = vmatpush.msra.mxu0 %v77
    %1599 = vmatpush.msra.mxu0 %v76
    %1600 = vmatpush.msra.mxu0 %v75
    %1601 = vmatpush.msra.mxu0 %v74
    %1602 = vmatpush.msra.mxu0 %v73
    %1603 = vmatpush.msra.mxu0 %v72
    %1604 = vmatpush.msra.mxu0 %v71
    %1605 = vmatpush.msra.mxu0 %v70
    %1606 = vmatmul.f32.gmra.mxu0 %v1588
    %v1607 = vpop.f32.mrf.mxu0
    %v1608 = vadd.f32 0.0, %v1607
    %1609 = vdwg.mxu0
    %v1610 = vadd.f32 %v1608, %v69
    %v1611 = vmul.f32 %v1610, 0.5
    %v1612 = vtanh.pop %v1611
    %v1613 = vmul.f32 %v1612, 0.5
    %v1614 = vadd.f32 %v1613, 0.5
    %1616 = vrot.lane.b32.xlu0 %v1610, 32
    %v1617 = vpop.permute.xlu0 %1616
    %v1619 = vmul.f32 %v1614, %v1617
    %1621 = vrot.lane.b32.xlu0 %v1619, 64
    %v1622 = vpop.permute.xlu0 %1621
    %v1624 = vadd.f32 %v1610, %v1622
    %v1625 = vtanh.pop %v1624
    %v1626 = vsub.f32 1.0, %v1614
    %1628 = vrot.lane.b32.xlu0 %v1625, 96
    %v1629 = vpop.permute.xlu0 %1628
    %v1631 = vmul.f32 %v1626, %v1629
    %v1632 = vmul.f32 %v1614, %v1526
    %v1633 = vadd.f32 %v1631, %v1632
    %1635 = vrot.lane.b32.xlu0 %v1633, 96
    %v1636 = vpop.permute.xlu0 %1635
    %s1638 = scalar_lea.vmem [#allocation8], 104
    %1639 = vst.msk [vmem:[%s1638] sm:$0xff] %vm82, %v1636
    %s1640 = scalar_lea.vmem [#allocation2], 120
    %v1641 = vld [vmem:[%s1640] sm:$0xff]
    %1643 = vrot.lane.b32.xlu0 %v1584, 96
    %v1644 = vpop.permute.xlu0 %1643
    %v1645 = vsel %vm82, %v1644, 0
    %1647 = vmatpush.msra.mxu0 0.0
    %1648 = vmatpush.msra.mxu0 0.0
    %1649 = vmatpush.msra.mxu0 0.0
    %1650 = vmatpush.msra.mxu0 0.0
    %1651 = vmatpush.msra.mxu0 0.0
    %1652 = vmatpush.msra.mxu0 0.0
    %1653 = vmatpush.msra.mxu0 0.0
    %1654 = vmatpush.msra.mxu0 0.0
    %1655 = vmatpush.msra.mxu0 0.0
    %1656 = vmatpush.msra.mxu0 0.0
    %1657 = vmatpush.msra.mxu0 0.0
    %1658 = vmatpush.msra.mxu0 0.0
    %1659 = vmatpush.msra.mxu0 %v65
    %1660 = vmatpush.msra.mxu0 %v64
    %1661 = vmatpush.msra.mxu0 %v63
    %1662 = vmatpush.msra.mxu0 %v62
    %1663 = vmatmul.f32.gmra.mxu0 %v1645
    %v1664 = vpop.f32.mrf.mxu0
    %v1665 = vadd.f32 0.0, %v1664
    %1666 = vdwg.mxu0
    %v1667 = vadd.f32 %v1641, %v1665
    %v1668 = vmul.f32 %v1667, 0.5
    %v1669 = vtanh.pop %v1668
    %v1670 = vmul.f32 %v1669, 0.5
    %v1671 = vadd.f32 %v1670, 0.5
    %v1672 = vadd.f32 %v1665, %v113
    %1674 = vrot.lane.b32.xlu0 %v1672, 64
    %v1675 = vpop.permute.xlu0 %1674
    %v1677 = vmul.f32 %v1671, %v1675
    %1679 = vrot.lane.b32.xlu0 %v1677, 64
    %v1680 = vpop.permute.xlu0 %1679
    %v1682 = vadd.f32 %v1641, %v1680
    %v1683 = vtanh.pop %v1682
    %v1684 = vsub.f32 1.0, %v1671
    %1686 = vrot.lane.b32.xlu0 %v1683, 96
    %v1687 = vpop.permute.xlu0 %1686
    %v1689 = vmul.f32 %v1684, %v1687
    %v1690 = vmul.f32 %v1671, %v1584
    %v1691 = vadd.f32 %v1689, %v1690
    %v1693 = vsel %vm82, %v1644, %v1633
    %v1695 = vsel %vm196, %v1693, 0
    %1697 = vmatpush.msra.mxu0 0.0
    %1698 = vmatpush.msra.mxu0 0.0
    %1699 = vmatpush.msra.mxu0 0.0
    %1700 = vmatpush.msra.mxu0 0.0
    %1701 = vmatpush.msra.mxu0 0.0
    %1702 = vmatpush.msra.mxu0 0.0
    %1703 = vmatpush.msra.mxu0 0.0
    %1704 = vmatpush.msra.mxu0 0.0
    %1705 = vmatpush.msra.mxu0 %v77
    %1706 = vmatpush.msra.mxu0 %v76
    %1707 = vmatpush.msra.mxu0 %v75
    %1708 = vmatpush.msra.mxu0 %v74
    %1709 = vmatpush.msra.mxu0 %v73
    %1710 = vmatpush.msra.mxu0 %v72
    %1711 = vmatpush.msra.mxu0 %v71
    %1712 = vmatpush.msra.mxu0 %v70
    %1713 = vmatmul.f32.gmra.mxu0 %v1695
    %v1714 = vpop.f32.mrf.mxu0
    %v1715 = vadd.f32 0.0, %v1714
    %1716 = vdwg.mxu0
    %v1717 = vadd.f32 %v1715, %v69
    %v1718 = vmul.f32 %v1717, 0.5
    %v1719 = vtanh.pop %v1718
    %v1720 = vmul.f32 %v1719, 0.5
    %v1721 = vadd.f32 %v1720, 0.5
    %1723 = vrot.lane.b32.xlu0 %v1717, 32
    %v1724 = vpop.permute.xlu0 %1723
    %v1726 = vmul.f32 %v1721, %v1724
    %1728 = vrot.lane.b32.xlu0 %v1726, 64
    %v1729 = vpop.permute.xlu0 %1728
    %v1731 = vadd.f32 %v1717, %v1729
    %v1732 = vtanh.pop %v1731
    %v1733 = vsub.f32 1.0, %v1721
    %1735 = vrot.lane.b32.xlu0 %v1732, 96
    %v1736 = vpop.permute.xlu0 %1735
    %v1738 = vmul.f32 %v1733, %v1736
    %v1739 = vmul.f32 %v1721, %v1633
    %v1740 = vadd.f32 %v1738, %v1739
    %1742 = vrot.lane.b32.xlu0 %v1740, 96
    %v1743 = vpop.permute.xlu0 %1742
    %s1745 = scalar_lea.vmem [#allocation8], 112
    %1746 = vst.msk [vmem:[%s1745] sm:$0xff] %vm82, %v1743
    %s1747 = scalar_lea.vmem [#allocation2], 128
    %v1748 = vld [vmem:[%s1747] sm:$0xff]
    %1750 = vrot.lane.b32.xlu0 %v1691, 96
    %v1751 = vpop.permute.xlu0 %1750
    %v1752 = vsel %vm82, %v1751, 0
    %1754 = vmatpush.msra.mxu0 0.0
    %1755 = vmatpush.msra.mxu0 0.0
    %1756 = vmatpush.msra.mxu0 0.0
    %1757 = vmatpush.msra.mxu0 0.0
    %1758 = vmatpush.msra.mxu0 0.0
    %1759 = vmatpush.msra.mxu0 0.0
    %1760 = vmatpush.msra.mxu0 0.0
    %1761 = vmatpush.msra.mxu0 0.0
    %1762 = vmatpush.msra.mxu0 0.0
    %1763 = vmatpush.msra.mxu0 0.0
    %1764 = vmatpush.msra.mxu0 0.0
    %1765 = vmatpush.msra.mxu0 0.0
    %1766 = vmatpush.msra.mxu0 %v65
    %1767 = vmatpush.msra.mxu0 %v64
    %1768 = vmatpush.msra.mxu0 %v63
    %1769 = vmatpush.msra.mxu0 %v62
    %1770 = vmatmul.f32.gmra.mxu0 %v1752
    %v1771 = vpop.f32.mrf.mxu0
    %v1772 = vadd.f32 0.0, %v1771
    %1773 = vdwg.mxu0
    %v1774 = vadd.f32 %v1748, %v1772
    %v1775 = vmul.f32 %v1774, 0.5
    %v1776 = vtanh.pop %v1775
    %v1777 = vmul.f32 %v1776, 0.5
    %v1778 = vadd.f32 %v1777, 0.5
    %v1779 = vadd.f32 %v1772, %v113
    %1781 = vrot.lane.b32.xlu0 %v1779, 64
    %v1782 = vpop.permute.xlu0 %1781
    %v1784 = vmul.f32 %v1778, %v1782
    %1786 = vrot.lane.b32.xlu0 %v1784, 64
    %v1787 = vpop.permute.xlu0 %1786
    %v1789 = vadd.f32 %v1748, %v1787
    %v1790 = vtanh.pop %v1789
    %v1791 = vsub.f32 1.0, %v1778
    %1793 = vrot.lane.b32.xlu0 %v1790, 96
    %v1794 = vpop.permute.xlu0 %1793
    %v1796 = vmul.f32 %v1791, %v1794
    %v1797 = vmul.f32 %v1778, %v1691
    %v1798 = vadd.f32 %v1796, %v1797
    %v1800 = vsel %vm82, %v1751, %v1740
    %v1802 = vsel %vm196, %v1800, 0
    %1804 = vmatpush.msra.mxu0 0.0
    %1805 = vmatpush.msra.mxu0 0.0
    %1806 = vmatpush.msra.mxu0 0.0
    %1807 = vmatpush.msra.mxu0 0.0
    %1808 = vmatpush.msra.mxu0 0.0
    %1809 = vmatpush.msra.mxu0 0.0
    %1810 = vmatpush.msra.mxu0 0.0
    %1811 = vmatpush.msra.mxu0 0.0
    %1812 = vmatpush.msra.mxu0 %v77
    %1813 = vmatpush.msra.mxu0 %v76
    %1814 = vmatpush.msra.mxu0 %v75
    %1815 = vmatpush.msra.mxu0 %v74
    %1816 = vmatpush.msra.mxu0 %v73
    %1817 = vmatpush.msra.mxu0 %v72
    %1818 = vmatpush.msra.mxu0 %v71
    %1819 = vmatpush.msra.mxu0 %v70
    %1820 = vmatmul.f32.gmra.mxu0 %v1802
    %v1821 = vpop.f32.mrf.mxu0
    %v1822 = vadd.f32 0.0, %v1821
    %1823 = vdwg.mxu0
    %v1824 = vadd.f32 %v1822, %v69
    %v1825 = vmul.f32 %v1824, 0.5
    %v1826 = vtanh.pop %v1825
    %v1827 = vmul.f32 %v1826, 0.5
    %v1828 = vadd.f32 %v1827, 0.5
    %1830 = vrot.lane.b32.xlu0 %v1824, 32
    %v1831 = vpop.permute.xlu0 %1830
    %v1833 = vmul.f32 %v1828, %v1831
    %1835 = vrot.lane.b32.xlu0 %v1833, 64
    %v1836 = vpop.permute.xlu0 %1835
    %v1838 = vadd.f32 %v1824, %v1836
    %v1839 = vtanh.pop %v1838
    %v1840 = vsub.f32 1.0, %v1828
    %1842 = vrot.lane.b32.xlu0 %v1839, 96
    %v1843 = vpop.permute.xlu0 %1842
    %v1845 = vmul.f32 %v1840, %v1843
    %v1846 = vmul.f32 %v1828, %v1740
    %v1847 = vadd.f32 %v1845, %v1846
    %1849 = vrot.lane.b32.xlu0 %v1847, 96
    %v1850 = vpop.permute.xlu0 %1849
    %s1852 = scalar_lea.vmem [#allocation8], 120
    %1853 = vst.msk [vmem:[%s1852] sm:$0xff] %vm82, %v1850
    %s1854 = scalar_lea.vmem [#allocation2], 136
    %v1855 = vld [vmem:[%s1854] sm:$0xff]
    %1857 = vrot.lane.b32.xlu0 %v1798, 96
    %v1858 = vpop.permute.xlu0 %1857
    %v1859 = vsel %vm82, %v1858, 0
    %1861 = vmatpush.msra.mxu0 0.0
    %1862 = vmatpush.msra.mxu0 0.0
    %1863 = vmatpush.msra.mxu0 0.0
    %1864 = vmatpush.msra.mxu0 0.0
    %1865 = vmatpush.msra.mxu0 0.0
    %1866 = vmatpush.msra.mxu0 0.0
    %1867 = vmatpush.msra.mxu0 0.0
    %1868 = vmatpush.msra.mxu0 0.0
    %1869 = vmatpush.msra.mxu0 0.0
    %1870 = vmatpush.msra.mxu0 0.0
    %1871 = vmatpush.msra.mxu0 0.0
    %1872 = vmatpush.msra.mxu0 0.0
    %1873 = vmatpush.msra.mxu0 %v65
    %1874 = vmatpush.msra.mxu0 %v64
    %1875 = vmatpush.msra.mxu0 %v63
    %1876 = vmatpush.msra.mxu0 %v62
    %1877 = vmatmul.f32.gmra.mxu0 %v1859
    %v1878 = vpop.f32.mrf.mxu0
    %v1879 = vadd.f32 0.0, %v1878
    %1880 = vdwg.mxu0
    %v1881 = vadd.f32 %v1855, %v1879
    %v1882 = vmul.f32 %v1881, 0.5
    %v1883 = vtanh.pop %v1882
    %v1884 = vmul.f32 %v1883, 0.5
    %v1885 = vadd.f32 %v1884, 0.5
    %v1886 = vadd.f32 %v1879, %v113
    %1888 = vrot.lane.b32.xlu0 %v1886, 64
    %v1889 = vpop.permute.xlu0 %1888
    %v1891 = vmul.f32 %v1885, %v1889
    %1893 = vrot.lane.b32.xlu0 %v1891, 64
    %v1894 = vpop.permute.xlu0 %1893
    %v1896 = vadd.f32 %v1855, %v1894
    %v1897 = vtanh.pop %v1896
    %v1898 = vsub.f32 1.0, %v1885
    %1900 = vrot.lane.b32.xlu0 %v1897, 96
    %v1901 = vpop.permute.xlu0 %1900
    %v1903 = vmul.f32 %v1898, %v1901
    %v1904 = vmul.f32 %v1885, %v1798
    %v1905 = vadd.f32 %v1903, %v1904
    %v1907 = vsel %vm82, %v1858, %v1847
    %v1909 = vsel %vm196, %v1907, 0
    %1911 = vmatpush.msra.mxu0 0.0
    %1912 = vmatpush.msra.mxu0 0.0
    %1913 = vmatpush.msra.mxu0 0.0
    %1914 = vmatpush.msra.mxu0 0.0
    %1915 = vmatpush.msra.mxu0 0.0
    %1916 = vmatpush.msra.mxu0 0.0
    %1917 = vmatpush.msra.mxu0 0.0
    %1918 = vmatpush.msra.mxu0 0.0
    %1919 = vmatpush.msra.mxu0 %v77
    %1920 = vmatpush.msra.mxu0 %v76
    %1921 = vmatpush.msra.mxu0 %v75
    %1922 = vmatpush.msra.mxu0 %v74
    %1923 = vmatpush.msra.mxu0 %v73
    %1924 = vmatpush.msra.mxu0 %v72
    %1925 = vmatpush.msra.mxu0 %v71
    %1926 = vmatpush.msra.mxu0 %v70
    %1927 = vmatmul.f32.gmra.mxu0 %v1909
    %v1928 = vpop.f32.mrf.mxu0
    %v1929 = vadd.f32 0.0, %v1928
    %1930 = vdwg.mxu0
    %v1931 = vadd.f32 %v1929, %v69
    %v1932 = vmul.f32 %v1931, 0.5
    %v1933 = vtanh.pop %v1932
    %v1934 = vmul.f32 %v1933, 0.5
    %v1935 = vadd.f32 %v1934, 0.5
    %1937 = vrot.lane.b32.xlu0 %v1931, 32
    %v1938 = vpop.permute.xlu0 %1937
    %v1940 = vmul.f32 %v1935, %v1938
    %1942 = vrot.lane.b32.xlu0 %v1940, 64
    %v1943 = vpop.permute.xlu0 %1942
    %v1945 = vadd.f32 %v1931, %v1943
    %v1946 = vtanh.pop %v1945
    %v1947 = vsub.f32 1.0, %v1935
    %1949 = vrot.lane.b32.xlu0 %v1946, 96
    %v1950 = vpop.permute.xlu0 %1949
    %v1952 = vmul.f32 %v1947, %v1950
    %v1953 = vmul.f32 %v1935, %v1847
    %v1954 = vadd.f32 %v1952, %v1953
    %1956 = vrot.lane.b32.xlu0 %v1954, 96
    %v1957 = vpop.permute.xlu0 %1956
    %s1959 = scalar_lea.vmem [#allocation8], 128
    %1960 = vst.msk [vmem:[%s1959] sm:$0xff] %vm82, %v1957
    %s1961 = scalar_lea.vmem [#allocation2], 144
    %v1962 = vld [vmem:[%s1961] sm:$0xff]
    %1964 = vrot.lane.b32.xlu0 %v1905, 96
    %v1965 = vpop.permute.xlu0 %1964
    %v1966 = vsel %vm82, %v1965, 0
    %1968 = vmatpush.msra.mxu0 0.0
    %1969 = vmatpush.msra.mxu0 0.0
    %1970 = vmatpush.msra.mxu0 0.0
    %1971 = vmatpush.msra.mxu0 0.0
    %1972 = vmatpush.msra.mxu0 0.0
    %1973 = vmatpush.msra.mxu0 0.0
    %1974 = vmatpush.msra.mxu0 0.0
    %1975 = vmatpush.msra.mxu0 0.0
    %1976 = vmatpush.msra.mxu0 0.0
    %1977 = vmatpush.msra.mxu0 0.0
    %1978 = vmatpush.msra.mxu0 0.0
    %1979 = vmatpush.msra.mxu0 0.0
    %1980 = vmatpush.msra.mxu0 %v65
    %1981 = vmatpush.msra.mxu0 %v64
    %1982 = vmatpush.msra.mxu0 %v63
    %1983 = vmatpush.msra.mxu0 %v62
    %1984 = vmatmul.f32.gmra.mxu0 %v1966
    %v1985 = vpop.f32.mrf.mxu0
    %v1986 = vadd.f32 0.0, %v1985
    %1987 = vdwg.mxu0
    %v1988 = vadd.f32 %v1962, %v1986
    %v1989 = vmul.f32 %v1988, 0.5
    %v1990 = vtanh.pop %v1989
    %v1991 = vmul.f32 %v1990, 0.5
    %v1992 = vadd.f32 %v1991, 0.5
    %v1993 = vadd.f32 %v1986, %v113
    %1995 = vrot.lane.b32.xlu0 %v1993, 64
    %v1996 = vpop.permute.xlu0 %1995
    %v1998 = vmul.f32 %v1992, %v1996
    %2000 = vrot.lane.b32.xlu0 %v1998, 64
    %v2001 = vpop.permute.xlu0 %2000
    %v2003 = vadd.f32 %v1962, %v2001
    %v2004 = vtanh.pop %v2003
    %v2005 = vsub.f32 1.0, %v1992
    %2007 = vrot.lane.b32.xlu0 %v2004, 96
    %v2008 = vpop.permute.xlu0 %2007
    %v2010 = vmul.f32 %v2005, %v2008
    %v2011 = vmul.f32 %v1992, %v1905
    %v2012 = vadd.f32 %v2010, %v2011
    %v2014 = vsel %vm82, %v1965, %v1954
    %v2016 = vsel %vm196, %v2014, 0
    %2018 = vmatpush.msra.mxu0 0.0
    %2019 = vmatpush.msra.mxu0 0.0
    %2020 = vmatpush.msra.mxu0 0.0
    %2021 = vmatpush.msra.mxu0 0.0
    %2022 = vmatpush.msra.mxu0 0.0
    %2023 = vmatpush.msra.mxu0 0.0
    %2024 = vmatpush.msra.mxu0 0.0
    %2025 = vmatpush.msra.mxu0 0.0
    %2026 = vmatpush.msra.mxu0 %v77
    %2027 = vmatpush.msra.mxu0 %v76
    %2028 = vmatpush.msra.mxu0 %v75
    %2029 = vmatpush.msra.mxu0 %v74
    %2030 = vmatpush.msra.mxu0 %v73
    %2031 = vmatpush.msra.mxu0 %v72
    %2032 = vmatpush.msra.mxu0 %v71
    %2033 = vmatpush.msra.mxu0 %v70
    %2034 = vmatmul.f32.gmra.mxu0 %v2016
    %v2035 = vpop.f32.mrf.mxu0
    %v2036 = vadd.f32 0.0, %v2035
    %2037 = vdwg.mxu0
    %v2038 = vadd.f32 %v2036, %v69
    %v2039 = vmul.f32 %v2038, 0.5
    %v2040 = vtanh.pop %v2039
    %v2041 = vmul.f32 %v2040, 0.5
    %v2042 = vadd.f32 %v2041, 0.5
    %2044 = vrot.lane.b32.xlu0 %v2038, 32
    %v2045 = vpop.permute.xlu0 %2044
    %v2047 = vmul.f32 %v2042, %v2045
    %2049 = vrot.lane.b32.xlu0 %v2047, 64
    %v2050 = vpop.permute.xlu0 %2049
    %v2052 = vadd.f32 %v2038, %v2050
    %v2053 = vtanh.pop %v2052
    %v2054 = vsub.f32 1.0, %v2042
    %2056 = vrot.lane.b32.xlu0 %v2053, 96
    %v2057 = vpop.permute.xlu0 %2056
    %v2059 = vmul.f32 %v2054, %v2057
    %v2060 = vmul.f32 %v2042, %v1954
    %v2061 = vadd.f32 %v2059, %v2060
    %2063 = vrot.lane.b32.xlu0 %v2061, 96
    %v2064 = vpop.permute.xlu0 %2063
    %s2066 = scalar_lea.vmem [#allocation8], 136
    %2067 = vst.msk [vmem:[%s2066] sm:$0xff] %vm82, %v2064
    %s2068 = scalar_lea.vmem [#allocation2], 152
    %v2069 = vld [vmem:[%s2068] sm:$0xff]
    %2071 = vrot.lane.b32.xlu0 %v2012, 96
    %v2072 = vpop.permute.xlu0 %2071
    %v2073 = vsel %vm82, %v2072, 0
    %2075 = vmatpush.msra.mxu0 0.0
    %2076 = vmatpush.msra.mxu0 0.0
    %2077 = vmatpush.msra.mxu0 0.0
    %2078 = vmatpush.msra.mxu0 0.0
    %2079 = vmatpush.msra.mxu0 0.0
    %2080 = vmatpush.msra.mxu0 0.0
    %2081 = vmatpush.msra.mxu0 0.0
    %2082 = vmatpush.msra.mxu0 0.0
    %2083 = vmatpush.msra.mxu0 0.0
    %2084 = vmatpush.msra.mxu0 0.0
    %2085 = vmatpush.msra.mxu0 0.0
    %2086 = vmatpush.msra.mxu0 0.0
    %2087 = vmatpush.msra.mxu0 %v65
    %2088 = vmatpush.msra.mxu0 %v64
    %2089 = vmatpush.msra.mxu0 %v63
    %2090 = vmatpush.msra.mxu0 %v62
    %2091 = vmatmul.f32.gmra.mxu0 %v2073
    %v2092 = vpop.f32.mrf.mxu0
    %v2093 = vadd.f32 0.0, %v2092
    %2094 = vdwg.mxu0
    %v2095 = vadd.f32 %v2069, %v2093
    %v2096 = vmul.f32 %v2095, 0.5
    %v2097 = vtanh.pop %v2096
    %v2098 = vmul.f32 %v2097, 0.5
    %v2099 = vadd.f32 %v2098, 0.5
    %v2100 = vadd.f32 %v2093, %v113
    %2102 = vrot.lane.b32.xlu0 %v2100, 64
    %v2103 = vpop.permute.xlu0 %2102
    %v2105 = vmul.f32 %v2099, %v2103
    %2107 = vrot.lane.b32.xlu0 %v2105, 64
    %v2108 = vpop.permute.xlu0 %2107
    %v2110 = vadd.f32 %v2069, %v2108
    %v2111 = vtanh.pop %v2110
    %v2112 = vsub.f32 1.0, %v2099
    %2114 = vrot.lane.b32.xlu0 %v2111, 96
    %v2115 = vpop.permute.xlu0 %2114
    %v2117 = vmul.f32 %v2112, %v2115
    %v2118 = vmul.f32 %v2099, %v2012
    %v2119 = vadd.f32 %v2117, %v2118
    %v2121 = vsel %vm82, %v2072, %v2061
    %v2123 = vsel %vm196, %v2121, 0
    %2125 = vmatpush.msra.mxu0 0.0
    %2126 = vmatpush.msra.mxu0 0.0
    %2127 = vmatpush.msra.mxu0 0.0
    %2128 = vmatpush.msra.mxu0 0.0
    %2129 = vmatpush.msra.mxu0 0.0
    %2130 = vmatpush.msra.mxu0 0.0
    %2131 = vmatpush.msra.mxu0 0.0
    %2132 = vmatpush.msra.mxu0 0.0
    %2133 = vmatpush.msra.mxu0 %v77
    %2134 = vmatpush.msra.mxu0 %v76
    %2135 = vmatpush.msra.mxu0 %v75
    %2136 = vmatpush.msra.mxu0 %v74
    %2137 = vmatpush.msra.mxu0 %v73
    %2138 = vmatpush.msra.mxu0 %v72
    %2139 = vmatpush.msra.mxu0 %v71
    %2140 = vmatpush.msra.mxu0 %v70
    %2141 = vmatmul.f32.gmra.mxu0 %v2123
    %v2142 = vpop.f32.mrf.mxu0
    %v2143 = vadd.f32 0.0, %v2142
    %2144 = vdwg.mxu0
    %v2145 = vadd.f32 %v2143, %v69
    %v2146 = vmul.f32 %v2145, 0.5
    %v2147 = vtanh.pop %v2146
    %v2148 = vmul.f32 %v2147, 0.5
    %v2149 = vadd.f32 %v2148, 0.5
    %2151 = vrot.lane.b32.xlu0 %v2145, 32
    %v2152 = vpop.permute.xlu0 %2151
    %v2154 = vmul.f32 %v2149, %v2152
    %2156 = vrot.lane.b32.xlu0 %v2154, 64
    %v2157 = vpop.permute.xlu0 %2156
    %v2159 = vadd.f32 %v2145, %v2157
    %v2160 = vtanh.pop %v2159
    %v2161 = vsub.f32 1.0, %v2149
    %2163 = vrot.lane.b32.xlu0 %v2160, 96
    %v2164 = vpop.permute.xlu0 %2163
    %v2166 = vmul.f32 %v2161, %v2164
    %v2167 = vmul.f32 %v2149, %v2061
    %v2168 = vadd.f32 %v2166, %v2167
    %2170 = vrot.lane.b32.xlu0 %v2168, 96
    %v2171 = vpop.permute.xlu0 %2170
    %s2173 = scalar_lea.vmem [#allocation8], 144
    %2174 = vst.msk [vmem:[%s2173] sm:$0xff] %vm82, %v2171
    %s2175 = scalar_lea.vmem [#allocation2], 160
    %v2176 = vld [vmem:[%s2175] sm:$0xff]
    %2178 = vrot.lane.b32.xlu0 %v2119, 96
    %v2179 = vpop.permute.xlu0 %2178
    %v2180 = vsel %vm82, %v2179, 0
    %2182 = vmatpush.msra.mxu0 0.0
    %2183 = vmatpush.msra.mxu0 0.0
    %2184 = vmatpush.msra.mxu0 0.0
    %2185 = vmatpush.msra.mxu0 0.0
    %2186 = vmatpush.msra.mxu0 0.0
    %2187 = vmatpush.msra.mxu0 0.0
    %2188 = vmatpush.msra.mxu0 0.0
    %2189 = vmatpush.msra.mxu0 0.0
    %2190 = vmatpush.msra.mxu0 0.0
    %2191 = vmatpush.msra.mxu0 0.0
    %2192 = vmatpush.msra.mxu0 0.0
    %2193 = vmatpush.msra.mxu0 0.0
    %2194 = vmatpush.msra.mxu0 %v65
    %2195 = vmatpush.msra.mxu0 %v64
    %2196 = vmatpush.msra.mxu0 %v63
    %2197 = vmatpush.msra.mxu0 %v62
    %2198 = vmatmul.f32.gmra.mxu0 %v2180
    %v2199 = vpop.f32.mrf.mxu0
    %v2200 = vadd.f32 0.0, %v2199
    %2201 = vdwg.mxu0
    %v2202 = vadd.f32 %v2176, %v2200
    %v2203 = vmul.f32 %v2202, 0.5
    %v2204 = vtanh.pop %v2203
    %v2205 = vmul.f32 %v2204, 0.5
    %v2206 = vadd.f32 %v2205, 0.5
    %v2207 = vadd.f32 %v2200, %v113
    %2209 = vrot.lane.b32.xlu0 %v2207, 64
    %v2210 = vpop.permute.xlu0 %2209
    %v2212 = vmul.f32 %v2206, %v2210
    %2214 = vrot.lane.b32.xlu0 %v2212, 64
    %v2215 = vpop.permute.xlu0 %2214
    %v2217 = vadd.f32 %v2176, %v2215
    %v2218 = vtanh.pop %v2217
    %v2219 = vsub.f32 1.0, %v2206
    %2221 = vrot.lane.b32.xlu0 %v2218, 96
    %v2222 = vpop.permute.xlu0 %2221
    %v2224 = vmul.f32 %v2219, %v2222
    %v2225 = vmul.f32 %v2206, %v2119
    %v2226 = vadd.f32 %v2224, %v2225
    %v2228 = vsel %vm82, %v2179, %v2168
    %v2230 = vsel %vm196, %v2228, 0
    %2232 = vmatpush.msra.mxu0 0.0
    %2233 = vmatpush.msra.mxu0 0.0
    %2234 = vmatpush.msra.mxu0 0.0
    %2235 = vmatpush.msra.mxu0 0.0
    %2236 = vmatpush.msra.mxu0 0.0
    %2237 = vmatpush.msra.mxu0 0.0
    %2238 = vmatpush.msra.mxu0 0.0
    %2239 = vmatpush.msra.mxu0 0.0
    %2240 = vmatpush.msra.mxu0 %v77
    %2241 = vmatpush.msra.mxu0 %v76
    %2242 = vmatpush.msra.mxu0 %v75
    %2243 = vmatpush.msra.mxu0 %v74
    %2244 = vmatpush.msra.mxu0 %v73
    %2245 = vmatpush.msra.mxu0 %v72
    %2246 = vmatpush.msra.mxu0 %v71
    %2247 = vmatpush.msra.mxu0 %v70
    %2248 = vmatmul.f32.gmra.mxu0 %v2230
    %v2249 = vpop.f32.mrf.mxu0
    %v2250 = vadd.f32 0.0, %v2249
    %2251 = vdwg.mxu0
    %v2252 = vadd.f32 %v2250, %v69
    %v2253 = vmul.f32 %v2252, 0.5
    %v2254 = vtanh.pop %v2253
    %v2255 = vmul.f32 %v2254, 0.5
    %v2256 = vadd.f32 %v2255, 0.5
    %2258 = vrot.lane.b32.xlu0 %v2252, 32
    %v2259 = vpop.permute.xlu0 %2258
    %v2261 = vmul.f32 %v2256, %v2259
    %2263 = vrot.lane.b32.xlu0 %v2261, 64
    %v2264 = vpop.permute.xlu0 %2263
    %v2266 = vadd.f32 %v2252, %v2264
    %v2267 = vtanh.pop %v2266
    %v2268 = vsub.f32 1.0, %v2256
    %2270 = vrot.lane.b32.xlu0 %v2267, 96
    %v2271 = vpop.permute.xlu0 %2270
    %v2273 = vmul.f32 %v2268, %v2271
    %v2274 = vmul.f32 %v2256, %v2168
    %v2275 = vadd.f32 %v2273, %v2274
    %2277 = vrot.lane.b32.xlu0 %v2275, 96
    %v2278 = vpop.permute.xlu0 %2277
    %s2280 = scalar_lea.vmem [#allocation8], 152
    %2281 = vst.msk [vmem:[%s2280] sm:$0xff] %vm82, %v2278
    %s2282 = scalar_lea.vmem [#allocation2], 168
    %v2283 = vld [vmem:[%s2282] sm:$0xff]
    %2285 = vrot.lane.b32.xlu0 %v2226, 96
    %v2286 = vpop.permute.xlu0 %2285
    %v2287 = vsel %vm82, %v2286, 0
    %2289 = vmatpush.msra.mxu0 0.0
    %2290 = vmatpush.msra.mxu0 0.0
    %2291 = vmatpush.msra.mxu0 0.0
    %2292 = vmatpush.msra.mxu0 0.0
    %2293 = vmatpush.msra.mxu0 0.0
    %2294 = vmatpush.msra.mxu0 0.0
    %2295 = vmatpush.msra.mxu0 0.0
    %2296 = vmatpush.msra.mxu0 0.0
    %2297 = vmatpush.msra.mxu0 0.0
    %2298 = vmatpush.msra.mxu0 0.0
    %2299 = vmatpush.msra.mxu0 0.0
    %2300 = vmatpush.msra.mxu0 0.0
    %2301 = vmatpush.msra.mxu0 %v65
    %2302 = vmatpush.msra.mxu0 %v64
    %2303 = vmatpush.msra.mxu0 %v63
    %2304 = vmatpush.msra.mxu0 %v62
    %2305 = vmatmul.f32.gmra.mxu0 %v2287
    %v2306 = vpop.f32.mrf.mxu0
    %v2307 = vadd.f32 0.0, %v2306
    %2308 = vdwg.mxu0
    %v2309 = vadd.f32 %v2283, %v2307
    %v2310 = vmul.f32 %v2309, 0.5
    %v2311 = vtanh.pop %v2310
    %v2312 = vmul.f32 %v2311, 0.5
    %v2313 = vadd.f32 %v2312, 0.5
    %v2314 = vadd.f32 %v2307, %v113
    %2316 = vrot.lane.b32.xlu0 %v2314, 64
    %v2317 = vpop.permute.xlu0 %2316
    %v2319 = vmul.f32 %v2313, %v2317
    %2321 = vrot.lane.b32.xlu0 %v2319, 64
    %v2322 = vpop.permute.xlu0 %2321
    %v2324 = vadd.f32 %v2283, %v2322
    %v2325 = vtanh.pop %v2324
    %v2326 = vsub.f32 1.0, %v2313
    %2328 = vrot.lane.b32.xlu0 %v2325, 96
    %v2329 = vpop.permute.xlu0 %2328
    %v2331 = vmul.f32 %v2326, %v2329
    %v2332 = vmul.f32 %v2313, %v2226
    %v2333 = vadd.f32 %v2331, %v2332
    %v2335 = vsel %vm82, %v2286, %v2275
    %v2337 = vsel %vm196, %v2335, 0
    %2339 = vmatpush.msra.mxu0 0.0
    %2340 = vmatpush.msra.mxu0 0.0
    %2341 = vmatpush.msra.mxu0 0.0
    %2342 = vmatpush.msra.mxu0 0.0
    %2343 = vmatpush.msra.mxu0 0.0
    %2344 = vmatpush.msra.mxu0 0.0
    %2345 = vmatpush.msra.mxu0 0.0
    %2346 = vmatpush.msra.mxu0 0.0
    %2347 = vmatpush.msra.mxu0 %v77
    %2348 = vmatpush.msra.mxu0 %v76
    %2349 = vmatpush.msra.mxu0 %v75
    %2350 = vmatpush.msra.mxu0 %v74
    %2351 = vmatpush.msra.mxu0 %v73
    %2352 = vmatpush.msra.mxu0 %v72
    %2353 = vmatpush.msra.mxu0 %v71
    %2354 = vmatpush.msra.mxu0 %v70
    %2355 = vmatmul.f32.gmra.mxu0 %v2337
    %v2356 = vpop.f32.mrf.mxu0
    %v2357 = vadd.f32 0.0, %v2356
    %2358 = vdwg.mxu0
    %v2359 = vadd.f32 %v2357, %v69
    %v2360 = vmul.f32 %v2359, 0.5
    %v2361 = vtanh.pop %v2360
    %v2362 = vmul.f32 %v2361, 0.5
    %v2363 = vadd.f32 %v2362, 0.5
    %2365 = vrot.lane.b32.xlu0 %v2359, 32
    %v2366 = vpop.permute.xlu0 %2365
    %v2368 = vmul.f32 %v2363, %v2366
    %2370 = vrot.lane.b32.xlu0 %v2368, 64
    %v2371 = vpop.permute.xlu0 %2370
    %v2373 = vadd.f32 %v2359, %v2371
    %v2374 = vtanh.pop %v2373
    %v2375 = vsub.f32 1.0, %v2363
    %2377 = vrot.lane.b32.xlu0 %v2374, 96
    %v2378 = vpop.permute.xlu0 %2377
    %v2380 = vmul.f32 %v2375, %v2378
    %v2381 = vmul.f32 %v2363, %v2275
    %v2382 = vadd.f32 %v2380, %v2381
    %2384 = vrot.lane.b32.xlu0 %v2382, 96
    %v2385 = vpop.permute.xlu0 %2384
    %s2387 = scalar_lea.vmem [#allocation8], 160
    %2388 = vst.msk [vmem:[%s2387] sm:$0xff] %vm82, %v2385
    %s2389 = scalar_lea.vmem [#allocation2], 176
    %v2390 = vld [vmem:[%s2389] sm:$0xff]
    %2392 = vrot.lane.b32.xlu0 %v2333, 96
    %v2393 = vpop.permute.xlu0 %2392
    %v2394 = vsel %vm82, %v2393, 0
    %2396 = vmatpush.msra.mxu0 0.0
    %2397 = vmatpush.msra.mxu0 0.0
    %2398 = vmatpush.msra.mxu0 0.0
    %2399 = vmatpush.msra.mxu0 0.0
    %2400 = vmatpush.msra.mxu0 0.0
    %2401 = vmatpush.msra.mxu0 0.0
    %2402 = vmatpush.msra.mxu0 0.0
    %2403 = vmatpush.msra.mxu0 0.0
    %2404 = vmatpush.msra.mxu0 0.0
    %2405 = vmatpush.msra.mxu0 0.0
    %2406 = vmatpush.msra.mxu0 0.0
    %2407 = vmatpush.msra.mxu0 0.0
    %2408 = vmatpush.msra.mxu0 %v65
    %2409 = vmatpush.msra.mxu0 %v64
    %2410 = vmatpush.msra.mxu0 %v63
    %2411 = vmatpush.msra.mxu0 %v62
    %2412 = vmatmul.f32.gmra.mxu0 %v2394
    %v2413 = vpop.f32.mrf.mxu0
    %v2414 = vadd.f32 0.0, %v2413
    %2415 = vdwg.mxu0
    %v2416 = vadd.f32 %v2390, %v2414
    %v2417 = vmul.f32 %v2416, 0.5
    %v2418 = vtanh.pop %v2417
    %v2419 = vmul.f32 %v2418, 0.5
    %v2420 = vadd.f32 %v2419, 0.5
    %v2421 = vadd.f32 %v2414, %v113
    %2423 = vrot.lane.b32.xlu0 %v2421, 64
    %v2424 = vpop.permute.xlu0 %2423
    %v2426 = vmul.f32 %v2420, %v2424
    %2428 = vrot.lane.b32.xlu0 %v2426, 64
    %v2429 = vpop.permute.xlu0 %2428
    %v2431 = vadd.f32 %v2390, %v2429
    %v2432 = vtanh.pop %v2431
    %v2433 = vsub.f32 1.0, %v2420
    %2435 = vrot.lane.b32.xlu0 %v2432, 96
    %v2436 = vpop.permute.xlu0 %2435
    %v2438 = vmul.f32 %v2433, %v2436
    %v2439 = vmul.f32 %v2420, %v2333
    %v2440 = vadd.f32 %v2438, %v2439
    %v2442 = vsel %vm82, %v2393, %v2382
    %v2444 = vsel %vm196, %v2442, 0
    %2446 = vmatpush.msra.mxu0 0.0
    %2447 = vmatpush.msra.mxu0 0.0
    %2448 = vmatpush.msra.mxu0 0.0
    %2449 = vmatpush.msra.mxu0 0.0
    %2450 = vmatpush.msra.mxu0 0.0
    %2451 = vmatpush.msra.mxu0 0.0
    %2452 = vmatpush.msra.mxu0 0.0
    %2453 = vmatpush.msra.mxu0 0.0
    %2454 = vmatpush.msra.mxu0 %v77
    %2455 = vmatpush.msra.mxu0 %v76
    %2456 = vmatpush.msra.mxu0 %v75
    %2457 = vmatpush.msra.mxu0 %v74
    %2458 = vmatpush.msra.mxu0 %v73
    %2459 = vmatpush.msra.mxu0 %v72
    %2460 = vmatpush.msra.mxu0 %v71
    %2461 = vmatpush.msra.mxu0 %v70
    %2462 = vmatmul.f32.gmra.mxu0 %v2444
    %v2463 = vpop.f32.mrf.mxu0
    %v2464 = vadd.f32 0.0, %v2463
    %2465 = vdwg.mxu0
    %v2466 = vadd.f32 %v2464, %v69
    %v2467 = vmul.f32 %v2466, 0.5
    %v2468 = vtanh.pop %v2467
    %v2469 = vmul.f32 %v2468, 0.5
    %v2470 = vadd.f32 %v2469, 0.5
    %2472 = vrot.lane.b32.xlu0 %v2466, 32
    %v2473 = vpop.permute.xlu0 %2472
    %v2475 = vmul.f32 %v2470, %v2473
    %2477 = vrot.lane.b32.xlu0 %v2475, 64
    %v2478 = vpop.permute.xlu0 %2477
    %v2480 = vadd.f32 %v2466, %v2478
    %v2481 = vtanh.pop %v2480
    %v2482 = vsub.f32 1.0, %v2470
    %2484 = vrot.lane.b32.xlu0 %v2481, 96
    %v2485 = vpop.permute.xlu0 %2484
    %v2487 = vmul.f32 %v2482, %v2485
    %v2488 = vmul.f32 %v2470, %v2382
    %v2489 = vadd.f32 %v2487, %v2488
    %2491 = vrot.lane.b32.xlu0 %v2489, 96
    %v2492 = vpop.permute.xlu0 %2491
    %s2494 = scalar_lea.vmem [#allocation8], 168
    %2495 = vst.msk [vmem:[%s2494] sm:$0xff] %vm82, %v2492
    %s2496 = scalar_lea.vmem [#allocation2], 184
    %v2497 = vld [vmem:[%s2496] sm:$0xff]
    %2499 = vrot.lane.b32.xlu0 %v2440, 96
    %v2500 = vpop.permute.xlu0 %2499
    %v2501 = vsel %vm82, %v2500, 0
    %2503 = vmatpush.msra.mxu0 0.0
    %2504 = vmatpush.msra.mxu0 0.0
    %2505 = vmatpush.msra.mxu0 0.0
    %2506 = vmatpush.msra.mxu0 0.0
    %2507 = vmatpush.msra.mxu0 0.0
    %2508 = vmatpush.msra.mxu0 0.0
    %2509 = vmatpush.msra.mxu0 0.0
    %2510 = vmatpush.msra.mxu0 0.0
    %2511 = vmatpush.msra.mxu0 0.0
    %2512 = vmatpush.msra.mxu0 0.0
    %2513 = vmatpush.msra.mxu0 0.0
    %2514 = vmatpush.msra.mxu0 0.0
    %2515 = vmatpush.msra.mxu0 %v65
    %2516 = vmatpush.msra.mxu0 %v64
    %2517 = vmatpush.msra.mxu0 %v63
    %2518 = vmatpush.msra.mxu0 %v62
    %2519 = vmatmul.f32.gmra.mxu0 %v2501
    %v2520 = vpop.f32.mrf.mxu0
    %v2521 = vadd.f32 0.0, %v2520
    %2522 = vdwg.mxu0
    %v2523 = vadd.f32 %v2497, %v2521
    %v2524 = vmul.f32 %v2523, 0.5
    %v2525 = vtanh.pop %v2524
    %v2526 = vmul.f32 %v2525, 0.5
    %v2527 = vadd.f32 %v2526, 0.5
    %v2528 = vadd.f32 %v2521, %v113
    %2530 = vrot.lane.b32.xlu0 %v2528, 64
    %v2531 = vpop.permute.xlu0 %2530
    %v2533 = vmul.f32 %v2527, %v2531
    %2535 = vrot.lane.b32.xlu0 %v2533, 64
    %v2536 = vpop.permute.xlu0 %2535
    %v2538 = vadd.f32 %v2497, %v2536
    %v2539 = vtanh.pop %v2538
    %v2540 = vsub.f32 1.0, %v2527
    %2542 = vrot.lane.b32.xlu0 %v2539, 96
    %v2543 = vpop.permute.xlu0 %2542
    %v2545 = vmul.f32 %v2540, %v2543
    %v2546 = vmul.f32 %v2527, %v2440
    %v2547 = vadd.f32 %v2545, %v2546
    %v2549 = vsel %vm82, %v2500, %v2489
    %v2551 = vsel %vm196, %v2549, 0
    %2553 = vmatpush.msra.mxu0 0.0
    %2554 = vmatpush.msra.mxu0 0.0
    %2555 = vmatpush.msra.mxu0 0.0
    %2556 = vmatpush.msra.mxu0 0.0
    %2557 = vmatpush.msra.mxu0 0.0
    %2558 = vmatpush.msra.mxu0 0.0
    %2559 = vmatpush.msra.mxu0 0.0
    %2560 = vmatpush.msra.mxu0 0.0
    %2561 = vmatpush.msra.mxu0 %v77
    %2562 = vmatpush.msra.mxu0 %v76
    %2563 = vmatpush.msra.mxu0 %v75
    %2564 = vmatpush.msra.mxu0 %v74
    %2565 = vmatpush.msra.mxu0 %v73
    %2566 = vmatpush.msra.mxu0 %v72
    %2567 = vmatpush.msra.mxu0 %v71
    %2568 = vmatpush.msra.mxu0 %v70
    %2569 = vmatmul.f32.gmra.mxu0 %v2551
    %v2570 = vpop.f32.mrf.mxu0
    %v2571 = vadd.f32 0.0, %v2570
    %2572 = vdwg.mxu0
    %v2573 = vadd.f32 %v2571, %v69
    %v2574 = vmul.f32 %v2573, 0.5
    %v2575 = vtanh.pop %v2574
    %v2576 = vmul.f32 %v2575, 0.5
    %v2577 = vadd.f32 %v2576, 0.5
    %2579 = vrot.lane.b32.xlu0 %v2573, 32
    %v2580 = vpop.permute.xlu0 %2579
    %v2582 = vmul.f32 %v2577, %v2580
    %2584 = vrot.lane.b32.xlu0 %v2582, 64
    %v2585 = vpop.permute.xlu0 %2584
    %v2587 = vadd.f32 %v2573, %v2585
    %v2588 = vtanh.pop %v2587
    %v2589 = vsub.f32 1.0, %v2577
    %2591 = vrot.lane.b32.xlu0 %v2588, 96
    %v2592 = vpop.permute.xlu0 %2591
    %v2594 = vmul.f32 %v2589, %v2592
    %v2595 = vmul.f32 %v2577, %v2489
    %v2596 = vadd.f32 %v2594, %v2595
    %2598 = vrot.lane.b32.xlu0 %v2596, 96
    %v2599 = vpop.permute.xlu0 %2598
    %s2601 = scalar_lea.vmem [#allocation8], 176
    %2602 = vst.msk [vmem:[%s2601] sm:$0xff] %vm82, %v2599
    %2604 = vrot.lane.b32.xlu0 %v2547, 96
    %v2605 = vpop.permute.xlu0 %2604
    %v2607 = vsel %vm82, %v2605, %v2596
    %v2609 = vsel %vm196, %v2607, 0
    %2611 = vmatpush.msra.mxu0 0.0
    %2612 = vmatpush.msra.mxu0 0.0
    %2613 = vmatpush.msra.mxu0 0.0
    %2614 = vmatpush.msra.mxu0 0.0
    %2615 = vmatpush.msra.mxu0 0.0
    %2616 = vmatpush.msra.mxu0 0.0
    %2617 = vmatpush.msra.mxu0 0.0
    %2618 = vmatpush.msra.mxu0 0.0
    %2619 = vmatpush.msra.mxu0 %v77
    %2620 = vmatpush.msra.mxu0 %v76
    %2621 = vmatpush.msra.mxu0 %v75
    %2622 = vmatpush.msra.mxu0 %v74
    %2623 = vmatpush.msra.mxu0 %v73
    %2624 = vmatpush.msra.mxu0 %v72
    %2625 = vmatpush.msra.mxu0 %v71
    %2626 = vmatpush.msra.mxu0 %v70
    %2627 = vmatmul.f32.gmra.mxu0 %v2609
    %v2628 = vpop.f32.mrf.mxu0
    %v2629 = vadd.f32 0.0, %v2628
    %2630 = vdwg.mxu0
    %v2631 = vadd.f32 %v2629, %v69
    %v2632 = vmul.f32 %v2631, 0.5
    %v2633 = vtanh.pop %v2632
    %v2634 = vmul.f32 %v2633, 0.5
    %v2635 = vadd.f32 %v2634, 0.5
    %2637 = vrot.lane.b32.xlu0 %v2631, 32
    %v2638 = vpop.permute.xlu0 %2637
    %v2640 = vmul.f32 %v2635, %v2638
    %2642 = vrot.lane.b32.xlu0 %v2640, 64
    %v2643 = vpop.permute.xlu0 %2642
    %v2645 = vadd.f32 %v2631, %v2643
    %v2646 = vtanh.pop %v2645
    %v2647 = vsub.f32 1.0, %v2635
    %2649 = vrot.lane.b32.xlu0 %v2646, 96
    %v2650 = vpop.permute.xlu0 %2649
    %v2652 = vmul.f32 %v2647, %v2650
    %v2653 = vmul.f32 %v2635, %v2596
    %v2654 = vadd.f32 %v2652, %v2653
    %2656 = vrot.lane.b32.xlu0 %v2654, 96
    %v2657 = vpop.permute.xlu0 %2656
    %s2659 = scalar_lea.vmem [#allocation8], 184
    %2660 = vst.msk [vmem:[%s2659] sm:$0xff] %vm82, %v2657
    // Predicated region
    $region26: #{tpu_custom_call.1} parent=1 // pred_check
      _
    $region27: #{tpu_custom_call.1} parent=1 // pred_check_branch
      %2662 = sbr.rel (0) target = $region29
    $region28: #{tpu_custom_call.1} parent=1 // pred_region
      %2664 = vsyncadd [#allocation4], 0
      %s2665 = sshll.u32 [#allocation8], 4
      %s2666 = int_to_ptr.vmem [resolvable:$true] %s2665
      %s2667 = sshll.u32 %s3, 4
      %s2668 = int_to_ptr.hbm [resolvable:$true] %s2667
      %2673 = dma.vmem_to_hbm [thread:$0]  %s2666, 3072, %s2668, [#allocation4], 128, 128, 8
    $region29: #{tpu_custom_call.1} parent=1 // pred_fallthru
      _
    // Predicated region
    $region30: #{tpu_custom_call.1} parent=1 // pred_check
      _
    $region31: #{tpu_custom_call.1} parent=1 // pred_check_branch
      %2675 = sbr.rel (0) target = $region33
    $region32: #{tpu_custom_call.1} parent=1 // pred_region
      %2677 = dma.done [#allocation4], 3072
    $region33: #{tpu_custom_call.1} parent=1 // pred_fallthru
      _
    %2678 = vsyncpa [#allocation3], 1
    %2679 = vsyncpa [#allocation6], 1
    %2680 = vsyncpa [#allocation4], 1

</llo_original>
